<compile_context>
chip_gen: v7x
topology: tpu7x:2x2x1
jax: 0.10.0
libtpu: 0.0.40
codegen_flags: <defaults>
</compile_context>

<pallas_src>
import functools

import jax
import jax.numpy as jnp
import numpy as np
from jax.experimental import pallas as pl
from jax.experimental.pallas import tpu as pltpu

EPS = 1e-5   # PyTorch BatchNorm2d default
LANE = 128


def _round_up(x, m):
    return (x + m - 1) // m * m


# ----------------------------- Pallas kernel ---------------------------------
def _fused_conv_kernel(x_ref, w_ref, shift_ref, *rest, stride, fl, wn, n_rows, shortcut):
    """One image per grid step.

    x_ref:     (1, stride*stride*fl, Cin_p)  phase-split, spatially flattened input, bf16
    w_ref:     (9, Cin_p, Cout_p)            3x3 weights with BN scale folded in, bf16
    shift_ref: (1, Cout_p)                   BN shift (incl. conv bias), f32
    [sc_ref]:  (1, n_rows, Cs_p)             shortcut operand, bf16
    [ws_ref]:  (Cs_p, Cout_p) + sshift_ref (1, Cout_p)   projection (1x1 conv) shortcut
    o_ref:     (1, n_rows, Cout_p)
    """
    if shortcut == "proj":
        sc_ref, ws_ref, sshift_ref, o_ref = rest
    elif shortcut == "identity":
        sc_ref, o_ref = rest
    else:
        (o_ref,) = rest

    # 9-tap accumulation on the MXU; all slices are static & contiguous.
    parts = []
    for kh in range(3):
        for kw in range(3):
            plane = (kh % stride) * stride + (kw % stride)
            off = plane * fl + (kh // stride) * wn + (kw // stride)
            xs = x_ref[0, off:off + n_rows, :]
            parts.append(jnp.dot(xs, w_ref[kh * 3 + kw],
                                 preferred_element_type=jnp.float32))
    if shortcut == "proj":
        parts.append(jnp.dot(sc_ref[0], ws_ref[...], preferred_element_type=jnp.float32))
        parts.append(jnp.broadcast_to(sshift_ref[...], parts[0].shape))
    elif shortcut == "identity":
        parts.append(sc_ref[0].astype(jnp.float32))
    parts.append(jnp.broadcast_to(shift_ref[...], parts[0].shape))

    # Tree-sum the partials (shorter dependent-add chain than a serial accumulate).
    while len(parts) > 1:
        parts = [parts[i] + parts[i + 1] for i in range(0, len(parts) - 1, 2)] + \
                ([parts[-1]] if len(parts) & 1 else [])
    y = jnp.maximum(parts[0], 0.0)
    o_ref[0] = y.astype(o_ref.dtype)


def _fused_conv(xph, w, shift, *, stride, fl, wn, n_rows, out_dtype,
                shortcut="none", sc=None, ws=None, sshift=None):
    n = xph.shape[0]
    cin_p = xph.shape[-1]
    cout_p = w.shape[-1]

    in_specs = [
        pl.BlockSpec((1, xph.shape[1], cin_p), lambda i: (i, 0, 0)),
        pl.BlockSpec((9, cin_p, cout_p), lambda i: (0, 0, 0)),   # resident across grid
        pl.BlockSpec((1, cout_p), lambda i: (0, 0)),
    ]
    args = [xph, w, shift]
    if shortcut != "none":
        in_specs.append(pl.BlockSpec((1, n_rows, sc.shape[-1]), lambda i: (i, 0, 0)))
        args.append(sc)
    if shortcut == "proj":
        in_specs.append(pl.BlockSpec(ws.shape, lambda i: (0, 0)))
        args.append(ws)
        in_specs.append(pl.BlockSpec((1, cout_p), lambda i: (0, 0)))
        args.append(sshift)

    kernel = functools.partial(_fused_conv_kernel, stride=stride, fl=fl, wn=wn,
                               n_rows=n_rows, shortcut=shortcut)
    return pl.pallas_call(
        kernel,
        out_shape=jax.ShapeDtypeStruct((n, n_rows, cout_p), out_dtype),
        grid=(n,),
        in_specs=in_specs,
        out_specs=pl.BlockSpec((1, n_rows, cout_p), lambda i: (i, 0, 0)),
        compiler_params=pltpu.CompilerParams(
            dimension_semantics=("parallel",),
            vmem_limit_bytes=64 * 1024 * 1024,
        ),
    )(*args)


# ------------------------------- host glue -------------------------------------
def _phase_flatten(xp, stride, ho, wo):
    """Space-to-depth phase split + spatial flatten (1x traffic, replaces 9x im2col).

    xp: (N, Hp, Wp, Cp) spatially padded NHWC (bf16). Returns ((N, s*s*FL, Cp), FL, Wn).
    Output row o = i*Wn + j; tap (kh, kw) lives at flat offset plane*FL + (kh//s)*Wn + (kw//s).
    """
    n, _, _, c = xp.shape
    q = 2 // stride                  # max tap block-offset inside a phase plane
    hn, wn = ho + q, wo + q
    fl = _round_up(hn * wn + q, 8)
    planes = []
    for ph in range(stride):
        for pw in range(stride):
            p = xp[:, ph::stride, pw::stride, :][:, :hn, :wn, :]
            p = jnp.pad(p, ((0, 0), (0, hn - p.shape[1]), (0, wn - p.shape[2]), (0, 0)))
            p = p.reshape(n, hn * wn, c)
            p = jnp.pad(p, ((0, 0), (0, fl - hn * wn), (0, 0)))
            planes.append(p)
    return jnp.concatenate(planes, axis=1), fl, wn


def _fold_conv_bn(w, b, gamma, beta, mean, var, cin_p, cout_p):
    """Fold eval-mode BN into the conv: bf16 weights (KhKw, Cin_p, Cout_p), f32 shift (1, Cout_p)."""
    cout, cin, kh, kw = w.shape
    scale = gamma / jnp.sqrt(var + EPS)
    shift = beta + (b - mean) * scale
    wt = jnp.transpose(w, (2, 3, 1, 0)) * scale              # (kh, kw, cin, cout), scale folded
    wt = wt.reshape(kh * kw, cin, cout)
    wt = jnp.pad(wt, ((0, 0), (0, cin_p - cin), (0, cout_p - cout)))
    sh = jnp.pad(shift, (0, cout_p - cout)).reshape(1, cout_p)
    return wt.astype(jnp.bfloat16), sh.astype(jnp.float32)


def residual_block_forward(x_nchw, params, stride):
    n, cin, h, w_dim = x_nchw.shape
    cout = params["w1"].shape[0]
    cin_p = _round_up(cin, LANE)
    cout_p = _round_up(cout, LANE)

    ho = (h + 2 - 3) // stride + 1
    wo = (w_dim + 2 - 3) // stride + 1

    # NHWC inside the block; channels padded to a lane-dense multiple of 128.
    x = jnp.transpose(x_nchw, (0, 2, 3, 1)).astype(jnp.float32)
    xc = jnp.pad(x, ((0, 0), (0, 0), (0, 0), (0, cin_p - cin)))

    # --- conv1 (3x3, stride) + BN1 + ReLU -------------------------------------
    xp = jnp.pad(xc, ((0, 0), (1, 1), (1, 1), (0, 0))).astype(jnp.bfloat16)
    xph1, fl1, wn1 = _phase_flatten(xp, stride, ho, wo)
    w1, sh1 = _fold_conv_bn(params["w1"], params["b1"], params["g1"], params["be1"],
                            params["mu1"], params["var1"], cin_p, cout_p)
    y1 = _fused_conv(xph1, w1, sh1, stride=stride, fl=fl1, wn=wn1,
                     n_rows=ho * wn1, out_dtype=jnp.bfloat16)
    y1 = y1.reshape(n, ho, wn1, cout_p)[:, :, :wo, :]         # drop garbage columns

    # --- shortcut operand (fused into the conv2 kernel) ------------------------
    wn2 = wo + 2
    if stride != 1 or cin != cout:
        shortcut = "proj"
        scv = xc[:, ::stride, ::stride, :][:, :ho, :wo, :]     # strided 1x1-conv input
        ws, shs = _fold_conv_bn(params["ws"], params["bs"], params["gs"], params["bes"],
                                params["mus"], params["vars"], cin_p, cout_p)
        ws = ws[0]                                             # (cin_p, cout_p)
    else:
        shortcut = "identity"
        scv = xc                                               # (n, ho, wo, cout_p)
        ws = shs = None
    sc = jnp.pad(scv, ((0, 0), (0, 0), (0, wn2 - wo), (0, 0)))  # align with conv2's width grid
    sc = sc.astype(jnp.bfloat16).reshape(n, ho * wn2, scv.shape[-1])

    # --- conv2 (3x3, s=1) + BN2, fused with shortcut + add + ReLU --------------
    y1p = jnp.pad(y1, ((0, 0), (1, 1), (1, 1), (0, 0)))
    xph2, fl2, wn2_chk = _phase_flatten(y1p, 1, ho, wo)
    assert wn2_chk == wn2
    w2, sh2 = _fold_conv_bn(params["w2"], params["b2"], params["g2"], params["be2"],
                            params["mu2"], params["var2"], cout_p, cout_p)
    out = _fused_conv(xph2, w2, sh2, stride=1, fl=fl2, wn=wn2, n_rows=ho * wn2,
                      out_dtype=jnp.float32, shortcut=shortcut, sc=sc, ws=ws, sshift=shs)

    out = out.reshape(n, ho, wn2, cout_p)[:, :, :wo, :cout]
    return jnp.transpose(out, (0, 3, 1, 2))                    # NCHW at the block boundary only


# ---------------------------- reference (pure JAX) -----------------------------
def _reference_forward(x, params, stride, cin, cout):
    def conv(inp, w, b, s, pad):
        y = jax.lax.conv_general_dilated(
            inp, w, (s, s), ((pad, pad), (pad, pad)),
            dimension_numbers=("NCHW", "OIHW", "NCHW"))
        return y + b[None, :, None, None]

    def bn(y, g, be, mu, var):
        return (y - mu[None, :, None, None]) / jnp.sqrt(var[None, :, None, None] + EPS) \
               * g[None, :, None, None] + be[None, :, None, None]

    left = jax.nn.relu(bn(conv(x, params["w1"], params["b1"], stride, 1),
                          params["g1"], params["be1"], params["mu1"], params["var1"]))
    left = bn(conv(left, params["w2"], params["b2"], 1, 1),
              params["g2"], params["be2"], params["mu2"], params["var2"])
    if stride != 1 or cin != cout:
        sc = bn(conv(x, params["ws"], params["bs"], stride, 0),
                params["gs"], params["bes"], params["mus"], params["vars"])
    else:
        sc = x
    return jax.nn.relu(left + sc)


# ----------------------------------- main --------------------------------------
def init_params(key, cin, cout):
    ks = jax.random.split(key, 18)
    u = lambda k, sh: jax.random.uniform(k, sh, jnp.float32, 0.5, 1.5)
    n = lambda k, sh: 0.1 * jax.random.normal(k, sh, jnp.float32)
    return {
        "w1": n(ks[0], (cout, cin, 3, 3)), "b1": n(ks[1], (cout,)),
        "g1": u(ks[2], (cout,)), "be1": n(ks[3], (cout,)),
        "mu1": n(ks[4], (cout,)), "var1": u(ks[5], (cout,)),
        "w2": n(ks[6], (cout, cout, 3, 3)), "b2": n(ks[7], (cout,)),
        "g2": u(ks[8], (cout,)), "be2": n(ks[9], (cout,)),
        "mu2": n(ks[10], (cout,)), "var2": u(ks[11], (cout,)),
        "ws": n(ks[12], (cout, cin, 1, 1)), "bs": n(ks[13], (cout,)),
        "gs": u(ks[14], (cout,)), "bes": n(ks[15], (cout,)),
        "mus": n(ks[16], (cout,)), "vars": u(ks[17], (cout,)),
    }


if __name__ == "__main__":
    key = jax.random.PRNGKey(0)
    kx1, kp1, kx2, kp2 = jax.random.split(key, 4)
    fwd = jax.jit(residual_block_forward, static_argnums=2)

    # config 1: downsampling block with 1x1-conv + BN shortcut
    N, CIN, H, W, COUT, STRIDE = 2, 4, 16, 16, 8, 2
    x1 = jax.random.normal(kx1, (N, CIN, H, W), jnp.float32)
    p1 = init_params(kp1, CIN, COUT)
    out1 = jax.block_until_ready(fwd(x1, p1, STRIDE))
    ref1 = _reference_forward(x1, p1, STRIDE, CIN, COUT)
    # bf16 MXU inputs with f32 accumulation -> looser tolerance than the f32 reference.
    np.testing.assert_allclose(np.asarray(out1), np.asarray(ref1), rtol=5e-2, atol=5e-2)

    # config 2: identity-shortcut block (stride 1, cin == cout)
    x2 = jax.random.normal(kx2, (N, COUT, H, W), jnp.float32)
    p2 = init_params(kp2, COUT, COUT)
    out2 = jax.block_until_ready(fwd(x2, p2, 1))
    ref2 = _reference_forward(x2, p2, 1, COUT, COUT)
    np.testing.assert_allclose(np.asarray(out2), np.asarray(ref2), rtol=5e-2, atol=5e-2)

    print("KERNEL_OK")
</pallas_src>

<mosaic_0001>
module attributes {stable_mosaic.version = 11 : i64} {
  func.func @_fused_conv_kernel(%arg0: i32, %arg1: memref<1x352x128xbf16, #tpu.memory_space<vmem>>, %arg2: memref<9x128x128xbf16, #tpu.memory_space<vmem>>, %arg3: memref<1x128xf32, #tpu.memory_space<vmem>>, %arg4: memref<1x72x128xbf16, #tpu.memory_space<vmem>>) attributes {dimension_semantics = [#tpu.dimension_semantics<parallel>], iteration_bounds = array<i64: 2>, scalar_prefetch = 0 : i64, scratch_operands = 0 : i64, tpu.core_type = #tpu.core_type<tc>, window_params = [{transform_indices = @transform_0, window_bounds = array<i64: 1, 352, 128>}, {pipeline_mode = #tpu.pipeline_mode<synchronous>, transform_indices = @transform_1, window_bounds = array<i64: 9, 128, 128>}, {pipeline_mode = #tpu.pipeline_mode<synchronous>, transform_indices = @transform_2, window_bounds = array<i64: 1, 128>}, {transform_indices = @transform_3, window_bounds = array<i64: 1, 72, 128>}]} {
    %c0 = arith.constant 0 : index
    %c0_0 = arith.constant 0 : index
    %c0_1 = arith.constant 0 : index
    %0 = vector.load %arg1[%c0, %c0_0, %c0_1] : memref<1x352x128xbf16, #tpu.memory_space<vmem>>, vector<1x72x128xbf16>
    %1 = vector.shape_cast %0 : vector<1x72x128xbf16> to vector<72x128xbf16>
    %c0_2 = arith.constant 0 : index
    %c0_3 = arith.constant 0 : index
    %c0_4 = arith.constant 0 : index
    %2 = vector.load %arg2[%c0_2, %c0_3, %c0_4] : memref<9x128x128xbf16, #tpu.memory_space<vmem>>, vector<1x128x128xbf16>
    %3 = vector.shape_cast %2 : vector<1x128x128xbf16> to vector<128x128xbf16>
    %cst = arith.constant dense<0.000000e+00> : vector<72x128xf32>
    %4 = tpu.matmul %1, %3, %cst {dimension_numbers = #tpu.dot_dimension_numbers<[1], [0], [0], [1], [0, 0, 1, 1], [], []>} : vector<72x128xbf16>, vector<128x128xbf16>, vector<72x128xf32> -> vector<72x128xf32>
    %c0_5 = arith.constant 0 : index
    %c88 = arith.constant 88 : index
    %c0_6 = arith.constant 0 : index
    %5 = vector.load %arg1[%c0_5, %c88, %c0_6] : memref<1x352x128xbf16, #tpu.memory_space<vmem>>, vector<1x72x128xbf16>
    %6 = vector.shape_cast %5 : vector<1x72x128xbf16> to vector<72x128xbf16>
    %c1 = arith.constant 1 : index
    %c0_7 = arith.constant 0 : index
    %c0_8 = arith.constant 0 : index
    %7 = vector.load %arg2[%c1, %c0_7, %c0_8] : memref<9x128x128xbf16, #tpu.memory_space<vmem>>, vector<1x128x128xbf16>
    %8 = vector.shape_cast %7 : vector<1x128x128xbf16> to vector<128x128xbf16>
    %cst_9 = arith.constant dense<0.000000e+00> : vector<72x128xf32>
    %9 = tpu.matmul %6, %8, %cst_9 {dimension_numbers = #tpu.dot_dimension_numbers<[1], [0], [0], [1], [0, 0, 1, 1], [], []>} : vector<72x128xbf16>, vector<128x128xbf16>, vector<72x128xf32> -> vector<72x128xf32>
    %c0_10 = arith.constant 0 : index
    %c1_11 = arith.constant 1 : index
    %c0_12 = arith.constant 0 : index
    %10 = vector.load %arg1[%c0_10, %c1_11, %c0_12] : memref<1x352x128xbf16, #tpu.memory_space<vmem>>, vector<1x72x128xbf16>
    %11 = vector.shape_cast %10 : vector<1x72x128xbf16> to vector<72x128xbf16>
    %c2 = arith.constant 2 : index
    %c0_13 = arith.constant 0 : index
    %c0_14 = arith.constant 0 : index
    %12 = vector.load %arg2[%c2, %c0_13, %c0_14] : memref<9x128x128xbf16, #tpu.memory_space<vmem>>, vector<1x128x128xbf16>
    %13 = vector.shape_cast %12 : vector<1x128x128xbf16> to vector<128x128xbf16>
    %cst_15 = arith.constant dense<0.000000e+00> : vector<72x128xf32>
    %14 = tpu.matmul %11, %13, %cst_15 {dimension_numbers = #tpu.dot_dimension_numbers<[1], [0], [0], [1], [0, 0, 1, 1], [], []>} : vector<72x128xbf16>, vector<128x128xbf16>, vector<72x128xf32> -> vector<72x128xf32>
    %c0_16 = arith.constant 0 : index
    %c176 = arith.constant 176 : index
    %c0_17 = arith.constant 0 : index
    %15 = vector.load %arg1[%c0_16, %c176, %c0_17] : memref<1x352x128xbf16, #tpu.memory_space<vmem>>, vector<1x72x128xbf16>
    %16 = vector.shape_cast %15 : vector<1x72x128xbf16> to vector<72x128xbf16>
    %c3 = arith.constant 3 : index
    %c0_18 = arith.constant 0 : index
    %c0_19 = arith.constant 0 : index
    %17 = vector.load %arg2[%c3, %c0_18, %c0_19] : memref<9x128x128xbf16, #tpu.memory_space<vmem>>, vector<1x128x128xbf16>
    %18 = vector.shape_cast %17 : vector<1x128x128xbf16> to vector<128x128xbf16>
    %cst_20 = arith.constant dense<0.000000e+00> : vector<72x128xf32>
    %19 = tpu.matmul %16, %18, %cst_20 {dimension_numbers = #tpu.dot_dimension_numbers<[1], [0], [0], [1], [0, 0, 1, 1], [], []>} : vector<72x128xbf16>, vector<128x128xbf16>, vector<72x128xf32> -> vector<72x128xf32>
    %c0_21 = arith.constant 0 : index
    %c264 = arith.constant 264 : index
    %c0_22 = arith.constant 0 : index
    %20 = vector.load %arg1[%c0_21, %c264, %c0_22] : memref<1x352x128xbf16, #tpu.memory_space<vmem>>, vector<1x72x128xbf16>
    %21 = vector.shape_cast %20 : vector<1x72x128xbf16> to vector<72x128xbf16>
    %c4 = arith.constant 4 : index
    %c0_23 = arith.constant 0 : index
    %c0_24 = arith.constant 0 : index
    %22 = vector.load %arg2[%c4, %c0_23, %c0_24] : memref<9x128x128xbf16, #tpu.memory_space<vmem>>, vector<1x128x128xbf16>
    %23 = vector.shape_cast %22 : vector<1x128x128xbf16> to vector<128x128xbf16>
    %cst_25 = arith.constant dense<0.000000e+00> : vector<72x128xf32>
    %24 = tpu.matmul %21, %23, %cst_25 {dimension_numbers = #tpu.dot_dimension_numbers<[1], [0], [0], [1], [0, 0, 1, 1], [], []>} : vector<72x128xbf16>, vector<128x128xbf16>, vector<72x128xf32> -> vector<72x128xf32>
    %c0_26 = arith.constant 0 : index
    %c177 = arith.constant 177 : index
    %c0_27 = arith.constant 0 : index
    %25 = vector.load %arg1[%c0_26, %c177, %c0_27] : memref<1x352x128xbf16, #tpu.memory_space<vmem>>, vector<1x72x128xbf16>
    %26 = vector.shape_cast %25 : vector<1x72x128xbf16> to vector<72x128xbf16>
    %c5 = arith.constant 5 : index
    %c0_28 = arith.constant 0 : index
    %c0_29 = arith.constant 0 : index
    %27 = vector.load %arg2[%c5, %c0_28, %c0_29] : memref<9x128x128xbf16, #tpu.memory_space<vmem>>, vector<1x128x128xbf16>
    %28 = vector.shape_cast %27 : vector<1x128x128xbf16> to vector<128x128xbf16>
    %cst_30 = arith.constant dense<0.000000e+00> : vector<72x128xf32>
    %29 = tpu.matmul %26, %28, %cst_30 {dimension_numbers = #tpu.dot_dimension_numbers<[1], [0], [0], [1], [0, 0, 1, 1], [], []>} : vector<72x128xbf16>, vector<128x128xbf16>, vector<72x128xf32> -> vector<72x128xf32>
    %c0_31 = arith.constant 0 : index
    %c9 = arith.constant 9 : index
    %c0_32 = arith.constant 0 : index
    %30 = vector.load %arg1[%c0_31, %c9, %c0_32] : memref<1x352x128xbf16, #tpu.memory_space<vmem>>, vector<1x72x128xbf16>
    %31 = vector.shape_cast %30 : vector<1x72x128xbf16> to vector<72x128xbf16>
    %c6 = arith.constant 6 : index
    %c0_33 = arith.constant 0 : index
    %c0_34 = arith.constant 0 : index
    %32 = vector.load %arg2[%c6, %c0_33, %c0_34] : memref<9x128x128xbf16, #tpu.memory_space<vmem>>, vector<1x128x128xbf16>
    %33 = vector.shape_cast %32 : vector<1x128x128xbf16> to vector<128x128xbf16>
    %cst_35 = arith.constant dense<0.000000e+00> : vector<72x128xf32>
    %34 = tpu.matmul %31, %33, %cst_35 {dimension_numbers = #tpu.dot_dimension_numbers<[1], [0], [0], [1], [0, 0, 1, 1], [], []>} : vector<72x128xbf16>, vector<128x128xbf16>, vector<72x128xf32> -> vector<72x128xf32>
    %c0_36 = arith.constant 0 : index
    %c97 = arith.constant 97 : index
    %c0_37 = arith.constant 0 : index
    %35 = vector.load %arg1[%c0_36, %c97, %c0_37] : memref<1x352x128xbf16, #tpu.memory_space<vmem>>, vector<1x72x128xbf16>
    %36 = vector.shape_cast %35 : vector<1x72x128xbf16> to vector<72x128xbf16>
    %c7 = arith.constant 7 : index
    %c0_38 = arith.constant 0 : index
    %c0_39 = arith.constant 0 : index
    %37 = vector.load %arg2[%c7, %c0_38, %c0_39] : memref<9x128x128xbf16, #tpu.memory_space<vmem>>, vector<1x128x128xbf16>
    %38 = vector.shape_cast %37 : vector<1x128x128xbf16> to vector<128x128xbf16>
    %cst_40 = arith.constant dense<0.000000e+00> : vector<72x128xf32>
    %39 = tpu.matmul %36, %38, %cst_40 {dimension_numbers = #tpu.dot_dimension_numbers<[1], [0], [0], [1], [0, 0, 1, 1], [], []>} : vector<72x128xbf16>, vector<128x128xbf16>, vector<72x128xf32> -> vector<72x128xf32>
    %c0_41 = arith.constant 0 : index
    %c10 = arith.constant 10 : index
    %c0_42 = arith.constant 0 : index
    %40 = vector.load %arg1[%c0_41, %c10, %c0_42] : memref<1x352x128xbf16, #tpu.memory_space<vmem>>, vector<1x72x128xbf16>
    %41 = vector.shape_cast %40 : vector<1x72x128xbf16> to vector<72x128xbf16>
    %c8 = arith.constant 8 : index
    %c0_43 = arith.constant 0 : index
    %c0_44 = arith.constant 0 : index
    %42 = vector.load %arg2[%c8, %c0_43, %c0_44] : memref<9x128x128xbf16, #tpu.memory_space<vmem>>, vector<1x128x128xbf16>
    %43 = vector.shape_cast %42 : vector<1x128x128xbf16> to vector<128x128xbf16>
    %cst_45 = arith.constant dense<0.000000e+00> : vector<72x128xf32>
    %44 = tpu.matmul %41, %43, %cst_45 {dimension_numbers = #tpu.dot_dimension_numbers<[1], [0], [0], [1], [0, 0, 1, 1], [], []>} : vector<72x128xbf16>, vector<128x128xbf16>, vector<72x128xf32> -> vector<72x128xf32>
    %c0_46 = arith.constant 0 : index
    %c0_47 = arith.constant 0 : index
    %45 = vector.load %arg3[%c0_46, %c0_47] : memref<1x128xf32, #tpu.memory_space<vmem>>, vector<1x128xf32>
    %46 = vector.shape_cast %45 : vector<1x128xf32> to vector<1x128xf32>
    %47 = vector.broadcast %46 : vector<1x128xf32> to vector<72x128xf32>
    %48 = arith.addf %4, %9 : vector<72x128xf32>
    %49 = arith.addf %14, %19 : vector<72x128xf32>
    %50 = arith.addf %24, %29 : vector<72x128xf32>
    %51 = arith.addf %34, %39 : vector<72x128xf32>
    %52 = arith.addf %44, %47 : vector<72x128xf32>
    %53 = arith.addf %48, %49 : vector<72x128xf32>
    %54 = arith.addf %50, %51 : vector<72x128xf32>
    %55 = arith.addf %53, %54 : vector<72x128xf32>
    %56 = arith.addf %55, %52 : vector<72x128xf32>
    %cst_48 = arith.constant 0.000000e+00 : f32
    %57 = vector.broadcast %cst_48 : f32 to vector<72x128xf32>
    %58 = arith.maximumf %56, %57 : vector<72x128xf32>
    %59 = arith.truncf %58 : vector<72x128xf32> to vector<72x128xbf16>
    %c0_49 = arith.constant 0 : index
    %c0_50 = arith.constant 0 : index
    %c0_51 = arith.constant 0 : index
    %60 = vector.load %arg4[%c0_49, %c0_50, %c0_51] : memref<1x72x128xbf16, #tpu.memory_space<vmem>>, vector<1x72x128xbf16>
    %61 = vector.shape_cast %60 : vector<1x72x128xbf16> to vector<72x128xbf16>
    %62 = vector.shape_cast %59 : vector<72x128xbf16> to vector<1x72x128xbf16>
    tpu.vector_store %arg4[%c0_49, %c0_50, %c0_51], %62 {strides = array<i32>} : memref<1x72x128xbf16, #tpu.memory_space<vmem>>, vector<1x72x128xbf16>,
    return
  }
  func.func @transform_0(%arg0: i32) -> (i32, i32, i32) {
    %c0_i32 = arith.constant 0 : i32
    %c0_i32_0 = arith.constant 0 : i32
    %c0_i32_1 = arith.constant 0 : i32
    return %arg0, %c0_i32, %c0_i32_0 : i32, i32, i32
  }
  func.func @transform_1(%arg0: i32) -> (i32, i32, i32) {
    %c0_i32 = arith.constant 0 : i32
    %c0_i32_0 = arith.constant 0 : i32
    %c0_i32_1 = arith.constant 0 : i32
    %c0_i32_2 = arith.constant 0 : i32
    return %c0_i32, %c0_i32_0, %c0_i32_1 : i32, i32, i32
  }
  func.func @transform_2(%arg0: i32) -> (i32, i32) {
    %c0_i32 = arith.constant 0 : i32
    %c0_i32_0 = arith.constant 0 : i32
    %c0_i32_1 = arith.constant 0 : i32
    return %c0_i32, %c0_i32_0 : i32, i32
  }
  func.func @transform_3(%arg0: i32) -> (i32, i32, i32) {
    %c0_i32 = arith.constant 0 : i32
    %c0_i32_0 = arith.constant 0 : i32
    %c0_i32_1 = arith.constant 0 : i32
    return %arg0, %c0_i32, %c0_i32_0 : i32, i32, i32
  }
}

module attributes {stable_mosaic.version = 11 : i64} {
  func.func @_fused_conv_kernel(%arg0: i32, %arg1: memref<1x104x128xbf16, #tpu.memory_space<vmem>>, %arg2: memref<9x128x128xbf16, #tpu.memory_space<vmem>>, %arg3: memref<1x128xf32, #tpu.memory_space<vmem>>, %arg4: memref<1x80x128xbf16, #tpu.memory_space<vmem>>, %arg5: memref<128x128xbf16, #tpu.memory_space<vmem>>, %arg6: memref<1x128xf32, #tpu.memory_space<vmem>>, %arg7: memref<1x80x128xf32, #tpu.memory_space<vmem>>) attributes {dimension_semantics = [#tpu.dimension_semantics<parallel>], iteration_bounds = array<i64: 2>, scalar_prefetch = 0 : i64, scratch_operands = 0 : i64, tpu.core_type = #tpu.core_type<tc>, window_params = [{transform_indices = @transform_0, window_bounds = array<i64: 1, 104, 128>}, {pipeline_mode = #tpu.pipeline_mode<synchronous>, transform_indices = @transform_1, window_bounds = array<i64: 9, 128, 128>}, {pipeline_mode = #tpu.pipeline_mode<synchronous>, transform_indices = @transform_2, window_bounds = array<i64: 1, 128>}, {transform_indices = @transform_3, window_bounds = array<i64: 1, 80, 128>}, {pipeline_mode = #tpu.pipeline_mode<synchronous>, transform_indices = @transform_4, window_bounds = array<i64: 128, 128>}, {pipeline_mode = #tpu.pipeline_mode<synchronous>, transform_indices = @transform_5, window_bounds = array<i64: 1, 128>}, {transform_indices = @transform_6, window_bounds = array<i64: 1, 80, 128>}]} {
    %c0 = arith.constant 0 : index
    %c0_0 = arith.constant 0 : index
    %c0_1 = arith.constant 0 : index
    %0 = vector.load %arg1[%c0, %c0_0, %c0_1] : memref<1x104x128xbf16, #tpu.memory_space<vmem>>, vector<1x80x128xbf16>
    %1 = vector.shape_cast %0 : vector<1x80x128xbf16> to vector<80x128xbf16>
    %c0_2 = arith.constant 0 : index
    %c0_3 = arith.constant 0 : index
    %c0_4 = arith.constant 0 : index
    %2 = vector.load %arg2[%c0_2, %c0_3, %c0_4] : memref<9x128x128xbf16, #tpu.memory_space<vmem>>, vector<1x128x128xbf16>
    %3 = vector.shape_cast %2 : vector<1x128x128xbf16> to vector<128x128xbf16>
    %cst = arith.constant dense<0.000000e+00> : vector<80x128xf32>
    %4 = tpu.matmul %1, %3, %cst {dimension_numbers = #tpu.dot_dimension_numbers<[1], [0], [0], [1], [0, 0, 1, 1], [], []>} : vector<80x128xbf16>, vector<128x128xbf16>, vector<80x128xf32> -> vector<80x128xf32>
    %c0_5 = arith.constant 0 : index
    %c1 = arith.constant 1 : index
    %c0_6 = arith.constant 0 : index
    %5 = vector.load %arg1[%c0_5, %c1, %c0_6] : memref<1x104x128xbf16, #tpu.memory_space<vmem>>, vector<1x80x128xbf16>
    %6 = vector.shape_cast %5 : vector<1x80x128xbf16> to vector<80x128xbf16>
    %c1_7 = arith.constant 1 : index
    %c0_8 = arith.constant 0 : index
    %c0_9 = arith.constant 0 : index
    %7 = vector.load %arg2[%c1_7, %c0_8, %c0_9] : memref<9x128x128xbf16, #tpu.memory_space<vmem>>, vector<1x128x128xbf16>
    %8 = vector.shape_cast %7 : vector<1x128x128xbf16> to vector<128x128xbf16>
    %cst_10 = arith.constant dense<0.000000e+00> : vector<80x128xf32>
    %9 = tpu.matmul %6, %8, %cst_10 {dimension_numbers = #tpu.dot_dimension_numbers<[1], [0], [0], [1], [0, 0, 1, 1], [], []>} : vector<80x128xbf16>, vector<128x128xbf16>, vector<80x128xf32> -> vector<80x128xf32>
    %c0_11 = arith.constant 0 : index
    %c2 = arith.constant 2 : index
    %c0_12 = arith.constant 0 : index
    %10 = vector.load %arg1[%c0_11, %c2, %c0_12] : memref<1x104x128xbf16, #tpu.memory_space<vmem>>, vector<1x80x128xbf16>
    %11 = vector.shape_cast %10 : vector<1x80x128xbf16> to vector<80x128xbf16>
    %c2_13 = arith.constant 2 : index
    %c0_14 = arith.constant 0 : index
    %c0_15 = arith.constant 0 : index
    %12 = vector.load %arg2[%c2_13, %c0_14, %c0_15] : memref<9x128x128xbf16, #tpu.memory_space<vmem>>, vector<1x128x128xbf16>
    %13 = vector.shape_cast %12 : vector<1x128x128xbf16> to vector<128x128xbf16>
    %cst_16 = arith.constant dense<0.000000e+00> : vector<80x128xf32>
    %14 = tpu.matmul %11, %13, %cst_16 {dimension_numbers = #tpu.dot_dimension_numbers<[1], [0], [0], [1], [0, 0, 1, 1], [], []>} : vector<80x128xbf16>, vector<128x128xbf16>, vector<80x128xf32> -> vector<80x128xf32>
    %c0_17 = arith.constant 0 : index
    %c10 = arith.constant 10 : index
    %c0_18 = arith.constant 0 : index
    %15 = vector.load %arg1[%c0_17, %c10, %c0_18] : memref<1x104x128xbf16, #tpu.memory_space<vmem>>, vector<1x80x128xbf16>
    %16 = vector.shape_cast %15 : vector<1x80x128xbf16> to vector<80x128xbf16>
    %c3 = arith.constant 3 : index
    %c0_19 = arith.constant 0 : index
    %c0_20 = arith.constant 0 : index
    %17 = vector.load %arg2[%c3, %c0_19, %c0_20] : memref<9x128x128xbf16, #tpu.memory_space<vmem>>, vector<1x128x128xbf16>
    %18 = vector.shape_cast %17 : vector<1x128x128xbf16> to vector<128x128xbf16>
    %cst_21 = arith.constant dense<0.000000e+00> : vector<80x128xf32>
    %19 = tpu.matmul %16, %18, %cst_21 {dimension_numbers = #tpu.dot_dimension_numbers<[1], [0], [0], [1], [0, 0, 1, 1], [], []>} : vector<80x128xbf16>, vector<128x128xbf16>, vector<80x128xf32> -> vector<80x128xf32>
    %c0_22 = arith.constant 0 : index
    %c11 = arith.constant 11 : index
    %c0_23 = arith.constant 0 : index
    %20 = vector.load %arg1[%c0_22, %c11, %c0_23] : memref<1x104x128xbf16, #tpu.memory_space<vmem>>, vector<1x80x128xbf16>
    %21 = vector.shape_cast %20 : vector<1x80x128xbf16> to vector<80x128xbf16>
    %c4 = arith.constant 4 : index
    %c0_24 = arith.constant 0 : index
    %c0_25 = arith.constant 0 : index
    %22 = vector.load %arg2[%c4, %c0_24, %c0_25] : memref<9x128x128xbf16, #tpu.memory_space<vmem>>, vector<1x128x128xbf16>
    %23 = vector.shape_cast %22 : vector<1x128x128xbf16> to vector<128x128xbf16>
    %cst_26 = arith.constant dense<0.000000e+00> : vector<80x128xf32>
    %24 = tpu.matmul %21, %23, %cst_26 {dimension_numbers = #tpu.dot_dimension_numbers<[1], [0], [0], [1], [0, 0, 1, 1], [], []>} : vector<80x128xbf16>, vector<128x128xbf16>, vector<80x128xf32> -> vector<80x128xf32>
    %c0_27 = arith.constant 0 : index
    %c12 = arith.constant 12 : index
    %c0_28 = arith.constant 0 : index
    %25 = vector.load %arg1[%c0_27, %c12, %c0_28] : memref<1x104x128xbf16, #tpu.memory_space<vmem>>, vector<1x80x128xbf16>
    %26 = vector.shape_cast %25 : vector<1x80x128xbf16> to vector<80x128xbf16>
    %c5 = arith.constant 5 : index
    %c0_29 = arith.constant 0 : index
    %c0_30 = arith.constant 0 : index
    %27 = vector.load %arg2[%c5, %c0_29, %c0_30] : memref<9x128x128xbf16, #tpu.memory_space<vmem>>, vector<1x128x128xbf16>
    %28 = vector.shape_cast %27 : vector<1x128x128xbf16> to vector<128x128xbf16>
    %cst_31 = arith.constant dense<0.000000e+00> : vector<80x128xf32>
    %29 = tpu.matmul %26, %28, %cst_31 {dimension_numbers = #tpu.dot_dimension_numbers<[1], [0], [0], [1], [0, 0, 1, 1], [], []>} : vector<80x128xbf16>, vector<128x128xbf16>, vector<80x128xf32> -> vector<80x128xf32>
    %c0_32 = arith.constant 0 : index
    %c20 = arith.constant 20 : index
    %c0_33 = arith.constant 0 : index
    %30 = vector.load %arg1[%c0_32, %c20, %c0_33] : memref<1x104x128xbf16, #tpu.memory_space<vmem>>, vector<1x80x128xbf16>
    %31 = vector.shape_cast %30 : vector<1x80x128xbf16> to vector<80x128xbf16>
    %c6 = arith.constant 6 : index
    %c0_34 = arith.constant 0 : index
    %c0_35 = arith.constant 0 : index
    %32 = vector.load %arg2[%c6, %c0_34, %c0_35] : memref<9x128x128xbf16, #tpu.memory_space<vmem>>, vector<1x128x128xbf16>
    %33 = vector.shape_cast %32 : vector<1x128x128xbf16> to vector<128x128xbf16>
    %cst_36 = arith.constant dense<0.000000e+00> : vector<80x128xf32>
    %34 = tpu.matmul %31, %33, %cst_36 {dimension_numbers = #tpu.dot_dimension_numbers<[1], [0], [0], [1], [0, 0, 1, 1], [], []>} : vector<80x128xbf16>, vector<128x128xbf16>, vector<80x128xf32> -> vector<80x128xf32>
    %c0_37 = arith.constant 0 : index
    %c21 = arith.constant 21 : index
    %c0_38 = arith.constant 0 : index
    %35 = vector.load %arg1[%c0_37, %c21, %c0_38] : memref<1x104x128xbf16, #tpu.memory_space<vmem>>, vector<1x80x128xbf16>
    %36 = vector.shape_cast %35 : vector<1x80x128xbf16> to vector<80x128xbf16>
    %c7 = arith.constant 7 : index
    %c0_39 = arith.constant 0 : index
    %c0_40 = arith.constant 0 : index
    %37 = vector.load %arg2[%c7, %c0_39, %c0_40] : memref<9x128x128xbf16, #tpu.memory_space<vmem>>, vector<1x128x128xbf16>
    %38 = vector.shape_cast %37 : vector<1x128x128xbf16> to vector<128x128xbf16>
    %cst_41 = arith.constant dense<0.000000e+00> : vector<80x128xf32>
    %39 = tpu.matmul %36, %38, %cst_41 {dimension_numbers = #tpu.dot_dimension_numbers<[1], [0], [0], [1], [0, 0, 1, 1], [], []>} : vector<80x128xbf16>, vector<128x128xbf16>, vector<80x128xf32> -> vector<80x128xf32>
    %c0_42 = arith.constant 0 : index
    %c22 = arith.constant 22 : index
    %c0_43 = arith.constant 0 : index
    %40 = vector.load %arg1[%c0_42, %c22, %c0_43] : memref<1x104x128xbf16, #tpu.memory_space<vmem>>, vector<1x80x128xbf16>
    %41 = vector.shape_cast %40 : vector<1x80x128xbf16> to vector<80x128xbf16>
    %c8 = arith.constant 8 : index
    %c0_44 = arith.constant 0 : index
    %c0_45 = arith.constant 0 : index
    %42 = vector.load %arg2[%c8, %c0_44, %c0_45] : memref<9x128x128xbf16, #tpu.memory_space<vmem>>, vector<1x128x128xbf16>
    %43 = vector.shape_cast %42 : vector<1x128x128xbf16> to vector<128x128xbf16>
    %cst_46 = arith.constant dense<0.000000e+00> : vector<80x128xf32>
    %44 = tpu.matmul %41, %43, %cst_46 {dimension_numbers = #tpu.dot_dimension_numbers<[1], [0], [0], [1], [0, 0, 1, 1], [], []>} : vector<80x128xbf16>, vector<128x128xbf16>, vector<80x128xf32> -> vector<80x128xf32>
    %c0_47 = arith.constant 0 : index
    %c0_48 = arith.constant 0 : index
    %c0_49 = arith.constant 0 : index
    %45 = vector.load %arg4[%c0_47, %c0_48, %c0_49] : memref<1x80x128xbf16, #tpu.memory_space<vmem>>, vector<1x80x128xbf16>
    %46 = vector.shape_cast %45 : vector<1x80x128xbf16> to vector<80x128xbf16>
    %c0_50 = arith.constant 0 : index
    %c0_51 = arith.constant 0 : index
    %47 = vector.load %arg5[%c0_50, %c0_51] : memref<128x128xbf16, #tpu.memory_space<vmem>>, vector<128x128xbf16>
    %cst_52 = arith.constant dense<0.000000e+00> : vector<80x128xf32>
    %48 = tpu.matmul %46, %47, %cst_52 {dimension_numbers = #tpu.dot_dimension_numbers<[1], [0], [0], [1], [0, 0, 1, 1], [], []>} : vector<80x128xbf16>, vector<128x128xbf16>, vector<80x128xf32> -> vector<80x128xf32>
    %c0_53 = arith.constant 0 : index
    %c0_54 = arith.constant 0 : index
    %49 = vector.load %arg6[%c0_53, %c0_54] : memref<1x128xf32, #tpu.memory_space<vmem>>, vector<1x128xf32>
    %50 = vector.shape_cast %49 : vector<1x128xf32> to vector<1x128xf32>
    %51 = vector.broadcast %50 : vector<1x128xf32> to vector<80x128xf32>
    %c0_55 = arith.constant 0 : index
    %c0_56 = arith.constant 0 : index
    %52 = vector.load %arg3[%c0_55, %c0_56] : memref<1x128xf32, #tpu.memory_space<vmem>>, vector<1x128xf32>
    %53 = vector.shape_cast %52 : vector<1x128xf32> to vector<1x128xf32>
    %54 = vector.broadcast %53 : vector<1x128xf32> to vector<80x128xf32>
    %55 = arith.addf %4, %9 : vector<80x128xf32>
    %56 = arith.addf %14, %19 : vector<80x128xf32>
    %57 = arith.addf %24, %29 : vector<80x128xf32>
    %58 = arith.addf %34, %39 : vector<80x128xf32>
    %59 = arith.addf %44, %48 : vector<80x128xf32>
    %60 = arith.addf %51, %54 : vector<80x128xf32>
    %61 = arith.addf %55, %56 : vector<80x128xf32>
    %62 = arith.addf %57, %58 : vector<80x128xf32>
    %63 = arith.addf %59, %60 : vector<80x128xf32>
    %64 = arith.addf %61, %62 : vector<80x128xf32>
    %65 = arith.addf %64, %63 : vector<80x128xf32>
    %cst_57 = arith.constant 0.000000e+00 : f32
    %66 = vector.broadcast %cst_57 : f32 to vector<80x128xf32>
    %67 = arith.maximumf %65, %66 : vector<80x128xf32>
    %c0_58 = arith.constant 0 : index
    %c0_59 = arith.constant 0 : index
    %c0_60 = arith.constant 0 : index
    %68 = vector.load %arg7[%c0_58, %c0_59, %c0_60] : memref<1x80x128xf32, #tpu.memory_space<vmem>>, vector<1x80x128xf32>
    %69 = vector.shape_cast %68 : vector<1x80x128xf32> to vector<80x128xf32>
    %70 = vector.shape_cast %67 : vector<80x128xf32> to vector<1x80x128xf32>
    tpu.vector_store %arg7[%c0_58, %c0_59, %c0_60], %70 {strides = array<i32>} : memref<1x80x128xf32, #tpu.memory_space<vmem>>, vector<1x80x128xf32>,
    return
  }
  func.func @transform_0(%arg0: i32) -> (i32, i32, i32) {
    %c0_i32 = arith.constant 0 : i32
    %c0_i32_0 = arith.constant 0 : i32
    %c0_i32_1 = arith.constant 0 : i32
    return %arg0, %c0_i32, %c0_i32_0 : i32, i32, i32
  }
  func.func @transform_1(%arg0: i32) -> (i32, i32, i32) {
    %c0_i32 = arith.constant 0 : i32
    %c0_i32_0 = arith.constant 0 : i32
    %c0_i32_1 = arith.constant 0 : i32
    %c0_i32_2 = arith.constant 0 : i32
    return %c0_i32, %c0_i32_0, %c0_i32_1 : i32, i32, i32
  }
  func.func @transform_2(%arg0: i32) -> (i32, i32) {
    %c0_i32 = arith.constant 0 : i32
    %c0_i32_0 = arith.constant 0 : i32
    %c0_i32_1 = arith.constant 0 : i32
    return %c0_i32, %c0_i32_0 : i32, i32
  }
  func.func @transform_3(%arg0: i32) -> (i32, i32, i32) {
    %c0_i32 = arith.constant 0 : i32
    %c0_i32_0 = arith.constant 0 : i32
    %c0_i32_1 = arith.constant 0 : i32
    return %arg0, %c0_i32, %c0_i32_0 : i32, i32, i32
  }
  func.func @transform_4(%arg0: i32) -> (i32, i32) {
    %c0_i32 = arith.constant 0 : i32
    %c0_i32_0 = arith.constant 0 : i32
    %c0_i32_1 = arith.constant 0 : i32
    return %c0_i32, %c0_i32_0 : i32, i32
  }
  func.func @transform_5(%arg0: i32) -> (i32, i32) {
    %c0_i32 = arith.constant 0 : i32
    %c0_i32_0 = arith.constant 0 : i32
    %c0_i32_1 = arith.constant 0 : i32
    return %c0_i32, %c0_i32_0 : i32, i32
  }
  func.func @transform_6(%arg0: i32) -> (i32, i32, i32) {
    %c0_i32 = arith.constant 0 : i32
    %c0_i32_0 = arith.constant 0 : i32
    %c0_i32_1 = arith.constant 0 : i32
    return %arg0, %c0_i32, %c0_i32_0 : i32, i32, i32
  }
}

</mosaic_0001>

<llo_original>
// kernel: residual_block_forward.2
$region0: #{residual_block_forward.2}
  #allocation0 [shape = 'u32[]', space=smem, size = 0x4, offset = 0x4, fixed_abs, tag = 'smem constant byte address 0x4 - core index']
  #allocation1 [shape = 'u32[144,128]{1,0:T(1,128)}', space=vmem, size = 0x12000, scoped, tag = 'internal scratch']
  %s0 = inlined_call_operand.hbm [shape: bf16[2,352,128], index: 0, kind: input, shape index: {}]
  %s1 = inlined_call_operand.hbm [shape: bf16[9,128,128], index: 1, kind: input, shape index: {}]
  %s2 = inlined_call_operand.hbm [shape: f32[1,128], index: 2, kind: input, shape index: {}]
  %s3 = inlined_call_operand.hbm [shape: bf16[2,72,128], index: 3, kind: output, shape index: {}]
  %s4 = sld [smem:[#allocation0]]
  $region57: #{residual_block_forward.2} parent=0
    _
  %s6 = ssub.s32 1, %s4
  %s7 = scalar_select 0, %s6, %s4
  $region1: #{residual_block_forward.2} parent=0
    #allocation2 [shape = 'u8[180224]{0}', space=vmem, size = 0x2c000, scoped, tag = 'input window, operand 0']
    #allocation3 [shape = 's32[2]{0}', space=sflag, size = 0x8, scoped, tag = 'scoped memory for residual_block_forward.2']
    #allocation4 [shape = 's32[2]{0}', space=sflag, size = 0x8, scoped, tag = 'scoped memory for residual_block_forward.2']
    #allocation5 [shape = 'u8[294912]{0}', space=vmem, size = 0x48000, scoped, tag = 'input window, operand 1, single buffered']
    #allocation6 [shape = 's32[1]{0}', space=sflag, size = 0x4, scoped, tag = 'scoped memory for residual_block_forward.2']
    #allocation7 [shape = 'u8[512]{0}', space=vmem, size = 0x400, scoped, tag = 'input window, operand 2, single buffered']
    #allocation8 [shape = 'u8[36864]{0}', space=vmem, size = 0x9000, scoped, tag = 'output window, operand 0']
    %8 = vsyncpa [#allocation3], 0
    %s9 = scalar_lea.sflag [#allocation3], 1
    %10 = vsyncpa %s9, 0
    %11 = vsyncpa [#allocation6], 0
    %12 = vsyncpa [#allocation4], 0
    %s13 = scalar_lea.sflag [#allocation4], 1
    %14 = vsyncpa %s13, 0
    loop: start=0, step=1, limit=4
    $region2: #{residual_block_forward.2} parent=1 // loop_pre_header
      _
    $region3: #{residual_block_forward.2} parent=1 // loop_header
      %s16 = sphi 0, %s20
      %p17 = scmp.ge.s32.totalorder %s16, 4
      %s26 = sphi 0, %s28
      %s29 = sphi 0, %s26
      %s30 = sphi 0, %s29
      %s46 = sphi 0, %s30
      %s50 = sphi 0, %s50
      %s52 = sphi 0, %s50
      %s53 = sphi 0, %s52
      %s67 = sphi 0, %s53
      %s71 = sphi 0, %s71
      %s73 = sphi 0, %s71
      %s74 = sphi 0, %s73
      %s88 = sphi 0, %s74
      %s94 = sphi 0, %s96
      %s97 = sphi 0, %s94
      %s98 = sphi 0, %s97
      %s114 = sphi 0, %s98
    $region4: #{residual_block_forward.2} parent=1 // loop_header_branch
      %19 = sbr.rel (%p17) target = $region8
    $region5: #{residual_block_forward.2} parent=1 // loop_body
      %s21 = ssub.s32 %s16, 1
      %s22 = ssub.s32 %s16, 2
      %s23 = sadd.s32 %s16, 1
      %s24 = ssub.s32 %s16, %s23
      %p25 = scmp.eq.s32.totalorder %s24, 0
      %s27 = sadd.s32 %s26, 1
      %s28 = scalar_select %p25, %s26, %s27
      %p31 = pneg %p25
      %p32 = scmp.eq.s32.totalorder %s16, 1
      %p33 = por %p31, %p32
      %p34 = scmp.ne.s32.totalorder %s26, %s29
      %p35 = scmp.eq.s32.totalorder %s16, 0
      %p36 = por %p34, %p35
      %p37 = scmp.ne.s32.totalorder %s26, %s29
      %p38 = scmp.eq.s32.totalorder %s21, 1
      %p39 = por %p37, %p38
      %p40 = scmp.ne.s32.totalorder %s29, %s30
      %p41 = scmp.eq.s32.totalorder %s21, 0
      %p42 = por %p40, %p41
      %p43 = scmp.ne.s32.totalorder %s29, %s30
      %p44 = scmp.eq.s32.totalorder %s22, 1
      %p45 = por %p43, %p44
      %p47 = scmp.ne.s32.totalorder %s30, %s46
      %p48 = scmp.eq.s32.totalorder %s22, 0
      %p49 = por %p47, %p48
      %s51 = sadd.s32 %s50, 1
      %p54 = scmp.eq.s32.totalorder %s16, 1
      %p55 = scmp.ne.s32.totalorder %s50, %s52
      %p56 = scmp.eq.s32.totalorder %s16, 0
      %p57 = por %p55, %p56
      %p58 = scmp.ne.s32.totalorder %s50, %s52
      %p59 = scmp.eq.s32.totalorder %s21, 1
      %p60 = por %p58, %p59
      %p61 = scmp.ne.s32.totalorder %s52, %s53
      %p62 = scmp.eq.s32.totalorder %s21, 0
      %p63 = por %p61, %p62
      %p64 = scmp.ne.s32.totalorder %s52, %s53
      %p65 = scmp.eq.s32.totalorder %s22, 1
      %p66 = por %p64, %p65
      %p68 = scmp.ne.s32.totalorder %s53, %s67
      %p69 = scmp.eq.s32.totalorder %s22, 0
      %p70 = por %p68, %p69
      %s72 = sadd.s32 %s71, 1
      %p75 = scmp.eq.s32.totalorder %s16, 1
      %p76 = scmp.ne.s32.totalorder %s71, %s73
      %p77 = scmp.eq.s32.totalorder %s16, 0
      %p78 = por %p76, %p77
      %p79 = scmp.ne.s32.totalorder %s71, %s73
      %p80 = scmp.eq.s32.totalorder %s21, 1
      %p81 = por %p79, %p80
      %p82 = scmp.ne.s32.totalorder %s73, %s74
      %p83 = scmp.eq.s32.totalorder %s21, 0
      %p84 = por %p82, %p83
      %p85 = scmp.ne.s32.totalorder %s73, %s74
      %p86 = scmp.eq.s32.totalorder %s22, 1
      %p87 = por %p85, %p86
      %p89 = scmp.ne.s32.totalorder %s74, %s88
      %p90 = scmp.eq.s32.totalorder %s22, 0
      %p91 = por %p89, %p90
      %s92 = ssub.s32 %s16, %s23
      %p93 = scmp.eq.s32.totalorder %s92, 0
      %s95 = sadd.s32 %s94, 1
      %s96 = scalar_select %p93, %s94, %s95
      %p99 = pneg %p93
      %p100 = scmp.eq.s32.totalorder %s16, 1
      %p101 = por %p99, %p100
      %p102 = scmp.ne.s32.totalorder %s94, %s97
      %p103 = scmp.eq.s32.totalorder %s16, 0
      %p104 = por %p102, %p103
      %p105 = scmp.ne.s32.totalorder %s94, %s97
      %p106 = scmp.eq.s32.totalorder %s21, 1
      %p107 = por %p105, %p106
      %p108 = scmp.ne.s32.totalorder %s97, %s98
      %p109 = scmp.eq.s32.totalorder %s21, 0
      %p110 = por %p108, %p109
      %p111 = scmp.ne.s32.totalorder %s97, %s98
      %p112 = scmp.eq.s32.totalorder %s22, 1
      %p113 = por %p111, %p112
      %p115 = scmp.ne.s32.totalorder %s98, %s114
      %p116 = scmp.eq.s32.totalorder %s22, 0
      %p117 = por %p115, %p116
      %p118 = scmp.le.s32.totalorder 1, %s16
      %p119 = scmp.lt.s32.totalorder %s16, 3
      %p120 = pnand %p118, %p119
      %p121 = pneg %p120
      // Predicated region
      $region9: #{residual_block_forward.2} parent=5 // pred_check
        _
      $region10: #{residual_block_forward.2} parent=5 // pred_check_branch
        %123 = sbr.rel (%p120) target = $region12
      $region11: #{residual_block_forward.2} parent=5 // pred_region
        %s124 = ssub.s32 %s16, 1
        // Predicated region
        $region13: #{residual_block_forward.2} parent=11 // pred_check
          %p125 = pneg %p63
        $region14: #{residual_block_forward.2} parent=11 // pred_check_branch
          %127 = sbr.rel (%p125) target = $region16
        $region15: #{residual_block_forward.2} parent=11 // pred_region
          %s129 = ssub.s32 9216, 9216
          %130 = vsyncadd [#allocation6], %s129
          %s131 = sshll.u32 [#allocation5], 4
          %s132 = int_to_ptr.vmem [resolvable:$true] %s131
          %137 = dma.hbm_to_vmem [thread:$0]  %s1, 9216, %s132, [#allocation6], 64, 64, 4
        $region16: #{residual_block_forward.2} parent=11 // pred_fallthru
          _
        // Predicated region
        $region17: #{residual_block_forward.2} parent=11 // pred_check
          %p138 = pneg %p84
        $region18: #{residual_block_forward.2} parent=11 // pred_check_branch
          %140 = sbr.rel (%p138) target = $region20
        $region19: #{residual_block_forward.2} parent=11 // pred_region
          %s142 = ssub.s32 16, 16
          %143 = vsyncadd [#allocation6], %s142
          %s145 = sshll.u32 [#allocation7], 4
          %s146 = int_to_ptr.vmem [resolvable:$true] %s145
          %148 = dma.hbm_to_vmem [thread:$0]  %s2, 16, %s146, [#allocation6]
        $region20: #{residual_block_forward.2} parent=11 // pred_fallthru
          _
      $region12: #{residual_block_forward.2} parent=5 // pred_fallthru
        _
      %p149 = scmp.lt.s32.totalorder %s16, 2
      // Predicated region
      $region21: #{residual_block_forward.2} parent=5 // pred_check
        %p150 = pneg %p149
      $region22: #{residual_block_forward.2} parent=5 // pred_check_branch
        %152 = sbr.rel (%p150) target = $region24
      $region23: #{residual_block_forward.2} parent=5 // pred_region
        // Predicated region
        $region25: #{residual_block_forward.2} parent=23 // pred_check
          %p153 = pneg %p36
        $region26: #{residual_block_forward.2} parent=23 // pred_check_branch
          %155 = sbr.rel (%p153) target = $region28
        $region27: #{residual_block_forward.2} parent=23 // pred_region
          %s156 = sand.u32 %s26, 1
          %s157 = scalar_lea.sflag [#allocation3], %s156
          %s158 = sand.u32 %s26, 1
          %s159 = smul.addr %s158, 176
          %s160 = scalar_lea.vmem [#allocation2], %s159
          %s162 = ssub.s32 2816, 2816
          %163 = vsyncadd %s157, %s162
          %s164 = smul.addr %s16, 44
          %s165 = smul.addr %s164, 64
          %s166 = scalar_lea.hbm %s0, %s165
          %s167 = sshll.u32 %s160, 4
          %s168 = int_to_ptr.vmem [resolvable:$true] %s167
          %173 = dma.hbm_to_vmem [thread:$0]  %s166, 2816, %s168, %s157, 64, 64, 4
        $region28: #{residual_block_forward.2} parent=23 // pred_fallthru
          _
      $region24: #{residual_block_forward.2} parent=5 // pred_fallthru
        _
      %p174 = scmp.le.s32.totalorder 1, %s16
      %p175 = scmp.lt.s32.totalorder %s16, 3
      %p176 = pnand %p174, %p175
      %p177 = pneg %p176
      // Predicated region
      $region29: #{residual_block_forward.2} parent=5 // pred_check
        _
      $region30: #{residual_block_forward.2} parent=5 // pred_check_branch
        %179 = sbr.rel (%p176) target = $region32
      $region31: #{residual_block_forward.2} parent=5 // pred_region
        %s180 = ssub.s32 %s16, 1
        %s181 = sand.u32 %s29, 1
        %s182 = scalar_lea.sflag [#allocation3], %s181
        %s183 = sand.u32 %s29, 1
        %s184 = smul.addr %s183, 176
        %s185 = scalar_lea.vmem [#allocation2], %s184
        // Predicated region
        $region33: #{residual_block_forward.2} parent=31 // pred_check
          %p186 = pneg %p42
        $region34: #{residual_block_forward.2} parent=31 // pred_check_branch
          %188 = sbr.rel (%p186) target = $region36
        $region35: #{residual_block_forward.2} parent=31 // pred_region
          %189 = dma.done %s182, 2816
        $region36: #{residual_block_forward.2} parent=31 // pred_fallthru
          _
        // Predicated region
        $region37: #{residual_block_forward.2} parent=31 // pred_check
          %p190 = pneg %p63
        $region38: #{residual_block_forward.2} parent=31 // pred_check_branch
          %192 = sbr.rel (%p190) target = $region40
        $region39: #{residual_block_forward.2} parent=31 // pred_region
          %193 = dma.done [#allocation6], 9216
        $region40: #{residual_block_forward.2} parent=31 // pred_fallthru
          _
        // Predicated region
        $region41: #{residual_block_forward.2} parent=31 // pred_check
          %p194 = pneg %p84
        $region42: #{residual_block_forward.2} parent=31 // pred_check_branch
          %196 = sbr.rel (%p194) target = $region44
        $region43: #{residual_block_forward.2} parent=31 // pred_region
          %197 = dma.done [#allocation6], 16
        $region44: #{residual_block_forward.2} parent=31 // pred_fallthru
          _
        %s198 = sand.u32 %s29, 1
        %s199 = scalar_lea.sflag [#allocation3], %s198
        %s200 = sand.u32 %s29, 1
        %s201 = smul.addr %s200, 176
        %s202 = scalar_lea.vmem [#allocation2], %s201
        %p203 = pneg %p42
        %p204 = pneg %p39
        %p205 = pneg %p63
        %p206 = pneg %p60
        %p207 = pneg %p84
        %p208 = pneg %p81
        %p209 = pneg %p110
        %p210 = pneg %p107
        %s211 = sand.u32 %s97, 1
        %s212 = scalar_lea.sflag [#allocation4], %s211
        %s213 = sand.u32 %s97, 1
        %s214 = smul.addr %s213, 36
        %s215 = scalar_lea.vmem [#allocation8], %s214
        %v217 = vld [vmem:[%s185] sm:$0xf]
        %v218 = vld [vmem:[%s185 + $0x4] sm:$0xf]
        %v219 = vld [vmem:[%s185 + $0x8] sm:$0xf]
        %v220 = vld [vmem:[%s185 + $0xc] sm:$0xf]
        %v221 = vld [vmem:[%s185 + $0x10] sm:$0xf]
        %v222 = vld [vmem:[%s185 + $0x14] sm:$0xf]
        %v223 = vld [vmem:[%s185 + $0x18] sm:$0xf]
        %v224 = vld [vmem:[%s185 + $0x1c] sm:$0xf]
        %v225 = vld [vmem:[%s185 + $0x20] sm:$0xf]
        %v226 = vld [vmem:[#allocation5] sm:$0xf]
        %v227 = vld [vmem:[#allocation5 + $0x4] sm:$0xf]
        %v228 = vld [vmem:[#allocation5 + $0x8] sm:$0xf]
        %v229 = vld [vmem:[#allocation5 + $0xc] sm:$0xf]
        %v230 = vld [vmem:[#allocation5 + $0x10] sm:$0xf]
        %v231 = vld [vmem:[#allocation5 + $0x14] sm:$0xf]
        %v232 = vld [vmem:[#allocation5 + $0x18] sm:$0xf]
        %v233 = vld [vmem:[#allocation5 + $0x1c] sm:$0xf]
        %v234 = vld [vmem:[#allocation5 + $0x20] sm:$0xf]
        %v235 = vld [vmem:[#allocation5 + $0x24] sm:$0xf]
        %v236 = vld [vmem:[#allocation5 + $0x28] sm:$0xf]
        %v237 = vld [vmem:[#allocation5 + $0x2c] sm:$0xf]
        %v238 = vld [vmem:[#allocation5 + $0x30] sm:$0xf]
        %v239 = vld [vmem:[#allocation5 + $0x34] sm:$0xf]
        %v240 = vld [vmem:[#allocation5 + $0x38] sm:$0xf]
        %v241 = vld [vmem:[#allocation5 + $0x3c] sm:$0xf]
        %v242 = vld [vmem:[%s185 + $0x2c] sm:$0xf]
        %v243 = vld [vmem:[%s185 + $0x30] sm:$0xf]
        %v244 = vld [vmem:[%s185 + $0x34] sm:$0xf]
        %v245 = vld [vmem:[%s185 + $0x38] sm:$0xf]
        %v246 = vld [vmem:[%s185 + $0x3c] sm:$0xf]
        %v247 = vld [vmem:[%s185 + $0x40] sm:$0xf]
        %v248 = vld [vmem:[%s185 + $0x44] sm:$0xf]
        %v249 = vld [vmem:[%s185 + $0x48] sm:$0xf]
        %v250 = vld [vmem:[%s185 + $0x4c] sm:$0xf]
        %s251 = scalar_lea.vmem [#allocation5], 64
        %v252 = vld [vmem:[%s251] sm:$0xf]
        %v253 = vld [vmem:[%s251 + $0x4] sm:$0xf]
        %v254 = vld [vmem:[%s251 + $0x8] sm:$0xf]
        %v255 = vld [vmem:[%s251 + $0xc] sm:$0xf]
        %v256 = vld [vmem:[%s251 + $0x10] sm:$0xf]
        %v257 = vld [vmem:[%s251 + $0x14] sm:$0xf]
        %v258 = vld [vmem:[%s251 + $0x18] sm:$0xf]
        %v259 = vld [vmem:[%s251 + $0x1c] sm:$0xf]
        %v260 = vld [vmem:[%s251 + $0x20] sm:$0xf]
        %v261 = vld [vmem:[%s251 + $0x24] sm:$0xf]
        %v262 = vld [vmem:[%s251 + $0x28] sm:$0xf]
        %v263 = vld [vmem:[%s251 + $0x2c] sm:$0xf]
        %v264 = vld [vmem:[%s251 + $0x30] sm:$0xf]
        %v265 = vld [vmem:[%s251 + $0x34] sm:$0xf]
        %v266 = vld [vmem:[%s251 + $0x38] sm:$0xf]
        %v267 = vld [vmem:[%s251 + $0x3c] sm:$0xf]
        %v277 = vunpack.c.l.b16 %v242
        %v278 = vunpack.c.l.b16 %v243
        %v279 = vunpack.c.l.b16 %v244
        %v280 = vunpack.c.l.b16 %v245
        %v281 = vunpack.c.l.b16 %v246
        %v282 = vunpack.c.l.b16 %v247
        %v283 = vunpack.c.l.b16 %v248
        %v284 = vunpack.c.l.b16 %v249
        %v285 = vunpack.c.l.b16 %v250
        %v286 = vpack.c.b16 %v278, %v277
        %v287 = vpack.c.b16 %v280, %v279
        %v288 = vpack.c.b16 %v282, %v281
        %v289 = vpack.c.b16 %v284, %v283
        %v290 = vpack.c.b16 %v285, %v285
        %v312 = vunpack.c.l.b16 %v252
        %v313 = vunpack.c.l.b16 %v253
        %v314 = vunpack.c.l.b16 %v254
        %v315 = vunpack.c.l.b16 %v255
        %v316 = vunpack.c.l.b16 %v256
        %v317 = vunpack.c.l.b16 %v257
        %v318 = vunpack.c.l.b16 %v258
        %v319 = vunpack.c.l.b16 %v259
        %v320 = vunpack.c.l.b16 %v260
        %v321 = vunpack.c.l.b16 %v261
        %v322 = vunpack.c.l.b16 %v262
        %v323 = vunpack.c.l.b16 %v263
        %v324 = vunpack.c.l.b16 %v264
        %v325 = vunpack.c.l.b16 %v265
        %v326 = vunpack.c.l.b16 %v266
        %v327 = vunpack.c.l.b16 %v267
        %v328 = vpack.c.b16 %v313, %v312
        %v329 = vpack.c.b16 %v315, %v314
        %v330 = vpack.c.b16 %v317, %v316
        %v331 = vpack.c.b16 %v319, %v318
        %v332 = vpack.c.b16 %v321, %v320
        %v333 = vpack.c.b16 %v323, %v322
        %v334 = vpack.c.b16 %v325, %v324
        %v335 = vpack.c.b16 %v327, %v326
        %344 = vmatprep.subr.bf16.mxu0 0
        %345 = vmatpush1.bf16.msra.mxu0 %v328
        %346 = vmatprep.subr.bf16.mxu0 0
        %347 = vmatpush1.bf16.msra.mxu0 %v329
        %348 = vmatprep.subr.bf16.mxu0 0
        %349 = vmatpush1.bf16.msra.mxu0 %v330
        %350 = vmatprep.subr.bf16.mxu0 0
        %351 = vmatpush1.bf16.msra.mxu0 %v331
        %352 = vmatprep.subr.bf16.mxu0 0
        %353 = vmatpush1.bf16.msra.mxu0 %v332
        %354 = vmatprep.subr.bf16.mxu0 0
        %355 = vmatpush1.bf16.msra.mxu0 %v333
        %356 = vmatprep.subr.bf16.mxu0 0
        %357 = vmatpush1.bf16.msra.mxu0 %v334
        %358 = vmatprep.subr.bf16.mxu0 0
        %359 = vmatpush1.bf16.msra.mxu0 %v335
        %360 = vmatprep.subr.bf16.mxu0 0
        %361 = vmatpush1.bf16.msra.mxu0 0
        %362 = vmatprep.subr.bf16.mxu0 0
        %363 = vmatpush1.bf16.msra.mxu0 0
        %364 = vmatprep.subr.bf16.mxu0 0
        %365 = vmatpush1.bf16.msra.mxu0 0
        %366 = vmatprep.subr.bf16.mxu0 0
        %367 = vmatpush1.bf16.msra.mxu0 0
        %368 = vmatprep.subr.bf16.mxu0 0
        %369 = vmatpush1.bf16.msra.mxu0 0
        %370 = vmatprep.subr.bf16.mxu0 0
        %371 = vmatpush1.bf16.msra.mxu0 0
        %372 = vmatprep.subr.bf16.mxu0 0
        %373 = vmatpush1.bf16.msra.mxu0 0
        %374 = vmatprep.subr.bf16.mxu0 0
        %375 = vmatpush1.bf16.msra.mxu0 0
        %376 = vmatprep.mubr.bf16.mxu0 0
        %377 = vmatmul.mubr.bf16.gmra.mrb[0].mxu0 %v286
        %v378 = vpop.f32.mrb[0].mxu0
        %v379 = vadd.f32 0.0, %v378
        %v380 = vpop.f32.mrb[0].mxu0
        %v381 = vpop.f32.mrb[0].mxu0
        %v382 = vadd.f32 0.0, %v381
        %v383 = vpop.f32.mrb[0].mxu0
        %384 = vmatprep.mubr.bf16.mxu0 0
        %385 = vmatmul.mubr.bf16.gmra.mrb[0].mxu0 %v287
        %v386 = vpop.f32.mrb[0].mxu0
        %v387 = vadd.f32 0.0, %v386
        %v388 = vpop.f32.mrb[0].mxu0
        %v389 = vpop.f32.mrb[0].mxu0
        %v390 = vadd.f32 0.0, %v389
        %v391 = vpop.f32.mrb[0].mxu0
        %392 = vmatprep.mubr.bf16.mxu0 0
        %393 = vmatmul.mubr.bf16.gmra.mrb[0].mxu0 %v288
        %v394 = vpop.f32.mrb[0].mxu0
        %v395 = vadd.f32 0.0, %v394
        %v396 = vpop.f32.mrb[0].mxu0
        %v397 = vpop.f32.mrb[0].mxu0
        %v398 = vadd.f32 0.0, %v397
        %v399 = vpop.f32.mrb[0].mxu0
        %400 = vmatprep.mubr.bf16.mxu0 0
        %401 = vmatmul.mubr.bf16.gmra.mrb[0].mxu0 %v289
        %v402 = vpop.f32.mrb[0].mxu0
        %v403 = vadd.f32 0.0, %v402
        %v404 = vpop.f32.mrb[0].mxu0
        %v405 = vpop.f32.mrb[0].mxu0
        %v406 = vadd.f32 0.0, %v405
        %v407 = vpop.f32.mrb[0].mxu0
        %408 = vmatprep.mubr.bf16.mxu0 0
        %409 = vmatmul.mubr.bf16.gmra.mrb[0].mxu0 %v290
        %v410 = vpop.f32.mrb[0].mxu0
        %v411 = vadd.f32 0.0, %v410
        %v412 = vpop.f32.mrb[0].mxu0
        %v413 = vpop.f32.mrb[0].mxu0
        %v414 = vpop.f32.mrb[0].mxu0
        %415 = vdwg.mxu0
        %v416 = vld [vmem:[%s185] sm:$0xf]
        %v417 = vld [vmem:[%s185 + $0x4] sm:$0xf]
        %v418 = vld [vmem:[%s185 + $0x8] sm:$0xf]
        %v419 = vld [vmem:[%s185 + $0xc] sm:$0xf]
        %v420 = vld [vmem:[%s185 + $0x10] sm:$0xf]
        %v421 = vld [vmem:[%s185 + $0x14] sm:$0xf]
        %v422 = vld [vmem:[%s185 + $0x18] sm:$0xf]
        %v423 = vld [vmem:[%s185 + $0x1c] sm:$0xf]
        %v424 = vld [vmem:[%s185 + $0x20] sm:$0xf]
        %v425 = vld [vmem:[%s185 + $0x24] sm:$0x1]
        %s426 = scalar_lea.vmem [#allocation5], 128
        %v427 = vld [vmem:[%s426] sm:$0xf]
        %v428 = vld [vmem:[%s426 + $0x4] sm:$0xf]
        %v429 = vld [vmem:[%s426 + $0x8] sm:$0xf]
        %v430 = vld [vmem:[%s426 + $0xc] sm:$0xf]
        %v431 = vld [vmem:[%s426 + $0x10] sm:$0xf]
        %v432 = vld [vmem:[%s426 + $0x14] sm:$0xf]
        %v433 = vld [vmem:[%s426 + $0x18] sm:$0xf]
        %v434 = vld [vmem:[%s426 + $0x1c] sm:$0xf]
        %v435 = vld [vmem:[%s426 + $0x20] sm:$0xf]
        %v436 = vld [vmem:[%s426 + $0x24] sm:$0xf]
        %v437 = vld [vmem:[%s426 + $0x28] sm:$0xf]
        %v438 = vld [vmem:[%s426 + $0x2c] sm:$0xf]
        %v439 = vld [vmem:[%s426 + $0x30] sm:$0xf]
        %v440 = vld [vmem:[%s426 + $0x34] sm:$0xf]
        %v441 = vld [vmem:[%s426 + $0x38] sm:$0xf]
        %v442 = vld [vmem:[%s426 + $0x3c] sm:$0xf]
        %v443 = vld [vmem:[%s185 + $0x58] sm:$0xf]
        %v444 = vld [vmem:[%s185 + $0x5c] sm:$0xf]
        %v445 = vld [vmem:[%s185 + $0x60] sm:$0xf]
        %v446 = vld [vmem:[%s185 + $0x64] sm:$0xf]
        %v447 = vld [vmem:[%s185 + $0x68] sm:$0xf]
        %v448 = vld [vmem:[%s185 + $0x6c] sm:$0xf]
        %v449 = vld [vmem:[%s185 + $0x70] sm:$0xf]
        %v450 = vld [vmem:[%s185 + $0x74] sm:$0xf]
        %v451 = vld [vmem:[%s185 + $0x78] sm:$0xf]
        %s452 = scalar_lea.vmem [#allocation5], 192
        %v453 = vld [vmem:[%s452] sm:$0xf]
        %v454 = vld [vmem:[%s452 + $0x4] sm:$0xf]
        %v455 = vld [vmem:[%s452 + $0x8] sm:$0xf]
        %v456 = vld [vmem:[%s452 + $0xc] sm:$0xf]
        %v457 = vld [vmem:[%s452 + $0x10] sm:$0xf]
        %v458 = vld [vmem:[%s452 + $0x14] sm:$0xf]
        %v459 = vld [vmem:[%s452 + $0x18] sm:$0xf]
        %v460 = vld [vmem:[%s452 + $0x1c] sm:$0xf]
        %v461 = vld [vmem:[%s452 + $0x20] sm:$0xf]
        %v462 = vld [vmem:[%s452 + $0x24] sm:$0xf]
        %v463 = vld [vmem:[%s452 + $0x28] sm:$0xf]
        %v464 = vld [vmem:[%s452 + $0x2c] sm:$0xf]
        %v465 = vld [vmem:[%s452 + $0x30] sm:$0xf]
        %v466 = vld [vmem:[%s452 + $0x34] sm:$0xf]
        %v467 = vld [vmem:[%s452 + $0x38] sm:$0xf]
        %v468 = vld [vmem:[%s452 + $0x3c] sm:$0xf]
        %v478 = vunpack.c.l.b16 %v443
        %v479 = vunpack.c.l.b16 %v444
        %v480 = vunpack.c.l.b16 %v445
        %v481 = vunpack.c.l.b16 %v446
        %v482 = vunpack.c.l.b16 %v447
        %v483 = vunpack.c.l.b16 %v448
        %v484 = vunpack.c.l.b16 %v449
        %v485 = vunpack.c.l.b16 %v450
        %v486 = vunpack.c.l.b16 %v451
        %v487 = vpack.c.b16 %v479, %v478
        %v488 = vpack.c.b16 %v481, %v480
        %v489 = vpack.c.b16 %v483, %v482
        %v490 = vpack.c.b16 %v485, %v484
        %v491 = vpack.c.b16 %v486, %v486
        %v513 = vunpack.c.l.b16 %v453
        %v514 = vunpack.c.l.b16 %v454
        %v515 = vunpack.c.l.b16 %v455
        %v516 = vunpack.c.l.b16 %v456
        %v517 = vunpack.c.l.b16 %v457
        %v518 = vunpack.c.l.b16 %v458
        %v519 = vunpack.c.l.b16 %v459
        %v520 = vunpack.c.l.b16 %v460
        %v521 = vunpack.c.l.b16 %v461
        %v522 = vunpack.c.l.b16 %v462
        %v523 = vunpack.c.l.b16 %v463
        %v524 = vunpack.c.l.b16 %v464
        %v525 = vunpack.c.l.b16 %v465
        %v526 = vunpack.c.l.b16 %v466
        %v527 = vunpack.c.l.b16 %v467
        %v528 = vunpack.c.l.b16 %v468
        %v529 = vpack.c.b16 %v514, %v513
        %v530 = vpack.c.b16 %v516, %v515
        %v531 = vpack.c.b16 %v518, %v517
        %v532 = vpack.c.b16 %v520, %v519
        %v533 = vpack.c.b16 %v522, %v521
        %v534 = vpack.c.b16 %v524, %v523
        %v535 = vpack.c.b16 %v526, %v525
        %v536 = vpack.c.b16 %v528, %v527
        %545 = vmatprep.subr.bf16.mxu0 0
        %546 = vmatpush1.bf16.msra.mxu0 %v529
        %547 = vmatprep.subr.bf16.mxu0 0
        %548 = vmatpush1.bf16.msra.mxu0 %v530
        %549 = vmatprep.subr.bf16.mxu0 0
        %550 = vmatpush1.bf16.msra.mxu0 %v531
        %551 = vmatprep.subr.bf16.mxu0 0
        %552 = vmatpush1.bf16.msra.mxu0 %v532
        %553 = vmatprep.subr.bf16.mxu0 0
        %554 = vmatpush1.bf16.msra.mxu0 %v533
        %555 = vmatprep.subr.bf16.mxu0 0
        %556 = vmatpush1.bf16.msra.mxu0 %v534
        %557 = vmatprep.subr.bf16.mxu0 0
        %558 = vmatpush1.bf16.msra.mxu0 %v535
        %559 = vmatprep.subr.bf16.mxu0 0
        %560 = vmatpush1.bf16.msra.mxu0 %v536
        %561 = vmatprep.subr.bf16.mxu0 0
        %562 = vmatpush1.bf16.msra.mxu0 0
        %563 = vmatprep.subr.bf16.mxu0 0
        %564 = vmatpush1.bf16.msra.mxu0 0
        %565 = vmatprep.subr.bf16.mxu0 0
        %566 = vmatpush1.bf16.msra.mxu0 0
        %567 = vmatprep.subr.bf16.mxu0 0
        %568 = vmatpush1.bf16.msra.mxu0 0
        %569 = vmatprep.subr.bf16.mxu0 0
        %570 = vmatpush1.bf16.msra.mxu0 0
        %571 = vmatprep.subr.bf16.mxu0 0
        %572 = vmatpush1.bf16.msra.mxu0 0
        %573 = vmatprep.subr.bf16.mxu0 0
        %574 = vmatpush1.bf16.msra.mxu0 0
        %575 = vmatprep.subr.bf16.mxu0 0
        %576 = vmatpush1.bf16.msra.mxu0 0
        %577 = vmatprep.mubr.bf16.mxu0 0
        %578 = vmatmul.mubr.bf16.gmra.mrb[0].mxu0 %v487
        %v579 = vpop.f32.mrb[0].mxu0
        %v580 = vadd.f32 0.0, %v579
        %v581 = vpop.f32.mrb[0].mxu0
        %v582 = vpop.f32.mrb[0].mxu0
        %v583 = vadd.f32 0.0, %v582
        %v584 = vpop.f32.mrb[0].mxu0
        %585 = vmatprep.mubr.bf16.mxu0 0
        %586 = vmatmul.mubr.bf16.gmra.mrb[0].mxu0 %v488
        %v587 = vpop.f32.mrb[0].mxu0
        %v588 = vadd.f32 0.0, %v587
        %v589 = vpop.f32.mrb[0].mxu0
        %v590 = vpop.f32.mrb[0].mxu0
        %v591 = vadd.f32 0.0, %v590
        %v592 = vpop.f32.mrb[0].mxu0
        %593 = vmatprep.mubr.bf16.mxu0 0
        %594 = vmatmul.mubr.bf16.gmra.mrb[0].mxu0 %v489
        %v595 = vpop.f32.mrb[0].mxu0
        %v596 = vadd.f32 0.0, %v595
        %v597 = vpop.f32.mrb[0].mxu0
        %v598 = vpop.f32.mrb[0].mxu0
        %v599 = vadd.f32 0.0, %v598
        %v600 = vpop.f32.mrb[0].mxu0
        %601 = vmatprep.mubr.bf16.mxu0 0
        %602 = vmatmul.mubr.bf16.gmra.mrb[0].mxu0 %v490
        %v603 = vpop.f32.mrb[0].mxu0
        %v604 = vadd.f32 0.0, %v603
        %v605 = vpop.f32.mrb[0].mxu0
        %v606 = vpop.f32.mrb[0].mxu0
        %v607 = vadd.f32 0.0, %v606
        %v608 = vpop.f32.mrb[0].mxu0
        %609 = vmatprep.mubr.bf16.mxu0 0
        %610 = vmatmul.mubr.bf16.gmra.mrb[0].mxu0 %v491
        %v611 = vpop.f32.mrb[0].mxu0
        %v612 = vadd.f32 0.0, %v611
        %v613 = vpop.f32.mrb[0].mxu0
        %v614 = vpop.f32.mrb[0].mxu0
        %v615 = vpop.f32.mrb[0].mxu0
        %616 = vdwg.mxu0
        %v617 = vld [vmem:[%s185 + $0x84] sm:$0xf]
        %v618 = vld [vmem:[%s185 + $0x88] sm:$0xf]
        %v619 = vld [vmem:[%s185 + $0x8c] sm:$0xf]
        %v620 = vld [vmem:[%s185 + $0x90] sm:$0xf]
        %v621 = vld [vmem:[%s185 + $0x94] sm:$0xf]
        %v622 = vld [vmem:[%s185 + $0x98] sm:$0xf]
        %v623 = vld [vmem:[%s185 + $0x9c] sm:$0xf]
        %v624 = vld [vmem:[%s185 + $0xa0] sm:$0xf]
        %v625 = vld [vmem:[%s185 + $0xa4] sm:$0xf]
        %s626 = scalar_lea.vmem [#allocation5], 256
        %v627 = vld [vmem:[%s626] sm:$0xf]
        %v628 = vld [vmem:[%s626 + $0x4] sm:$0xf]
        %v629 = vld [vmem:[%s626 + $0x8] sm:$0xf]
        %v630 = vld [vmem:[%s626 + $0xc] sm:$0xf]
        %v631 = vld [vmem:[%s626 + $0x10] sm:$0xf]
        %v632 = vld [vmem:[%s626 + $0x14] sm:$0xf]
        %v633 = vld [vmem:[%s626 + $0x18] sm:$0xf]
        %v634 = vld [vmem:[%s626 + $0x1c] sm:$0xf]
        %v635 = vld [vmem:[%s626 + $0x20] sm:$0xf]
        %v636 = vld [vmem:[%s626 + $0x24] sm:$0xf]
        %v637 = vld [vmem:[%s626 + $0x28] sm:$0xf]
        %v638 = vld [vmem:[%s626 + $0x2c] sm:$0xf]
        %v639 = vld [vmem:[%s626 + $0x30] sm:$0xf]
        %v640 = vld [vmem:[%s626 + $0x34] sm:$0xf]
        %v641 = vld [vmem:[%s626 + $0x38] sm:$0xf]
        %v642 = vld [vmem:[%s626 + $0x3c] sm:$0xf]
        %v643 = vld [vmem:[%s185 + $0x58] sm:$0xf]
        %v644 = vld [vmem:[%s185 + $0x5c] sm:$0xf]
        %v645 = vld [vmem:[%s185 + $0x60] sm:$0xf]
        %v646 = vld [vmem:[%s185 + $0x64] sm:$0xf]
        %v647 = vld [vmem:[%s185 + $0x68] sm:$0xf]
        %v648 = vld [vmem:[%s185 + $0x6c] sm:$0xf]
        %v649 = vld [vmem:[%s185 + $0x70] sm:$0xf]
        %v650 = vld [vmem:[%s185 + $0x74] sm:$0xf]
        %v651 = vld [vmem:[%s185 + $0x78] sm:$0xf]
        %v652 = vld [vmem:[%s185 + $0x7c] sm:$0x1]
        %s653 = scalar_lea.vmem [#allocation5], 320
        %v654 = vld [vmem:[%s653] sm:$0xf]
        %v655 = vld [vmem:[%s653 + $0x4] sm:$0xf]
        %v656 = vld [vmem:[%s653 + $0x8] sm:$0xf]
        %v657 = vld [vmem:[%s653 + $0xc] sm:$0xf]
        %v658 = vld [vmem:[%s653 + $0x10] sm:$0xf]
        %v659 = vld [vmem:[%s653 + $0x14] sm:$0xf]
        %v660 = vld [vmem:[%s653 + $0x18] sm:$0xf]
        %v661 = vld [vmem:[%s653 + $0x1c] sm:$0xf]
        %v662 = vld [vmem:[%s653 + $0x20] sm:$0xf]
        %v663 = vld [vmem:[%s653 + $0x24] sm:$0xf]
        %v664 = vld [vmem:[%s653 + $0x28] sm:$0xf]
        %v665 = vld [vmem:[%s653 + $0x2c] sm:$0xf]
        %v666 = vld [vmem:[%s653 + $0x30] sm:$0xf]
        %v667 = vld [vmem:[%s653 + $0x34] sm:$0xf]
        %v668 = vld [vmem:[%s653 + $0x38] sm:$0xf]
        %v669 = vld [vmem:[%s653 + $0x3c] sm:$0xf]
        %v680 = vunpack.c.l.b16 %v643
        %v681 = vunpack.c.l.b16 %v644
        %v682 = vunpack.c.l.b16 %v645
        %v683 = vunpack.c.l.b16 %v646
        %v684 = vunpack.c.l.b16 %v647
        %v685 = vunpack.c.l.b16 %v648
        %v686 = vunpack.c.l.b16 %v649
        %v687 = vunpack.c.l.b16 %v650
        %v688 = vunpack.c.l.b16 %v651
        %v689 = vunpack.c.l.b16 %v652
        %v690 = vpack.c.b16 %v681, %v680
        %v691 = vpack.c.b16 %v683, %v682
        %v692 = vpack.c.b16 %v685, %v684
        %v693 = vpack.c.b16 %v687, %v686
        %v694 = vpack.c.b16 %v689, %v688
        %vm695 = vsmask.f32 7424
        %v697 = vshrl.u32 %v690, 16
        %v699 = vshll.u32 %v690, 16
        %v701 = vrot.slane %v699, 1
        %v702 = vor.u32 %v697, %v701
        %v704 = vshll.u32 %v691, 16
        %v706 = vrot.slane %v704, 1
        %v707 = vsel %vm695, %v702, %v706
        %v708 = vshrl.u32 %v691, 16
        %v710 = vor.u32 %v708, %v706
        %v712 = vshll.u32 %v692, 16
        %v714 = vrot.slane %v712, 1
        %v715 = vsel %vm695, %v710, %v714
        %v716 = vshrl.u32 %v692, 16
        %v718 = vor.u32 %v716, %v714
        %v720 = vshll.u32 %v693, 16
        %v722 = vrot.slane %v720, 1
        %v723 = vsel %vm695, %v718, %v722
        %v724 = vshrl.u32 %v693, 16
        %v726 = vor.u32 %v724, %v722
        %v728 = vshll.u32 %v694, 16
        %v730 = vrot.slane %v728, 1
        %v731 = vsel %vm695, %v726, %v730
        %v732 = vshrl.u32 %v694, 16
        %v734 = vor.u32 %v732, %v730
        %v756 = vunpack.c.l.b16 %v654
        %v757 = vunpack.c.l.b16 %v655
        %v758 = vunpack.c.l.b16 %v656
        %v759 = vunpack.c.l.b16 %v657
        %v760 = vunpack.c.l.b16 %v658
        %v761 = vunpack.c.l.b16 %v659
        %v762 = vunpack.c.l.b16 %v660
        %v763 = vunpack.c.l.b16 %v661
        %v764 = vunpack.c.l.b16 %v662
        %v765 = vunpack.c.l.b16 %v663
        %v766 = vunpack.c.l.b16 %v664
        %v767 = vunpack.c.l.b16 %v665
        %v768 = vunpack.c.l.b16 %v666
        %v769 = vunpack.c.l.b16 %v667
        %v770 = vunpack.c.l.b16 %v668
        %v771 = vunpack.c.l.b16 %v669
        %v772 = vpack.c.b16 %v757, %v756
        %v773 = vpack.c.b16 %v759, %v758
        %v774 = vpack.c.b16 %v761, %v760
        %v775 = vpack.c.b16 %v763, %v762
        %v776 = vpack.c.b16 %v765, %v764
        %v777 = vpack.c.b16 %v767, %v766
        %v778 = vpack.c.b16 %v769, %v768
        %v779 = vpack.c.b16 %v771, %v770
        %788 = vmatprep.subr.bf16.mxu0 0
        %789 = vmatpush1.bf16.msra.mxu0 %v772
        %790 = vmatprep.subr.bf16.mxu0 0
        %791 = vmatpush1.bf16.msra.mxu0 %v773
        %792 = vmatprep.subr.bf16.mxu0 0
        %793 = vmatpush1.bf16.msra.mxu0 %v774
        %794 = vmatprep.subr.bf16.mxu0 0
        %795 = vmatpush1.bf16.msra.mxu0 %v775
        %796 = vmatprep.subr.bf16.mxu0 0
        %797 = vmatpush1.bf16.msra.mxu0 %v776
        %798 = vmatprep.subr.bf16.mxu0 0
        %799 = vmatpush1.bf16.msra.mxu0 %v777
        %800 = vmatprep.subr.bf16.mxu0 0
        %801 = vmatpush1.bf16.msra.mxu0 %v778
        %802 = vmatprep.subr.bf16.mxu0 0
        %803 = vmatpush1.bf16.msra.mxu0 %v779
        %804 = vmatprep.subr.bf16.mxu0 0
        %805 = vmatpush1.bf16.msra.mxu0 0
        %806 = vmatprep.subr.bf16.mxu0 0
        %807 = vmatpush1.bf16.msra.mxu0 0
        %808 = vmatprep.subr.bf16.mxu0 0
        %809 = vmatpush1.bf16.msra.mxu0 0
        %810 = vmatprep.subr.bf16.mxu0 0
        %811 = vmatpush1.bf16.msra.mxu0 0
        %812 = vmatprep.subr.bf16.mxu0 0
        %813 = vmatpush1.bf16.msra.mxu0 0
        %814 = vmatprep.subr.bf16.mxu0 0
        %815 = vmatpush1.bf16.msra.mxu0 0
        %816 = vmatprep.subr.bf16.mxu0 0
        %817 = vmatpush1.bf16.msra.mxu0 0
        %818 = vmatprep.subr.bf16.mxu0 0
        %819 = vmatpush1.bf16.msra.mxu0 0
        %820 = vmatprep.mubr.bf16.mxu0 0
        %821 = vmatmul.mubr.bf16.gmra.mrb[0].mxu0 %v707
        %v822 = vpop.f32.mrb[0].mxu0
        %v823 = vadd.f32 0.0, %v822
        %v824 = vpop.f32.mrb[0].mxu0
        %v825 = vpop.f32.mrb[0].mxu0
        %v826 = vadd.f32 0.0, %v825
        %v827 = vpop.f32.mrb[0].mxu0
        %828 = vmatprep.mubr.bf16.mxu0 0
        %829 = vmatmul.mubr.bf16.gmra.mrb[0].mxu0 %v715
        %v830 = vpop.f32.mrb[0].mxu0
        %v831 = vadd.f32 0.0, %v830
        %v832 = vpop.f32.mrb[0].mxu0
        %v833 = vpop.f32.mrb[0].mxu0
        %v834 = vadd.f32 0.0, %v833
        %v835 = vpop.f32.mrb[0].mxu0
        %836 = vmatprep.mubr.bf16.mxu0 0
        %837 = vmatmul.mubr.bf16.gmra.mrb[0].mxu0 %v723
        %v838 = vpop.f32.mrb[0].mxu0
        %v839 = vadd.f32 0.0, %v838
        %v840 = vpop.f32.mrb[0].mxu0
        %v841 = vpop.f32.mrb[0].mxu0
        %v842 = vadd.f32 0.0, %v841
        %v843 = vpop.f32.mrb[0].mxu0
        %844 = vmatprep.mubr.bf16.mxu0 0
        %845 = vmatmul.mubr.bf16.gmra.mrb[0].mxu0 %v731
        %v846 = vpop.f32.mrb[0].mxu0
        %v847 = vadd.f32 0.0, %v846
        %v848 = vpop.f32.mrb[0].mxu0
        %v849 = vpop.f32.mrb[0].mxu0
        %v850 = vadd.f32 0.0, %v849
        %v851 = vpop.f32.mrb[0].mxu0
        %852 = vmatprep.mubr.bf16.mxu0 0
        %853 = vmatmul.mubr.bf16.gmra.mrb[0].mxu0 %v734
        %v854 = vpop.f32.mrb[0].mxu0
        %v855 = vadd.f32 0.0, %v854
        %v856 = vpop.f32.mrb[0].mxu0
        %v857 = vpop.f32.mrb[0].mxu0
        %v858 = vpop.f32.mrb[0].mxu0
        %859 = vdwg.mxu0
        %v860 = vld [vmem:[%s185 + $0x4] sm:$0xf]
        %v861 = vld [vmem:[%s185 + $0x8] sm:$0xf]
        %v862 = vld [vmem:[%s185 + $0xc] sm:$0xf]
        %v863 = vld [vmem:[%s185 + $0x10] sm:$0xf]
        %v864 = vld [vmem:[%s185 + $0x14] sm:$0xf]
        %v865 = vld [vmem:[%s185 + $0x18] sm:$0xf]
        %v866 = vld [vmem:[%s185 + $0x1c] sm:$0xf]
        %v867 = vld [vmem:[%s185 + $0x20] sm:$0xf]
        %v868 = vld [vmem:[%s185 + $0x24] sm:$0xf]
        %v869 = vld [vmem:[%s185 + $0x28] sm:$0x1]
        %s870 = scalar_lea.vmem [#allocation5], 384
        %v871 = vld [vmem:[%s870] sm:$0xf]
        %v872 = vld [vmem:[%s870 + $0x4] sm:$0xf]
        %v873 = vld [vmem:[%s870 + $0x8] sm:$0xf]
        %v874 = vld [vmem:[%s870 + $0xc] sm:$0xf]
        %v875 = vld [vmem:[%s870 + $0x10] sm:$0xf]
        %v876 = vld [vmem:[%s870 + $0x14] sm:$0xf]
        %v877 = vld [vmem:[%s870 + $0x18] sm:$0xf]
        %v878 = vld [vmem:[%s870 + $0x1c] sm:$0xf]
        %v879 = vld [vmem:[%s870 + $0x20] sm:$0xf]
        %v880 = vld [vmem:[%s870 + $0x24] sm:$0xf]
        %v881 = vld [vmem:[%s870 + $0x28] sm:$0xf]
        %v882 = vld [vmem:[%s870 + $0x2c] sm:$0xf]
        %v883 = vld [vmem:[%s870 + $0x30] sm:$0xf]
        %v884 = vld [vmem:[%s870 + $0x34] sm:$0xf]
        %v885 = vld [vmem:[%s870 + $0x38] sm:$0xf]
        %v886 = vld [vmem:[%s870 + $0x3c] sm:$0xf]
        %v887 = vld [vmem:[%s185 + $0x30] sm:$0xf]
        %v888 = vld [vmem:[%s185 + $0x34] sm:$0xf]
        %v889 = vld [vmem:[%s185 + $0x38] sm:$0xf]
        %v890 = vld [vmem:[%s185 + $0x3c] sm:$0xf]
        %v891 = vld [vmem:[%s185 + $0x40] sm:$0xf]
        %v892 = vld [vmem:[%s185 + $0x44] sm:$0xf]
        %v893 = vld [vmem:[%s185 + $0x48] sm:$0xf]
        %v894 = vld [vmem:[%s185 + $0x4c] sm:$0xf]
        %v895 = vld [vmem:[%s185 + $0x50] sm:$0xf]
        %v896 = vld [vmem:[%s185 + $0x54] sm:$0x1]
        %s897 = scalar_lea.vmem [#allocation5], 448
        %v898 = vld [vmem:[%s897] sm:$0xf]
        %v899 = vld [vmem:[%s897 + $0x4] sm:$0xf]
        %v900 = vld [vmem:[%s897 + $0x8] sm:$0xf]
        %v901 = vld [vmem:[%s897 + $0xc] sm:$0xf]
        %v902 = vld [vmem:[%s897 + $0x10] sm:$0xf]
        %v903 = vld [vmem:[%s897 + $0x14] sm:$0xf]
        %v904 = vld [vmem:[%s897 + $0x18] sm:$0xf]
        %v905 = vld [vmem:[%s897 + $0x1c] sm:$0xf]
        %v906 = vld [vmem:[%s897 + $0x20] sm:$0xf]
        %v907 = vld [vmem:[%s897 + $0x24] sm:$0xf]
        %v908 = vld [vmem:[%s897 + $0x28] sm:$0xf]
        %v909 = vld [vmem:[%s897 + $0x2c] sm:$0xf]
        %v910 = vld [vmem:[%s897 + $0x30] sm:$0xf]
        %v911 = vld [vmem:[%s897 + $0x34] sm:$0xf]
        %v912 = vld [vmem:[%s897 + $0x38] sm:$0xf]
        %v913 = vld [vmem:[%s897 + $0x3c] sm:$0xf]
        %v924 = vunpack.c.l.b16 %v887
        %v925 = vunpack.c.l.b16 %v888
        %v926 = vunpack.c.l.b16 %v889
        %v927 = vunpack.c.l.b16 %v890
        %v928 = vunpack.c.l.b16 %v891
        %v929 = vunpack.c.l.b16 %v892
        %v930 = vunpack.c.l.b16 %v893
        %v931 = vunpack.c.l.b16 %v894
        %v932 = vunpack.c.l.b16 %v895
        %v933 = vunpack.c.l.b16 %v896
        %v934 = vpack.c.b16 %v925, %v924
        %v935 = vpack.c.b16 %v927, %v926
        %v936 = vpack.c.b16 %v929, %v928
        %v937 = vpack.c.b16 %v931, %v930
        %v938 = vpack.c.b16 %v933, %v932
        %v940 = vshrl.u32 %v934, 16
        %v942 = vshll.u32 %v934, 16
        %v944 = vrot.slane %v942, 1
        %v945 = vor.u32 %v940, %v944
        %v947 = vshll.u32 %v935, 16
        %v949 = vrot.slane %v947, 1
        %v950 = vsel %vm695, %v945, %v949
        %v951 = vshrl.u32 %v935, 16
        %v953 = vor.u32 %v951, %v949
        %v955 = vshll.u32 %v936, 16
        %v957 = vrot.slane %v955, 1
        %v958 = vsel %vm695, %v953, %v957
        %v959 = vshrl.u32 %v936, 16
        %v961 = vor.u32 %v959, %v957
        %v963 = vshll.u32 %v937, 16
        %v965 = vrot.slane %v963, 1
        %v966 = vsel %vm695, %v961, %v965
        %v967 = vshrl.u32 %v937, 16
        %v969 = vor.u32 %v967, %v965
        %v971 = vshll.u32 %v938, 16
        %v973 = vrot.slane %v971, 1
        %v974 = vsel %vm695, %v969, %v973
        %v975 = vshrl.u32 %v938, 16
        %v977 = vor.u32 %v975, %v973
        %v999 = vunpack.c.l.b16 %v898
        %v1000 = vunpack.c.l.b16 %v899
        %v1001 = vunpack.c.l.b16 %v900
        %v1002 = vunpack.c.l.b16 %v901
        %v1003 = vunpack.c.l.b16 %v902
        %v1004 = vunpack.c.l.b16 %v903
        %v1005 = vunpack.c.l.b16 %v904
        %v1006 = vunpack.c.l.b16 %v905
        %v1007 = vunpack.c.l.b16 %v906
        %v1008 = vunpack.c.l.b16 %v907
        %v1009 = vunpack.c.l.b16 %v908
        %v1010 = vunpack.c.l.b16 %v909
        %v1011 = vunpack.c.l.b16 %v910
        %v1012 = vunpack.c.l.b16 %v911
        %v1013 = vunpack.c.l.b16 %v912
        %v1014 = vunpack.c.l.b16 %v913
        %v1015 = vpack.c.b16 %v1000, %v999
        %v1016 = vpack.c.b16 %v1002, %v1001
        %v1017 = vpack.c.b16 %v1004, %v1003
        %v1018 = vpack.c.b16 %v1006, %v1005
        %v1019 = vpack.c.b16 %v1008, %v1007
        %v1020 = vpack.c.b16 %v1010, %v1009
        %v1021 = vpack.c.b16 %v1012, %v1011
        %v1022 = vpack.c.b16 %v1014, %v1013
        %1031 = vmatprep.subr.bf16.mxu0 0
        %1032 = vmatpush1.bf16.msra.mxu0 %v1015
        %1033 = vmatprep.subr.bf16.mxu0 0
        %1034 = vmatpush1.bf16.msra.mxu0 %v1016
        %1035 = vmatprep.subr.bf16.mxu0 0
        %1036 = vmatpush1.bf16.msra.mxu0 %v1017
        %1037 = vmatprep.subr.bf16.mxu0 0
        %1038 = vmatpush1.bf16.msra.mxu0 %v1018
        %1039 = vmatprep.subr.bf16.mxu0 0
        %1040 = vmatpush1.bf16.msra.mxu0 %v1019
        %1041 = vmatprep.subr.bf16.mxu0 0
        %1042 = vmatpush1.bf16.msra.mxu0 %v1020
        %1043 = vmatprep.subr.bf16.mxu0 0
        %1044 = vmatpush1.bf16.msra.mxu0 %v1021
        %1045 = vmatprep.subr.bf16.mxu0 0
        %1046 = vmatpush1.bf16.msra.mxu0 %v1022
        %1047 = vmatprep.subr.bf16.mxu0 0
        %1048 = vmatpush1.bf16.msra.mxu0 0
        %1049 = vmatprep.subr.bf16.mxu0 0
        %1050 = vmatpush1.bf16.msra.mxu0 0
        %1051 = vmatprep.subr.bf16.mxu0 0
        %1052 = vmatpush1.bf16.msra.mxu0 0
        %1053 = vmatprep.subr.bf16.mxu0 0
        %1054 = vmatpush1.bf16.msra.mxu0 0
        %1055 = vmatprep.subr.bf16.mxu0 0
        %1056 = vmatpush1.bf16.msra.mxu0 0
        %1057 = vmatprep.subr.bf16.mxu0 0
        %1058 = vmatpush1.bf16.msra.mxu0 0
        %1059 = vmatprep.subr.bf16.mxu0 0
        %1060 = vmatpush1.bf16.msra.mxu0 0
        %1061 = vmatprep.subr.bf16.mxu0 0
        %1062 = vmatpush1.bf16.msra.mxu0 0
        %1063 = vmatprep.mubr.bf16.mxu0 0
        %1064 = vmatmul.mubr.bf16.gmra.mrb[0].mxu0 %v950
        %v1065 = vpop.f32.mrb[0].mxu0
        %v1066 = vadd.f32 0.0, %v1065
        %v1067 = vpop.f32.mrb[0].mxu0
        %v1068 = vpop.f32.mrb[0].mxu0
        %v1069 = vadd.f32 0.0, %v1068
        %v1070 = vpop.f32.mrb[0].mxu0
        %1071 = vmatprep.mubr.bf16.mxu0 0
        %1072 = vmatmul.mubr.bf16.gmra.mrb[0].mxu0 %v958
        %v1073 = vpop.f32.mrb[0].mxu0
        %v1074 = vadd.f32 0.0, %v1073
        %v1075 = vpop.f32.mrb[0].mxu0
        %v1076 = vpop.f32.mrb[0].mxu0
        %v1077 = vadd.f32 0.0, %v1076
        %v1078 = vpop.f32.mrb[0].mxu0
        %1079 = vmatprep.mubr.bf16.mxu0 0
        %1080 = vmatmul.mubr.bf16.gmra.mrb[0].mxu0 %v966
        %v1081 = vpop.f32.mrb[0].mxu0
        %v1082 = vadd.f32 0.0, %v1081
        %v1083 = vpop.f32.mrb[0].mxu0
        %v1084 = vpop.f32.mrb[0].mxu0
        %v1085 = vadd.f32 0.0, %v1084
        %v1086 = vpop.f32.mrb[0].mxu0
        %1087 = vmatprep.mubr.bf16.mxu0 0
        %1088 = vmatmul.mubr.bf16.gmra.mrb[0].mxu0 %v974
        %v1089 = vpop.f32.mrb[0].mxu0
        %v1090 = vadd.f32 0.0, %v1089
        %v1091 = vpop.f32.mrb[0].mxu0
        %v1092 = vpop.f32.mrb[0].mxu0
        %v1093 = vadd.f32 0.0, %v1092
        %v1094 = vpop.f32.mrb[0].mxu0
        %1095 = vmatprep.mubr.bf16.mxu0 0
        %1096 = vmatmul.mubr.bf16.gmra.mrb[0].mxu0 %v977
        %v1097 = vpop.f32.mrb[0].mxu0
        %v1098 = vadd.f32 0.0, %v1097
        %v1099 = vpop.f32.mrb[0].mxu0
        %v1100 = vpop.f32.mrb[0].mxu0
        %v1101 = vpop.f32.mrb[0].mxu0
        %1102 = vdwg.mxu0
        %v1103 = vld [vmem:[%s185 + $0x4] sm:$0xe]
        %s1104 = scalar_lea.vmem [#allocation5], 512
        %v1105 = vld [vmem:[%s1104] sm:$0xf]
        %v1106 = vld [vmem:[%s1104 + $0x4] sm:$0xf]
        %v1107 = vld [vmem:[%s1104 + $0x8] sm:$0xf]
        %v1108 = vld [vmem:[%s1104 + $0xc] sm:$0xf]
        %v1109 = vld [vmem:[%s1104 + $0x10] sm:$0xf]
        %v1110 = vld [vmem:[%s1104 + $0x14] sm:$0xf]
        %v1111 = vld [vmem:[%s1104 + $0x18] sm:$0xf]
        %v1112 = vld [vmem:[%s1104 + $0x1c] sm:$0xf]
        %v1113 = vld [vmem:[%s1104 + $0x20] sm:$0xf]
        %v1114 = vld [vmem:[%s1104 + $0x24] sm:$0xf]
        %v1115 = vld [vmem:[%s1104 + $0x28] sm:$0xf]
        %v1116 = vld [vmem:[%s1104 + $0x2c] sm:$0xf]
        %v1117 = vld [vmem:[%s1104 + $0x30] sm:$0xf]
        %v1118 = vld [vmem:[%s1104 + $0x34] sm:$0xf]
        %v1119 = vld [vmem:[%s1104 + $0x38] sm:$0xf]
        %v1120 = vld [vmem:[%s1104 + $0x3c] sm:$0xf]
        %v1121 = vld [vmem:[#allocation7] sm:$0x1]
        %v1123 = vlaneseq
        %v1124 = vshrl.u32 %v1123, 7
        %v1125 = vsub.s32 0, %v1124
        %v1126 = vrot.slane %v1121, %v1125
        %v1137 = vunpack.c.l.b16 %v217
        %v1138 = vunpack.c.l.b16 %v218
        %v1139 = vunpack.c.l.b16 %v219
        %v1140 = vunpack.c.l.b16 %v220
        %v1141 = vunpack.c.l.b16 %v221
        %v1142 = vunpack.c.l.b16 %v222
        %v1143 = vunpack.c.l.b16 %v223
        %v1144 = vunpack.c.l.b16 %v224
        %v1145 = vunpack.c.l.b16 %v225
        %v1146 = vpack.c.b16 %v1138, %v1137
        %v1147 = vpack.c.b16 %v1140, %v1139
        %v1148 = vpack.c.b16 %v1142, %v1141
        %v1149 = vpack.c.b16 %v1144, %v1143
        %v1150 = vpack.c.b16 %v1145, %v1145
        %v1172 = vunpack.c.l.b16 %v226
        %v1173 = vunpack.c.l.b16 %v227
        %v1174 = vunpack.c.l.b16 %v228
        %v1175 = vunpack.c.l.b16 %v229
        %v1176 = vunpack.c.l.b16 %v230
        %v1177 = vunpack.c.l.b16 %v231
        %v1178 = vunpack.c.l.b16 %v232
        %v1179 = vunpack.c.l.b16 %v233
        %v1180 = vunpack.c.l.b16 %v234
        %v1181 = vunpack.c.l.b16 %v235
        %v1182 = vunpack.c.l.b16 %v236
        %v1183 = vunpack.c.l.b16 %v237
        %v1184 = vunpack.c.l.b16 %v238
        %v1185 = vunpack.c.l.b16 %v239
        %v1186 = vunpack.c.l.b16 %v240
        %v1187 = vunpack.c.l.b16 %v241
        %v1188 = vpack.c.b16 %v1173, %v1172
        %v1189 = vpack.c.b16 %v1175, %v1174
        %v1190 = vpack.c.b16 %v1177, %v1176
        %v1191 = vpack.c.b16 %v1179, %v1178
        %v1192 = vpack.c.b16 %v1181, %v1180
        %v1193 = vpack.c.b16 %v1183, %v1182
        %v1194 = vpack.c.b16 %v1185, %v1184
        %v1195 = vpack.c.b16 %v1187, %v1186
        %1204 = vmatprep.subr.bf16.mxu0 0
        %1205 = vmatpush1.bf16.msra.mxu0 %v1188
        %1206 = vmatprep.subr.bf16.mxu0 0
        %1207 = vmatpush1.bf16.msra.mxu0 %v1189
        %1208 = vmatprep.subr.bf16.mxu0 0
        %1209 = vmatpush1.bf16.msra.mxu0 %v1190
        %1210 = vmatprep.subr.bf16.mxu0 0
        %1211 = vmatpush1.bf16.msra.mxu0 %v1191
        %1212 = vmatprep.subr.bf16.mxu0 0
        %1213 = vmatpush1.bf16.msra.mxu0 %v1192
        %1214 = vmatprep.subr.bf16.mxu0 0
        %1215 = vmatpush1.bf16.msra.mxu0 %v1193
        %1216 = vmatprep.subr.bf16.mxu0 0
        %1217 = vmatpush1.bf16.msra.mxu0 %v1194
        %1218 = vmatprep.subr.bf16.mxu0 0
        %1219 = vmatpush1.bf16.msra.mxu0 %v1195
        %1220 = vmatprep.subr.bf16.mxu0 0
        %1221 = vmatpush1.bf16.msra.mxu0 0
        %1222 = vmatprep.subr.bf16.mxu0 0
        %1223 = vmatpush1.bf16.msra.mxu0 0
        %1224 = vmatprep.subr.bf16.mxu0 0
        %1225 = vmatpush1.bf16.msra.mxu0 0
        %1226 = vmatprep.subr.bf16.mxu0 0
        %1227 = vmatpush1.bf16.msra.mxu0 0
        %1228 = vmatprep.subr.bf16.mxu0 0
        %1229 = vmatpush1.bf16.msra.mxu0 0
        %1230 = vmatprep.subr.bf16.mxu0 0
        %1231 = vmatpush1.bf16.msra.mxu0 0
        %1232 = vmatprep.subr.bf16.mxu0 0
        %1233 = vmatpush1.bf16.msra.mxu0 0
        %1234 = vmatprep.subr.bf16.mxu0 0
        %1235 = vmatpush1.bf16.msra.mxu0 0
        %1236 = vmatprep.mubr.bf16.mxu0 0
        %1237 = vmatmul.mubr.bf16.gmra.mrb[0].mxu0 %v1146
        %v1238 = vpop.f32.mrb[0].mxu0
        %v1239 = vadd.f32 %v379, %v1238
        %v1240 = vpop.f32.mrb[0].mxu0
        %v1241 = vpop.f32.mrb[0].mxu0
        %v1242 = vadd.f32 %v382, %v1241
        %v1243 = vpop.f32.mrb[0].mxu0
        %1244 = vmatprep.mubr.bf16.mxu0 0
        %1245 = vmatmul.mubr.bf16.gmra.mrb[0].mxu0 %v1147
        %v1246 = vpop.f32.mrb[0].mxu0
        %v1247 = vadd.f32 %v387, %v1246
        %v1248 = vpop.f32.mrb[0].mxu0
        %v1249 = vpop.f32.mrb[0].mxu0
        %v1250 = vadd.f32 %v390, %v1249
        %v1251 = vpop.f32.mrb[0].mxu0
        %1252 = vmatprep.mubr.bf16.mxu0 0
        %1253 = vmatmul.mubr.bf16.gmra.mrb[0].mxu0 %v1148
        %v1254 = vpop.f32.mrb[0].mxu0
        %v1255 = vadd.f32 %v395, %v1254
        %v1256 = vpop.f32.mrb[0].mxu0
        %v1257 = vpop.f32.mrb[0].mxu0
        %v1258 = vadd.f32 %v398, %v1257
        %v1259 = vpop.f32.mrb[0].mxu0
        %1260 = vmatprep.mubr.bf16.mxu0 0
        %1261 = vmatmul.mubr.bf16.gmra.mrb[0].mxu0 %v1149
        %v1262 = vpop.f32.mrb[0].mxu0
        %v1263 = vadd.f32 %v403, %v1262
        %v1264 = vpop.f32.mrb[0].mxu0
        %v1265 = vpop.f32.mrb[0].mxu0
        %v1266 = vadd.f32 %v406, %v1265
        %v1267 = vpop.f32.mrb[0].mxu0
        %1268 = vmatprep.mubr.bf16.mxu0 0
        %1269 = vmatmul.mubr.bf16.gmra.mrb[0].mxu0 %v1150
        %v1270 = vpop.f32.mrb[0].mxu0
        %v1271 = vadd.f32 %v411, %v1270
        %v1272 = vpop.f32.mrb[0].mxu0
        %v1273 = vpop.f32.mrb[0].mxu0
        %v1274 = vpop.f32.mrb[0].mxu0
        %1275 = vdwg.mxu0
        %v1286 = vunpack.c.l.b16 %v416
        %v1287 = vunpack.c.l.b16 %v417
        %v1288 = vunpack.c.l.b16 %v418
        %v1289 = vunpack.c.l.b16 %v419
        %v1290 = vunpack.c.l.b16 %v420
        %v1291 = vunpack.c.l.b16 %v421
        %v1292 = vunpack.c.l.b16 %v422
        %v1293 = vunpack.c.l.b16 %v423
        %v1294 = vunpack.c.l.b16 %v424
        %v1295 = vunpack.c.l.b16 %v425
        %v1296 = vpack.c.b16 %v1287, %v1286
        %v1297 = vpack.c.b16 %v1289, %v1288
        %v1298 = vpack.c.b16 %v1291, %v1290
        %v1299 = vpack.c.b16 %v1293, %v1292
        %v1300 = vpack.c.b16 %v1295, %v1294
        %v1302 = vshrl.u32 %v1296, 16
        %v1304 = vshll.u32 %v1296, 16
        %v1306 = vrot.slane %v1304, 1
        %v1307 = vor.u32 %v1302, %v1306
        %v1309 = vshll.u32 %v1297, 16
        %v1311 = vrot.slane %v1309, 1
        %v1312 = vsel %vm695, %v1307, %v1311
        %v1313 = vshrl.u32 %v1297, 16
        %v1315 = vor.u32 %v1313, %v1311
        %v1317 = vshll.u32 %v1298, 16
        %v1319 = vrot.slane %v1317, 1
        %v1320 = vsel %vm695, %v1315, %v1319
        %v1321 = vshrl.u32 %v1298, 16
        %v1323 = vor.u32 %v1321, %v1319
        %v1325 = vshll.u32 %v1299, 16
        %v1327 = vrot.slane %v1325, 1
        %v1328 = vsel %vm695, %v1323, %v1327
        %v1329 = vshrl.u32 %v1299, 16
        %v1331 = vor.u32 %v1329, %v1327
        %v1333 = vshll.u32 %v1300, 16
        %v1335 = vrot.slane %v1333, 1
        %v1336 = vsel %vm695, %v1331, %v1335
        %v1337 = vshrl.u32 %v1300, 16
        %v1339 = vor.u32 %v1337, %v1335
        %v1361 = vunpack.c.l.b16 %v427
        %v1362 = vunpack.c.l.b16 %v428
        %v1363 = vunpack.c.l.b16 %v429
        %v1364 = vunpack.c.l.b16 %v430
        %v1365 = vunpack.c.l.b16 %v431
        %v1366 = vunpack.c.l.b16 %v432
        %v1367 = vunpack.c.l.b16 %v433
        %v1368 = vunpack.c.l.b16 %v434
        %v1369 = vunpack.c.l.b16 %v435
        %v1370 = vunpack.c.l.b16 %v436
        %v1371 = vunpack.c.l.b16 %v437
        %v1372 = vunpack.c.l.b16 %v438
        %v1373 = vunpack.c.l.b16 %v439
        %v1374 = vunpack.c.l.b16 %v440
        %v1375 = vunpack.c.l.b16 %v441
        %v1376 = vunpack.c.l.b16 %v442
        %v1377 = vpack.c.b16 %v1362, %v1361
        %v1378 = vpack.c.b16 %v1364, %v1363
        %v1379 = vpack.c.b16 %v1366, %v1365
        %v1380 = vpack.c.b16 %v1368, %v1367
        %v1381 = vpack.c.b16 %v1370, %v1369
        %v1382 = vpack.c.b16 %v1372, %v1371
        %v1383 = vpack.c.b16 %v1374, %v1373
        %v1384 = vpack.c.b16 %v1376, %v1375
        %1393 = vmatprep.subr.bf16.mxu0 0
        %1394 = vmatpush1.bf16.msra.mxu0 %v1377
        %1395 = vmatprep.subr.bf16.mxu0 0
        %1396 = vmatpush1.bf16.msra.mxu0 %v1378
        %1397 = vmatprep.subr.bf16.mxu0 0
        %1398 = vmatpush1.bf16.msra.mxu0 %v1379
        %1399 = vmatprep.subr.bf16.mxu0 0
        %1400 = vmatpush1.bf16.msra.mxu0 %v1380
        %1401 = vmatprep.subr.bf16.mxu0 0
        %1402 = vmatpush1.bf16.msra.mxu0 %v1381
        %1403 = vmatprep.subr.bf16.mxu0 0
        %1404 = vmatpush1.bf16.msra.mxu0 %v1382
        %1405 = vmatprep.subr.bf16.mxu0 0
        %1406 = vmatpush1.bf16.msra.mxu0 %v1383
        %1407 = vmatprep.subr.bf16.mxu0 0
        %1408 = vmatpush1.bf16.msra.mxu0 %v1384
        %1409 = vmatprep.subr.bf16.mxu0 0
        %1410 = vmatpush1.bf16.msra.mxu0 0
        %1411 = vmatprep.subr.bf16.mxu0 0
        %1412 = vmatpush1.bf16.msra.mxu0 0
        %1413 = vmatprep.subr.bf16.mxu0 0
        %1414 = vmatpush1.bf16.msra.mxu0 0
        %1415 = vmatprep.subr.bf16.mxu0 0
        %1416 = vmatpush1.bf16.msra.mxu0 0
        %1417 = vmatprep.subr.bf16.mxu0 0
        %1418 = vmatpush1.bf16.msra.mxu0 0
        %1419 = vmatprep.subr.bf16.mxu0 0
        %1420 = vmatpush1.bf16.msra.mxu0 0
        %1421 = vmatprep.subr.bf16.mxu0 0
        %1422 = vmatpush1.bf16.msra.mxu0 0
        %1423 = vmatprep.subr.bf16.mxu0 0
        %1424 = vmatpush1.bf16.msra.mxu0 0
        %1425 = vmatprep.mubr.bf16.mxu0 0
        %1426 = vmatmul.mubr.bf16.gmra.mrb[0].mxu0 %v1312
        %v1427 = vpop.f32.mrb[0].mxu0
        %v1428 = vadd.f32 %v580, %v1427
        %v1429 = vpop.f32.mrb[0].mxu0
        %v1430 = vpop.f32.mrb[0].mxu0
        %v1431 = vadd.f32 %v583, %v1430
        %v1432 = vpop.f32.mrb[0].mxu0
        %1433 = vmatprep.mubr.bf16.mxu0 0
        %1434 = vmatmul.mubr.bf16.gmra.mrb[0].mxu0 %v1320
        %v1435 = vpop.f32.mrb[0].mxu0
        %v1436 = vadd.f32 %v588, %v1435
        %v1437 = vpop.f32.mrb[0].mxu0
        %v1438 = vpop.f32.mrb[0].mxu0
        %v1439 = vadd.f32 %v591, %v1438
        %v1440 = vpop.f32.mrb[0].mxu0
        %1441 = vmatprep.mubr.bf16.mxu0 0
        %1442 = vmatmul.mubr.bf16.gmra.mrb[0].mxu0 %v1328
        %v1443 = vpop.f32.mrb[0].mxu0
        %v1444 = vadd.f32 %v596, %v1443
        %v1445 = vpop.f32.mrb[0].mxu0
        %v1446 = vpop.f32.mrb[0].mxu0
        %v1447 = vadd.f32 %v599, %v1446
        %v1448 = vpop.f32.mrb[0].mxu0
        %1449 = vmatprep.mubr.bf16.mxu0 0
        %1450 = vmatmul.mubr.bf16.gmra.mrb[0].mxu0 %v1336
        %v1451 = vpop.f32.mrb[0].mxu0
        %v1452 = vadd.f32 %v604, %v1451
        %v1453 = vpop.f32.mrb[0].mxu0
        %v1454 = vpop.f32.mrb[0].mxu0
        %v1455 = vadd.f32 %v607, %v1454
        %v1456 = vpop.f32.mrb[0].mxu0
        %1457 = vmatprep.mubr.bf16.mxu0 0
        %1458 = vmatmul.mubr.bf16.gmra.mrb[0].mxu0 %v1339
        %v1459 = vpop.f32.mrb[0].mxu0
        %v1460 = vadd.f32 %v612, %v1459
        %v1461 = vpop.f32.mrb[0].mxu0
        %v1462 = vpop.f32.mrb[0].mxu0
        %v1463 = vpop.f32.mrb[0].mxu0
        %1464 = vdwg.mxu0
        %v1474 = vunpack.c.l.b16 %v617
        %v1475 = vunpack.c.l.b16 %v618
        %v1476 = vunpack.c.l.b16 %v619
        %v1477 = vunpack.c.l.b16 %v620
        %v1478 = vunpack.c.l.b16 %v621
        %v1479 = vunpack.c.l.b16 %v622
        %v1480 = vunpack.c.l.b16 %v623
        %v1481 = vunpack.c.l.b16 %v624
        %v1482 = vunpack.c.l.b16 %v625
        %v1483 = vpack.c.b16 %v1475, %v1474
        %v1484 = vpack.c.b16 %v1477, %v1476
        %v1485 = vpack.c.b16 %v1479, %v1478
        %v1486 = vpack.c.b16 %v1481, %v1480
        %v1487 = vpack.c.b16 %v1482, %v1482
        %v1509 = vunpack.c.l.b16 %v627
        %v1510 = vunpack.c.l.b16 %v628
        %v1511 = vunpack.c.l.b16 %v629
        %v1512 = vunpack.c.l.b16 %v630
        %v1513 = vunpack.c.l.b16 %v631
        %v1514 = vunpack.c.l.b16 %v632
        %v1515 = vunpack.c.l.b16 %v633
        %v1516 = vunpack.c.l.b16 %v634
        %v1517 = vunpack.c.l.b16 %v635
        %v1518 = vunpack.c.l.b16 %v636
        %v1519 = vunpack.c.l.b16 %v637
        %v1520 = vunpack.c.l.b16 %v638
        %v1521 = vunpack.c.l.b16 %v639
        %v1522 = vunpack.c.l.b16 %v640
        %v1523 = vunpack.c.l.b16 %v641
        %v1524 = vunpack.c.l.b16 %v642
        %v1525 = vpack.c.b16 %v1510, %v1509
        %v1526 = vpack.c.b16 %v1512, %v1511
        %v1527 = vpack.c.b16 %v1514, %v1513
        %v1528 = vpack.c.b16 %v1516, %v1515
        %v1529 = vpack.c.b16 %v1518, %v1517
        %v1530 = vpack.c.b16 %v1520, %v1519
        %v1531 = vpack.c.b16 %v1522, %v1521
        %v1532 = vpack.c.b16 %v1524, %v1523
        %1541 = vmatprep.subr.bf16.mxu0 0
        %1542 = vmatpush1.bf16.msra.mxu0 %v1525
        %1543 = vmatprep.subr.bf16.mxu0 0
        %1544 = vmatpush1.bf16.msra.mxu0 %v1526
        %1545 = vmatprep.subr.bf16.mxu0 0
        %1546 = vmatpush1.bf16.msra.mxu0 %v1527
        %1547 = vmatprep.subr.bf16.mxu0 0
        %1548 = vmatpush1.bf16.msra.mxu0 %v1528
        %1549 = vmatprep.subr.bf16.mxu0 0
        %1550 = vmatpush1.bf16.msra.mxu0 %v1529
        %1551 = vmatprep.subr.bf16.mxu0 0
        %1552 = vmatpush1.bf16.msra.mxu0 %v1530
        %1553 = vmatprep.subr.bf16.mxu0 0
        %1554 = vmatpush1.bf16.msra.mxu0 %v1531
        %1555 = vmatprep.subr.bf16.mxu0 0
        %1556 = vmatpush1.bf16.msra.mxu0 %v1532
        %1557 = vmatprep.subr.bf16.mxu0 0
        %1558 = vmatpush1.bf16.msra.mxu0 0
        %1559 = vmatprep.subr.bf16.mxu0 0
        %1560 = vmatpush1.bf16.msra.mxu0 0
        %1561 = vmatprep.subr.bf16.mxu0 0
        %1562 = vmatpush1.bf16.msra.mxu0 0
        %1563 = vmatprep.subr.bf16.mxu0 0
        %1564 = vmatpush1.bf16.msra.mxu0 0
        %1565 = vmatprep.subr.bf16.mxu0 0
        %1566 = vmatpush1.bf16.msra.mxu0 0
        %1567 = vmatprep.subr.bf16.mxu0 0
        %1568 = vmatpush1.bf16.msra.mxu0 0
        %1569 = vmatprep.subr.bf16.mxu0 0
        %1570 = vmatpush1.bf16.msra.mxu0 0
        %1571 = vmatprep.subr.bf16.mxu0 0
        %1572 = vmatpush1.bf16.msra.mxu0 0
        %1573 = vmatprep.mubr.bf16.mxu0 0
        %1574 = vmatmul.mubr.bf16.gmra.mrb[0].mxu0 %v1483
        %v1575 = vpop.f32.mrb[0].mxu0
        %v1576 = vadd.f32 %v823, %v1575
        %v1577 = vpop.f32.mrb[0].mxu0
        %v1578 = vpop.f32.mrb[0].mxu0
        %v1579 = vadd.f32 %v826, %v1578
        %v1580 = vpop.f32.mrb[0].mxu0
        %1581 = vmatprep.mubr.bf16.mxu0 0
        %1582 = vmatmul.mubr.bf16.gmra.mrb[0].mxu0 %v1484
        %v1583 = vpop.f32.mrb[0].mxu0
        %v1584 = vadd.f32 %v831, %v1583
        %v1585 = vpop.f32.mrb[0].mxu0
        %v1586 = vpop.f32.mrb[0].mxu0
        %v1587 = vadd.f32 %v834, %v1586
        %v1588 = vpop.f32.mrb[0].mxu0
        %1589 = vmatprep.mubr.bf16.mxu0 0
        %1590 = vmatmul.mubr.bf16.gmra.mrb[0].mxu0 %v1485
        %v1591 = vpop.f32.mrb[0].mxu0
        %v1592 = vadd.f32 %v839, %v1591
        %v1593 = vpop.f32.mrb[0].mxu0
        %v1594 = vpop.f32.mrb[0].mxu0
        %v1595 = vadd.f32 %v842, %v1594
        %v1596 = vpop.f32.mrb[0].mxu0
        %1597 = vmatprep.mubr.bf16.mxu0 0
        %1598 = vmatmul.mubr.bf16.gmra.mrb[0].mxu0 %v1486
        %v1599 = vpop.f32.mrb[0].mxu0
        %v1600 = vadd.f32 %v847, %v1599
        %v1601 = vpop.f32.mrb[0].mxu0
        %v1602 = vpop.f32.mrb[0].mxu0
        %v1603 = vadd.f32 %v850, %v1602
        %v1604 = vpop.f32.mrb[0].mxu0
        %1605 = vmatprep.mubr.bf16.mxu0 0
        %1606 = vmatmul.mubr.bf16.gmra.mrb[0].mxu0 %v1487
        %v1607 = vpop.f32.mrb[0].mxu0
        %v1608 = vadd.f32 %v855, %v1607
        %v1609 = vpop.f32.mrb[0].mxu0
        %v1610 = vpop.f32.mrb[0].mxu0
        %v1611 = vpop.f32.mrb[0].mxu0
        %1612 = vdwg.mxu0
        %v1623 = vunpack.c.l.b16 %v860
        %v1624 = vunpack.c.l.b16 %v861
        %v1625 = vunpack.c.l.b16 %v862
        %v1626 = vunpack.c.l.b16 %v863
        %v1627 = vunpack.c.l.b16 %v864
        %v1628 = vunpack.c.l.b16 %v865
        %v1629 = vunpack.c.l.b16 %v866
        %v1630 = vunpack.c.l.b16 %v867
        %v1631 = vunpack.c.l.b16 %v868
        %v1632 = vunpack.c.l.b16 %v869
        %v1633 = vpack.c.b16 %v1624, %v1623
        %v1634 = vpack.c.b16 %v1626, %v1625
        %v1635 = vpack.c.b16 %v1628, %v1627
        %v1636 = vpack.c.b16 %v1630, %v1629
        %v1637 = vpack.c.b16 %v1632, %v1631
        %v1639 = vshrl.u32 %v1633, 16
        %v1641 = vshll.u32 %v1633, 16
        %v1643 = vrot.slane %v1641, 1
        %v1644 = vor.u32 %v1639, %v1643
        %v1646 = vshll.u32 %v1634, 16
        %v1648 = vrot.slane %v1646, 1
        %v1649 = vsel %vm695, %v1644, %v1648
        %v1650 = vshrl.u32 %v1634, 16
        %v1652 = vor.u32 %v1650, %v1648
        %v1654 = vshll.u32 %v1635, 16
        %v1656 = vrot.slane %v1654, 1
        %v1657 = vsel %vm695, %v1652, %v1656
        %v1658 = vshrl.u32 %v1635, 16
        %v1660 = vor.u32 %v1658, %v1656
        %v1662 = vshll.u32 %v1636, 16
        %v1664 = vrot.slane %v1662, 1
        %v1665 = vsel %vm695, %v1660, %v1664
        %v1666 = vshrl.u32 %v1636, 16
        %v1668 = vor.u32 %v1666, %v1664
        %v1670 = vshll.u32 %v1637, 16
        %v1672 = vrot.slane %v1670, 1
        %v1673 = vsel %vm695, %v1668, %v1672
        %v1674 = vshrl.u32 %v1637, 16
        %v1676 = vor.u32 %v1674, %v1672
        %v1698 = vunpack.c.l.b16 %v871
        %v1699 = vunpack.c.l.b16 %v872
        %v1700 = vunpack.c.l.b16 %v873
        %v1701 = vunpack.c.l.b16 %v874
        %v1702 = vunpack.c.l.b16 %v875
        %v1703 = vunpack.c.l.b16 %v876
        %v1704 = vunpack.c.l.b16 %v877
        %v1705 = vunpack.c.l.b16 %v878
        %v1706 = vunpack.c.l.b16 %v879
        %v1707 = vunpack.c.l.b16 %v880
        %v1708 = vunpack.c.l.b16 %v881
        %v1709 = vunpack.c.l.b16 %v882
        %v1710 = vunpack.c.l.b16 %v883
        %v1711 = vunpack.c.l.b16 %v884
        %v1712 = vunpack.c.l.b16 %v885
        %v1713 = vunpack.c.l.b16 %v886
        %v1714 = vpack.c.b16 %v1699, %v1698
        %v1715 = vpack.c.b16 %v1701, %v1700
        %v1716 = vpack.c.b16 %v1703, %v1702
        %v1717 = vpack.c.b16 %v1705, %v1704
        %v1718 = vpack.c.b16 %v1707, %v1706
        %v1719 = vpack.c.b16 %v1709, %v1708
        %v1720 = vpack.c.b16 %v1711, %v1710
        %v1721 = vpack.c.b16 %v1713, %v1712
        %1730 = vmatprep.subr.bf16.mxu0 0
        %1731 = vmatpush1.bf16.msra.mxu0 %v1714
        %1732 = vmatprep.subr.bf16.mxu0 0
        %1733 = vmatpush1.bf16.msra.mxu0 %v1715
        %1734 = vmatprep.subr.bf16.mxu0 0
        %1735 = vmatpush1.bf16.msra.mxu0 %v1716
        %1736 = vmatprep.subr.bf16.mxu0 0
        %1737 = vmatpush1.bf16.msra.mxu0 %v1717
        %1738 = vmatprep.subr.bf16.mxu0 0
        %1739 = vmatpush1.bf16.msra.mxu0 %v1718
        %1740 = vmatprep.subr.bf16.mxu0 0
        %1741 = vmatpush1.bf16.msra.mxu0 %v1719
        %1742 = vmatprep.subr.bf16.mxu0 0
        %1743 = vmatpush1.bf16.msra.mxu0 %v1720
        %1744 = vmatprep.subr.bf16.mxu0 0
        %1745 = vmatpush1.bf16.msra.mxu0 %v1721
        %1746 = vmatprep.subr.bf16.mxu0 0
        %1747 = vmatpush1.bf16.msra.mxu0 0
        %1748 = vmatprep.subr.bf16.mxu0 0
        %1749 = vmatpush1.bf16.msra.mxu0 0
        %1750 = vmatprep.subr.bf16.mxu0 0
        %1751 = vmatpush1.bf16.msra.mxu0 0
        %1752 = vmatprep.subr.bf16.mxu0 0
        %1753 = vmatpush1.bf16.msra.mxu0 0
        %1754 = vmatprep.subr.bf16.mxu0 0
        %1755 = vmatpush1.bf16.msra.mxu0 0
        %1756 = vmatprep.subr.bf16.mxu0 0
        %1757 = vmatpush1.bf16.msra.mxu0 0
        %1758 = vmatprep.subr.bf16.mxu0 0
        %1759 = vmatpush1.bf16.msra.mxu0 0
        %1760 = vmatprep.subr.bf16.mxu0 0
        %1761 = vmatpush1.bf16.msra.mxu0 0
        %1762 = vmatprep.mubr.bf16.mxu0 0
        %1763 = vmatmul.mubr.bf16.gmra.mrb[0].mxu0 %v1649
        %v1764 = vpop.f32.mrb[0].mxu0
        %v1765 = vadd.f32 %v1066, %v1764
        %v1766 = vpop.f32.mrb[0].mxu0
        %v1767 = vpop.f32.mrb[0].mxu0
        %v1768 = vadd.f32 %v1069, %v1767
        %v1769 = vpop.f32.mrb[0].mxu0
        %1770 = vmatprep.mubr.bf16.mxu0 0
        %1771 = vmatmul.mubr.bf16.gmra.mrb[0].mxu0 %v1657
        %v1772 = vpop.f32.mrb[0].mxu0
        %v1773 = vadd.f32 %v1074, %v1772
        %v1774 = vpop.f32.mrb[0].mxu0
        %v1775 = vpop.f32.mrb[0].mxu0
        %v1776 = vadd.f32 %v1077, %v1775
        %v1777 = vpop.f32.mrb[0].mxu0
        %1778 = vmatprep.mubr.bf16.mxu0 0
        %1779 = vmatmul.mubr.bf16.gmra.mrb[0].mxu0 %v1665
        %v1780 = vpop.f32.mrb[0].mxu0
        %v1781 = vadd.f32 %v1082, %v1780
        %v1782 = vpop.f32.mrb[0].mxu0
        %v1783 = vpop.f32.mrb[0].mxu0
        %v1784 = vadd.f32 %v1085, %v1783
        %v1785 = vpop.f32.mrb[0].mxu0
        %1786 = vmatprep.mubr.bf16.mxu0 0
        %1787 = vmatmul.mubr.bf16.gmra.mrb[0].mxu0 %v1673
        %v1788 = vpop.f32.mrb[0].mxu0
        %v1789 = vadd.f32 %v1090, %v1788
        %v1790 = vpop.f32.mrb[0].mxu0
        %v1791 = vpop.f32.mrb[0].mxu0
        %v1792 = vadd.f32 %v1093, %v1791
        %v1793 = vpop.f32.mrb[0].mxu0
        %1794 = vmatprep.mubr.bf16.mxu0 0
        %1795 = vmatmul.mubr.bf16.gmra.mrb[0].mxu0 %v1676
        %v1796 = vpop.f32.mrb[0].mxu0
        %v1797 = vadd.f32 %v1098, %v1796
        %v1798 = vpop.f32.mrb[0].mxu0
        %v1799 = vpop.f32.mrb[0].mxu0
        %v1800 = vpop.f32.mrb[0].mxu0
        %1801 = vdwg.mxu0
        %v1803 = vunpack.c.l.b16 %v1103
        %v1804 = vpack.c.b16 %v1624, %v1803
        %vm1805 = vcmask 1046528
        %v1806 = vrot.slane %v1804, 1
        %v1807 = vrot.slane %v1634, 1
        %v1808 = vsel %vm1805, %v1806, %v1807
        %v1809 = vrot.slane %v1635, 1
        %v1810 = vsel %vm1805, %v1807, %v1809
        %v1811 = vrot.slane %v1636, 1
        %v1812 = vsel %vm1805, %v1809, %v1811
        %v1813 = vrot.slane %v1637, 1
        %v1814 = vsel %vm1805, %v1811, %v1813
        %v1836 = vunpack.c.l.b16 %v1105
        %v1837 = vunpack.c.l.b16 %v1106
        %v1838 = vunpack.c.l.b16 %v1107
        %v1839 = vunpack.c.l.b16 %v1108
        %v1840 = vunpack.c.l.b16 %v1109
        %v1841 = vunpack.c.l.b16 %v1110
        %v1842 = vunpack.c.l.b16 %v1111
        %v1843 = vunpack.c.l.b16 %v1112
        %v1844 = vunpack.c.l.b16 %v1113
        %v1845 = vunpack.c.l.b16 %v1114
        %v1846 = vunpack.c.l.b16 %v1115
        %v1847 = vunpack.c.l.b16 %v1116
        %v1848 = vunpack.c.l.b16 %v1117
        %v1849 = vunpack.c.l.b16 %v1118
        %v1850 = vunpack.c.l.b16 %v1119
        %v1851 = vunpack.c.l.b16 %v1120
        %v1852 = vpack.c.b16 %v1837, %v1836
        %v1853 = vpack.c.b16 %v1839, %v1838
        %v1854 = vpack.c.b16 %v1841, %v1840
        %v1855 = vpack.c.b16 %v1843, %v1842
        %v1856 = vpack.c.b16 %v1845, %v1844
        %v1857 = vpack.c.b16 %v1847, %v1846
        %v1858 = vpack.c.b16 %v1849, %v1848
        %v1859 = vpack.c.b16 %v1851, %v1850
        %1868 = vmatprep.subr.bf16.mxu0 0
        %1869 = vmatpush1.bf16.msra.mxu0 %v1852
        %1870 = vmatprep.subr.bf16.mxu0 0
        %1871 = vmatpush1.bf16.msra.mxu0 %v1853
        %1872 = vmatprep.subr.bf16.mxu0 0
        %1873 = vmatpush1.bf16.msra.mxu0 %v1854
        %1874 = vmatprep.subr.bf16.mxu0 0
        %1875 = vmatpush1.bf16.msra.mxu0 %v1855
        %1876 = vmatprep.subr.bf16.mxu0 0
        %1877 = vmatpush1.bf16.msra.mxu0 %v1856
        %1878 = vmatprep.subr.bf16.mxu0 0
        %1879 = vmatpush1.bf16.msra.mxu0 %v1857
        %1880 = vmatprep.subr.bf16.mxu0 0
        %1881 = vmatpush1.bf16.msra.mxu0 %v1858
        %1882 = vmatprep.subr.bf16.mxu0 0
        %1883 = vmatpush1.bf16.msra.mxu0 %v1859
        %1884 = vmatprep.subr.bf16.mxu0 0
        %1885 = vmatpush1.bf16.msra.mxu0 0
        %1886 = vmatprep.subr.bf16.mxu0 0
        %1887 = vmatpush1.bf16.msra.mxu0 0
        %1888 = vmatprep.subr.bf16.mxu0 0
        %1889 = vmatpush1.bf16.msra.mxu0 0
        %1890 = vmatprep.subr.bf16.mxu0 0
        %1891 = vmatpush1.bf16.msra.mxu0 0
        %1892 = vmatprep.subr.bf16.mxu0 0
        %1893 = vmatpush1.bf16.msra.mxu0 0
        %1894 = vmatprep.subr.bf16.mxu0 0
        %1895 = vmatpush1.bf16.msra.mxu0 0
        %1896 = vmatprep.subr.bf16.mxu0 0
        %1897 = vmatpush1.bf16.msra.mxu0 0
        %1898 = vmatprep.subr.bf16.mxu0 0
        %1899 = vmatpush1.bf16.msra.mxu0 0
        %1900 = vmatprep.mubr.bf16.mxu0 0
        %1901 = vmatmul.mubr.bf16.gmra.mrb[0].mxu0 %v1808
        %v1902 = vpop.f32.mrb[0].mxu0
        %v1903 = vadd.f32 %v1126, %v1902
        %v1904 = vpop.f32.mrb[0].mxu0
        %v1905 = vpop.f32.mrb[0].mxu0
        %v1906 = vadd.f32 %v1126, %v1905
        %v1907 = vpop.f32.mrb[0].mxu0
        %1908 = vmatprep.mubr.bf16.mxu0 0
        %1909 = vmatmul.mubr.bf16.gmra.mrb[0].mxu0 %v1810
        %v1910 = vpop.f32.mrb[0].mxu0
        %v1911 = vadd.f32 %v1126, %v1910
        %v1912 = vpop.f32.mrb[0].mxu0
        %v1913 = vpop.f32.mrb[0].mxu0
        %v1914 = vadd.f32 %v1126, %v1913
        %v1915 = vpop.f32.mrb[0].mxu0
        %1916 = vmatprep.mubr.bf16.mxu0 0
        %1917 = vmatmul.mubr.bf16.gmra.mrb[0].mxu0 %v1812
        %v1918 = vpop.f32.mrb[0].mxu0
        %v1919 = vadd.f32 %v1126, %v1918
        %v1920 = vpop.f32.mrb[0].mxu0
        %v1921 = vpop.f32.mrb[0].mxu0
        %v1922 = vadd.f32 %v1126, %v1921
        %v1923 = vpop.f32.mrb[0].mxu0
        %1924 = vmatprep.mubr.bf16.mxu0 0
        %1925 = vmatmul.mubr.bf16.gmra.mrb[0].mxu0 %v1814
        %v1926 = vpop.f32.mrb[0].mxu0
        %v1927 = vadd.f32 %v1126, %v1926
        %v1928 = vpop.f32.mrb[0].mxu0
        %v1929 = vpop.f32.mrb[0].mxu0
        %v1930 = vadd.f32 %v1126, %v1929
        %v1931 = vpop.f32.mrb[0].mxu0
        %1932 = vmatprep.mubr.bf16.mxu0 0
        %1933 = vmatmul.mubr.bf16.gmra.mrb[0].mxu0 %v1813
        %v1934 = vpop.f32.mrb[0].mxu0
        %v1935 = vadd.f32 %v1126, %v1934
        %v1936 = vpop.f32.mrb[0].mxu0
        %v1937 = vpop.f32.mrb[0].mxu0
        %v1938 = vpop.f32.mrb[0].mxu0
        %1939 = vdwg.mxu0
        %v1940 = vadd.f32 %v1239, %v1428
        %v1941 = vadd.f32 %v1242, %v1431
        %v1942 = vadd.f32 %v1247, %v1436
        %v1943 = vadd.f32 %v1250, %v1439
        %v1944 = vadd.f32 %v1255, %v1444
        %v1945 = vadd.f32 %v1258, %v1447
        %v1946 = vadd.f32 %v1263, %v1452
        %v1947 = vadd.f32 %v1266, %v1455
        %v1948 = vadd.f32 %v1271, %v1460
        %v1949 = vadd.f32 %v1576, %v1765
        %v1950 = vadd.f32 %v1579, %v1768
        %v1951 = vadd.f32 %v1584, %v1773
        %v1952 = vadd.f32 %v1587, %v1776
        %v1953 = vadd.f32 %v1592, %v1781
        %v1954 = vadd.f32 %v1595, %v1784
        %v1955 = vadd.f32 %v1600, %v1789
        %v1956 = vadd.f32 %v1603, %v1792
        %v1957 = vadd.f32 %v1608, %v1797
        %v1958 = vadd.f32 %v1940, %v1949
        %v1959 = vadd.f32 %v1941, %v1950
        %v1960 = vadd.f32 %v1942, %v1951
        %v1961 = vadd.f32 %v1943, %v1952
        %v1962 = vadd.f32 %v1944, %v1953
        %v1963 = vadd.f32 %v1945, %v1954
        %v1964 = vadd.f32 %v1946, %v1955
        %v1965 = vadd.f32 %v1947, %v1956
        %v1966 = vadd.f32 %v1948, %v1957
        %v1967 = vadd.f32 %v1958, %v1903
        %v1968 = vadd.f32 %v1959, %v1906
        %v1969 = vadd.f32 %v1960, %v1911
        %v1970 = vadd.f32 %v1961, %v1914
        %v1971 = vadd.f32 %v1962, %v1919
        %v1972 = vadd.f32 %v1963, %v1922
        %v1973 = vadd.f32 %v1964, %v1927
        %v1974 = vadd.f32 %v1965, %v1930
        %v1975 = vadd.f32 %v1966, %v1935
        %v1976 = vmax.f32 %v1967, 0.0
        %v1977 = vmax.f32 %v1968, 0.0
        %v1978 = vmax.f32 %v1969, 0.0
        %v1979 = vmax.f32 %v1970, 0.0
        %v1980 = vmax.f32 %v1971, 0.0
        %v1981 = vmax.f32 %v1972, 0.0
        %v1982 = vmax.f32 %v1973, 0.0
        %v1983 = vmax.f32 %v1974, 0.0
        %v1984 = vmax.f32 %v1975, 0.0
        %v1985 = vpack.c.bf16 %v1977, %v1976
        %v1986 = vpack.c.bf16 %v1979, %v1978
        %v1987 = vpack.c.bf16 %v1981, %v1980
        %v1988 = vpack.c.bf16 %v1983, %v1982
        %v1989 = vpack.c.bf16 %v1984, %v1984
        %v1995 = vunpack.c.l.b16 %v1985
        %v1996 = vunpack.c.h.b16 %v1985
        %v1997 = vunpack.c.l.b16 %v1986
        %v1998 = vunpack.c.h.b16 %v1986
        %v1999 = vunpack.c.l.b16 %v1987
        %v2000 = vunpack.c.h.b16 %v1987
        %v2001 = vunpack.c.l.b16 %v1988
        %v2002 = vunpack.c.h.b16 %v1988
        %v2003 = vunpack.c.l.b16 %v1989
        %v2004 = vpack.c.b16 %v1995, %v1995
        %v2005 = vpack.c.b16 %v1996, %v1996
        %v2006 = vpack.c.b16 %v1997, %v1997
        %v2007 = vpack.c.b16 %v1998, %v1998
        %v2008 = vpack.c.b16 %v1999, %v1999
        %v2009 = vpack.c.b16 %v2000, %v2000
        %v2010 = vpack.c.b16 %v2001, %v2001
        %v2011 = vpack.c.b16 %v2002, %v2002
        %v2012 = vpack.c.b16 %v2003, %v2003
        %2022 = vst [vmem:[%s215] sm:$0xf] %v2004
        %2023 = vst [vmem:[%s215 + $0x4] sm:$0xf] %v2005
        %2024 = vst [vmem:[%s215 + $0x8] sm:$0xf] %v2006
        %2025 = vst [vmem:[%s215 + $0xc] sm:$0xf] %v2007
        %2026 = vst [vmem:[%s215 + $0x10] sm:$0xf] %v2008
        %2027 = vst [vmem:[%s215 + $0x14] sm:$0xf] %v2009
        %2028 = vst [vmem:[%s215 + $0x18] sm:$0xf] %v2010
        %2029 = vst [vmem:[%s215 + $0x1c] sm:$0xf] %v2011
        %2030 = vst [vmem:[%s215 + $0x20] sm:$0xf] %v2012
        %s2031 = sand.u32 %s97, 1
        %s2032 = scalar_lea.sflag [#allocation4], %s2031
        %s2033 = sand.u32 %s97, 1
        %s2034 = smul.addr %s2033, 36
        %s2035 = scalar_lea.vmem [#allocation8], %s2034
        // Predicated region
        $region45: #{residual_block_forward.2} parent=31 // pred_check
          %p2036 = pneg %p107
        $region46: #{residual_block_forward.2} parent=31 // pred_check_branch
          %2038 = sbr.rel (%p2036) target = $region48
        $region47: #{residual_block_forward.2} parent=31 // pred_region
          %s2040 = ssub.s32 576, 576
          %2041 = vsyncadd %s2032, %s2040
          %s2042 = smul.addr %s21, 9
          %s2043 = smul.addr %s2042, 64
          %s2044 = scalar_lea.hbm %s3, %s2043
          %s2045 = sshll.u32 %s2035, 4
          %s2046 = int_to_ptr.vmem [resolvable:$true] %s2045
          %2051 = dma.vmem_to_hbm [thread:$0]  %s2046, 576, %s2044, %s2032, 64, 64, 4
        $region48: #{residual_block_forward.2} parent=31 // pred_fallthru
          _
      $region32: #{residual_block_forward.2} parent=5 // pred_fallthru
        _
      %p2052 = scmp.le.s32.totalorder 2, %s16
      // Predicated region
      $region49: #{residual_block_forward.2} parent=5 // pred_check
        %p2053 = pneg %p2052
      $region50: #{residual_block_forward.2} parent=5 // pred_check_branch
        %2055 = sbr.rel (%p2053) target = $region52
      $region51: #{residual_block_forward.2} parent=5 // pred_region
        %s2056 = ssub.s32 %s16, 2
        // Predicated region
        $region53: #{residual_block_forward.2} parent=51 // pred_check
          %p2057 = pneg %p113
        $region54: #{residual_block_forward.2} parent=51 // pred_check_branch
          %2059 = sbr.rel (%p2057) target = $region56
        $region55: #{residual_block_forward.2} parent=51 // pred_region
          %s2060 = sand.u32 %s98, 1
          %s2061 = scalar_lea.sflag [#allocation4], %s2060
          %s2062 = sand.u32 %s98, 1
          %s2063 = smul.addr %s2062, 36
          %s2064 = scalar_lea.vmem [#allocation8], %s2063
          %2065 = dma.done %s2061, 576
        $region56: #{residual_block_forward.2} parent=51 // pred_fallthru
          _
      $region52: #{residual_block_forward.2} parent=5 // pred_fallthru
        _
    $region6: #{residual_block_forward.2} parent=1 // loop_footer
      %s20 = sadd.s32 1, %s16
    $region7: #{residual_block_forward.2} parent=1 // loop_footer_branch
      %15 = sbr.rel target = $region3
    $region8: #{residual_block_forward.2} parent=1 // loop_exit
      _
    %2066 = vsyncpa [#allocation3], 1
    %s2067 = scalar_lea.sflag [#allocation3], 1
    %2068 = vsyncpa %s2067, 1
    %2069 = vsyncpa [#allocation6], 1
    %2070 = vsyncpa [#allocation4], 1
    %s2071 = scalar_lea.sflag [#allocation4], 1
    %2072 = vsyncpa %s2071, 1

// kernel: residual_block_forward.3
$region0: #{residual_block_forward.3}
  #allocation0 [shape = 'u32[]', space=smem, size = 0x4, offset = 0x4, fixed_abs, tag = 'smem constant byte address 0x4 - core index']
  #allocation1 [shape = 'u32[144,128]{1,0:T(1,128)}', space=vmem, size = 0x12000, scoped, tag = 'internal scratch']
  %s0 = inlined_call_operand.hbm [shape: bf16[2,104,128], index: 0, kind: input, shape index: {}]
  %s1 = inlined_call_operand.hbm [shape: bf16[9,128,128], index: 1, kind: input, shape index: {}]
  %s2 = inlined_call_operand.hbm [shape: f32[1,128], index: 2, kind: input, shape index: {}]
  %s3 = inlined_call_operand.hbm [shape: bf16[2,80,128], index: 3, kind: input, shape index: {}]
  %s4 = inlined_call_operand.hbm [shape: bf16[128,128], index: 4, kind: input, shape index: {}]
  %s5 = inlined_call_operand.hbm [shape: f32[1,128], index: 5, kind: input, shape index: {}]
  %s6 = inlined_call_operand.hbm [shape: f32[2,80,128], index: 6, kind: output, shape index: {}]
  %s7 = sld [smem:[#allocation0]]
  $region81: #{residual_block_forward.3} parent=0
    _
  %s9 = ssub.s32 1, %s7
  %s10 = scalar_select 0, %s9, %s7
  $region1: #{residual_block_forward.3} parent=0
    #allocation2 [shape = 'u8[53248]{0}', space=vmem, size = 0xd000, scoped, tag = 'input window, operand 0']
    #allocation3 [shape = 's32[2]{0}', space=sflag, size = 0x8, scoped, tag = 'scoped memory for residual_block_forward.3']
    #allocation4 [shape = 's32[2]{0}', space=sflag, size = 0x8, scoped, tag = 'scoped memory for residual_block_forward.3']
    #allocation5 [shape = 'u8[294912]{0}', space=vmem, size = 0x48000, scoped, tag = 'input window, operand 1, single buffered']
    #allocation6 [shape = 's32[1]{0}', space=sflag, size = 0x4, scoped, tag = 'scoped memory for residual_block_forward.3']
    #allocation7 [shape = 'u8[512]{0}', space=vmem, size = 0x400, scoped, tag = 'input window, operand 2, single buffered']
    #allocation8 [shape = 'u8[40960]{0}', space=vmem, size = 0xa000, scoped, tag = 'input window, operand 3']
    #allocation9 [shape = 's32[2]{0}', space=sflag, size = 0x8, scoped, tag = 'scoped memory for residual_block_forward.3']
    #allocation10 [shape = 'u8[32768]{0}', space=vmem, size = 0x8000, scoped, tag = 'input window, operand 4, single buffered']
    #allocation11 [shape = 'u8[512]{0}', space=vmem, size = 0x400, scoped, tag = 'input window, operand 5, single buffered']
    #allocation12 [shape = 's32[1]{0}', space=sflag, size = 0x4, scoped, tag = 'scoped memory for residual_block_forward.3']
    #allocation13 [shape = 'u8[81920]{0}', space=vmem, size = 0x14000, scoped, tag = 'output window, operand 0']
    %11 = vsyncpa [#allocation3], 0
    %s12 = scalar_lea.sflag [#allocation3], 1
    %13 = vsyncpa %s12, 0
    %14 = vsyncpa [#allocation6], 0
    %15 = vsyncpa [#allocation9], 0
    %s16 = scalar_lea.sflag [#allocation9], 1
    %17 = vsyncpa %s16, 0
    %18 = vsyncpa [#allocation12], 0
    %19 = vsyncpa [#allocation4], 0
    %s20 = scalar_lea.sflag [#allocation4], 1
    %21 = vsyncpa %s20, 0
    loop: start=0, step=1, limit=4
    $region2: #{residual_block_forward.3} parent=1 // loop_pre_header
      _
    $region3: #{residual_block_forward.3} parent=1 // loop_header
      %s23 = sphi 0, %s27
      %p24 = scmp.ge.s32.totalorder %s23, 4
      %s33 = sphi 0, %s35
      %s36 = sphi 0, %s33
      %s37 = sphi 0, %s36
      %s53 = sphi 0, %s37
      %s57 = sphi 0, %s57
      %s59 = sphi 0, %s57
      %s60 = sphi 0, %s59
      %s74 = sphi 0, %s60
      %s78 = sphi 0, %s78
      %s80 = sphi 0, %s78
      %s81 = sphi 0, %s80
      %s95 = sphi 0, %s81
      %s101 = sphi 0, %s103
      %s104 = sphi 0, %s101
      %s105 = sphi 0, %s104
      %s121 = sphi 0, %s105
      %s125 = sphi 0, %s125
      %s127 = sphi 0, %s125
      %s128 = sphi 0, %s127
      %s142 = sphi 0, %s128
      %s146 = sphi 0, %s146
      %s148 = sphi 0, %s146
      %s149 = sphi 0, %s148
      %s163 = sphi 0, %s149
      %s169 = sphi 0, %s171
      %s172 = sphi 0, %s169
      %s173 = sphi 0, %s172
      %s189 = sphi 0, %s173
    $region4: #{residual_block_forward.3} parent=1 // loop_header_branch
      %26 = sbr.rel (%p24) target = $region8
    $region5: #{residual_block_forward.3} parent=1 // loop_body
      %s28 = ssub.s32 %s23, 1
      %s29 = ssub.s32 %s23, 2
      %s30 = sadd.s32 %s23, 1
      %s31 = ssub.s32 %s23, %s30
      %p32 = scmp.eq.s32.totalorder %s31, 0
      %s34 = sadd.s32 %s33, 1
      %s35 = scalar_select %p32, %s33, %s34
      %p38 = pneg %p32
      %p39 = scmp.eq.s32.totalorder %s23, 1
      %p40 = por %p38, %p39
      %p41 = scmp.ne.s32.totalorder %s33, %s36
      %p42 = scmp.eq.s32.totalorder %s23, 0
      %p43 = por %p41, %p42
      %p44 = scmp.ne.s32.totalorder %s33, %s36
      %p45 = scmp.eq.s32.totalorder %s28, 1
      %p46 = por %p44, %p45
      %p47 = scmp.ne.s32.totalorder %s36, %s37
      %p48 = scmp.eq.s32.totalorder %s28, 0
      %p49 = por %p47, %p48
      %p50 = scmp.ne.s32.totalorder %s36, %s37
      %p51 = scmp.eq.s32.totalorder %s29, 1
      %p52 = por %p50, %p51
      %p54 = scmp.ne.s32.totalorder %s37, %s53
      %p55 = scmp.eq.s32.totalorder %s29, 0
      %p56 = por %p54, %p55
      %s58 = sadd.s32 %s57, 1
      %p61 = scmp.eq.s32.totalorder %s23, 1
      %p62 = scmp.ne.s32.totalorder %s57, %s59
      %p63 = scmp.eq.s32.totalorder %s23, 0
      %p64 = por %p62, %p63
      %p65 = scmp.ne.s32.totalorder %s57, %s59
      %p66 = scmp.eq.s32.totalorder %s28, 1
      %p67 = por %p65, %p66
      %p68 = scmp.ne.s32.totalorder %s59, %s60
      %p69 = scmp.eq.s32.totalorder %s28, 0
      %p70 = por %p68, %p69
      %p71 = scmp.ne.s32.totalorder %s59, %s60
      %p72 = scmp.eq.s32.totalorder %s29, 1
      %p73 = por %p71, %p72
      %p75 = scmp.ne.s32.totalorder %s60, %s74
      %p76 = scmp.eq.s32.totalorder %s29, 0
      %p77 = por %p75, %p76
      %s79 = sadd.s32 %s78, 1
      %p82 = scmp.eq.s32.totalorder %s23, 1
      %p83 = scmp.ne.s32.totalorder %s78, %s80
      %p84 = scmp.eq.s32.totalorder %s23, 0
      %p85 = por %p83, %p84
      %p86 = scmp.ne.s32.totalorder %s78, %s80
      %p87 = scmp.eq.s32.totalorder %s28, 1
      %p88 = por %p86, %p87
      %p89 = scmp.ne.s32.totalorder %s80, %s81
      %p90 = scmp.eq.s32.totalorder %s28, 0
      %p91 = por %p89, %p90
      %p92 = scmp.ne.s32.totalorder %s80, %s81
      %p93 = scmp.eq.s32.totalorder %s29, 1
      %p94 = por %p92, %p93
      %p96 = scmp.ne.s32.totalorder %s81, %s95
      %p97 = scmp.eq.s32.totalorder %s29, 0
      %p98 = por %p96, %p97
      %s99 = ssub.s32 %s23, %s30
      %p100 = scmp.eq.s32.totalorder %s99, 0
      %s102 = sadd.s32 %s101, 1
      %s103 = scalar_select %p100, %s101, %s102
      %p106 = pneg %p100
      %p107 = scmp.eq.s32.totalorder %s23, 1
      %p108 = por %p106, %p107
      %p109 = scmp.ne.s32.totalorder %s101, %s104
      %p110 = scmp.eq.s32.totalorder %s23, 0
      %p111 = por %p109, %p110
      %p112 = scmp.ne.s32.totalorder %s101, %s104
      %p113 = scmp.eq.s32.totalorder %s28, 1
      %p114 = por %p112, %p113
      %p115 = scmp.ne.s32.totalorder %s104, %s105
      %p116 = scmp.eq.s32.totalorder %s28, 0
      %p117 = por %p115, %p116
      %p118 = scmp.ne.s32.totalorder %s104, %s105
      %p119 = scmp.eq.s32.totalorder %s29, 1
      %p120 = por %p118, %p119
      %p122 = scmp.ne.s32.totalorder %s105, %s121
      %p123 = scmp.eq.s32.totalorder %s29, 0
      %p124 = por %p122, %p123
      %s126 = sadd.s32 %s125, 1
      %p129 = scmp.eq.s32.totalorder %s23, 1
      %p130 = scmp.ne.s32.totalorder %s125, %s127
      %p131 = scmp.eq.s32.totalorder %s23, 0
      %p132 = por %p130, %p131
      %p133 = scmp.ne.s32.totalorder %s125, %s127
      %p134 = scmp.eq.s32.totalorder %s28, 1
      %p135 = por %p133, %p134
      %p136 = scmp.ne.s32.totalorder %s127, %s128
      %p137 = scmp.eq.s32.totalorder %s28, 0
      %p138 = por %p136, %p137
      %p139 = scmp.ne.s32.totalorder %s127, %s128
      %p140 = scmp.eq.s32.totalorder %s29, 1
      %p141 = por %p139, %p140
      %p143 = scmp.ne.s32.totalorder %s128, %s142
      %p144 = scmp.eq.s32.totalorder %s29, 0
      %p145 = por %p143, %p144
      %s147 = sadd.s32 %s146, 1
      %p150 = scmp.eq.s32.totalorder %s23, 1
      %p151 = scmp.ne.s32.totalorder %s146, %s148
      %p152 = scmp.eq.s32.totalorder %s23, 0
      %p153 = por %p151, %p152
      %p154 = scmp.ne.s32.totalorder %s146, %s148
      %p155 = scmp.eq.s32.totalorder %s28, 1
      %p156 = por %p154, %p155
      %p157 = scmp.ne.s32.totalorder %s148, %s149
      %p158 = scmp.eq.s32.totalorder %s28, 0
      %p159 = por %p157, %p158
      %p160 = scmp.ne.s32.totalorder %s148, %s149
      %p161 = scmp.eq.s32.totalorder %s29, 1
      %p162 = por %p160, %p161
      %p164 = scmp.ne.s32.totalorder %s149, %s163
      %p165 = scmp.eq.s32.totalorder %s29, 0
      %p166 = por %p164, %p165
      %s167 = ssub.s32 %s23, %s30
      %p168 = scmp.eq.s32.totalorder %s167, 0
      %s170 = sadd.s32 %s169, 1
      %s171 = scalar_select %p168, %s169, %s170
      %p174 = pneg %p168
      %p175 = scmp.eq.s32.totalorder %s23, 1
      %p176 = por %p174, %p175
      %p177 = scmp.ne.s32.totalorder %s169, %s172
      %p178 = scmp.eq.s32.totalorder %s23, 0
      %p179 = por %p177, %p178
      %p180 = scmp.ne.s32.totalorder %s169, %s172
      %p181 = scmp.eq.s32.totalorder %s28, 1
      %p182 = por %p180, %p181
      %p183 = scmp.ne.s32.totalorder %s172, %s173
      %p184 = scmp.eq.s32.totalorder %s28, 0
      %p185 = por %p183, %p184
      %p186 = scmp.ne.s32.totalorder %s172, %s173
      %p187 = scmp.eq.s32.totalorder %s29, 1
      %p188 = por %p186, %p187
      %p190 = scmp.ne.s32.totalorder %s173, %s189
      %p191 = scmp.eq.s32.totalorder %s29, 0
      %p192 = por %p190, %p191
      %p193 = scmp.le.s32.totalorder 1, %s23
      %p194 = scmp.lt.s32.totalorder %s23, 3
      %p195 = pnand %p193, %p194
      %p196 = pneg %p195
      // Predicated region
      $region9: #{residual_block_forward.3} parent=5 // pred_check
        _
      $region10: #{residual_block_forward.3} parent=5 // pred_check_branch
        %198 = sbr.rel (%p195) target = $region12
      $region11: #{residual_block_forward.3} parent=5 // pred_region
        %s199 = ssub.s32 %s23, 1
        // Predicated region
        $region13: #{residual_block_forward.3} parent=11 // pred_check
          %p200 = pneg %p70
        $region14: #{residual_block_forward.3} parent=11 // pred_check_branch
          %202 = sbr.rel (%p200) target = $region16
        $region15: #{residual_block_forward.3} parent=11 // pred_region
          %s204 = ssub.s32 9216, 9216
          %205 = vsyncadd [#allocation6], %s204
          %s206 = sshll.u32 [#allocation5], 4
          %s207 = int_to_ptr.vmem [resolvable:$true] %s206
          %212 = dma.hbm_to_vmem [thread:$0]  %s1, 9216, %s207, [#allocation6], 64, 64, 4
        $region16: #{residual_block_forward.3} parent=11 // pred_fallthru
          _
        // Predicated region
        $region17: #{residual_block_forward.3} parent=11 // pred_check
          %p213 = pneg %p91
        $region18: #{residual_block_forward.3} parent=11 // pred_check_branch
          %215 = sbr.rel (%p213) target = $region20
        $region19: #{residual_block_forward.3} parent=11 // pred_region
          %s217 = ssub.s32 16, 16
          %218 = vsyncadd [#allocation6], %s217
          %s220 = sshll.u32 [#allocation7], 4
          %s221 = int_to_ptr.vmem [resolvable:$true] %s220
          %223 = dma.hbm_to_vmem [thread:$0]  %s2, 16, %s221, [#allocation6]
        $region20: #{residual_block_forward.3} parent=11 // pred_fallthru
          _
        // Predicated region
        $region21: #{residual_block_forward.3} parent=11 // pred_check
          %p224 = pneg %p138
        $region22: #{residual_block_forward.3} parent=11 // pred_check_branch
          %226 = sbr.rel (%p224) target = $region24
        $region23: #{residual_block_forward.3} parent=11 // pred_region
          %s228 = ssub.s32 1024, 1024
          %229 = vsyncadd [#allocation9], %s228
          %s230 = sshll.u32 [#allocation10], 4
          %s231 = int_to_ptr.vmem [resolvable:$true] %s230
          %236 = dma.hbm_to_vmem [thread:$0]  %s4, 1024, %s231, [#allocation9], 64, 64, 4
        $region24: #{residual_block_forward.3} parent=11 // pred_fallthru
          _
        // Predicated region
        $region25: #{residual_block_forward.3} parent=11 // pred_check
          %p237 = pneg %p159
        $region26: #{residual_block_forward.3} parent=11 // pred_check_branch
          %239 = sbr.rel (%p237) target = $region28
        $region27: #{residual_block_forward.3} parent=11 // pred_region
          %s241 = ssub.s32 16, 16
          %242 = vsyncadd [#allocation12], %s241
          %s244 = sshll.u32 [#allocation11], 4
          %s245 = int_to_ptr.vmem [resolvable:$true] %s244
          %247 = dma.hbm_to_vmem [thread:$0]  %s5, 16, %s245, [#allocation12]
        $region28: #{residual_block_forward.3} parent=11 // pred_fallthru
          _
      $region12: #{residual_block_forward.3} parent=5 // pred_fallthru
        _
      %p248 = scmp.lt.s32.totalorder %s23, 2
      // Predicated region
      $region29: #{residual_block_forward.3} parent=5 // pred_check
        %p249 = pneg %p248
      $region30: #{residual_block_forward.3} parent=5 // pred_check_branch
        %251 = sbr.rel (%p249) target = $region32
      $region31: #{residual_block_forward.3} parent=5 // pred_region
        // Predicated region
        $region33: #{residual_block_forward.3} parent=31 // pred_check
          %p252 = pneg %p43
        $region34: #{residual_block_forward.3} parent=31 // pred_check_branch
          %254 = sbr.rel (%p252) target = $region36
        $region35: #{residual_block_forward.3} parent=31 // pred_region
          %s255 = sand.u32 %s33, 1
          %s256 = scalar_lea.sflag [#allocation3], %s255
          %s257 = sand.u32 %s33, 1
          %s258 = smul.addr %s257, 52
          %s259 = scalar_lea.vmem [#allocation2], %s258
          %s261 = ssub.s32 832, 832
          %262 = vsyncadd %s256, %s261
          %s263 = smul.addr %s23, 13
          %s264 = smul.addr %s263, 64
          %s265 = scalar_lea.hbm %s0, %s264
          %s266 = sshll.u32 %s259, 4
          %s267 = int_to_ptr.vmem [resolvable:$true] %s266
          %272 = dma.hbm_to_vmem [thread:$0]  %s265, 832, %s267, %s256, 64, 64, 4
        $region36: #{residual_block_forward.3} parent=31 // pred_fallthru
          _
        // Predicated region
        $region37: #{residual_block_forward.3} parent=31 // pred_check
          %p273 = pneg %p111
        $region38: #{residual_block_forward.3} parent=31 // pred_check_branch
          %275 = sbr.rel (%p273) target = $region40
        $region39: #{residual_block_forward.3} parent=31 // pred_region
          %s276 = sand.u32 %s23, 1
          %s277 = scalar_lea.sflag [#allocation9], %s276
          %s278 = sand.u32 %s101, 1
          %s279 = smul.addr %s278, 40
          %s280 = scalar_lea.vmem [#allocation8], %s279
          %s282 = ssub.s32 640, 640
          %283 = vsyncadd %s277, %s282
          %s284 = smul.addr %s23, 10
          %s285 = smul.addr %s284, 64
          %s286 = scalar_lea.hbm %s3, %s285
          %s287 = sshll.u32 %s280, 4
          %s288 = int_to_ptr.vmem [resolvable:$true] %s287
          %293 = dma.hbm_to_vmem [thread:$0]  %s286, 640, %s288, %s277, 64, 64, 4
        $region40: #{residual_block_forward.3} parent=31 // pred_fallthru
          _
      $region32: #{residual_block_forward.3} parent=5 // pred_fallthru
        _
      %p294 = scmp.le.s32.totalorder 1, %s23
      %p295 = scmp.lt.s32.totalorder %s23, 3
      %p296 = pnand %p294, %p295
      %p297 = pneg %p296
      // Predicated region
      $region41: #{residual_block_forward.3} parent=5 // pred_check
        _
      $region42: #{residual_block_forward.3} parent=5 // pred_check_branch
        %299 = sbr.rel (%p296) target = $region44
      $region43: #{residual_block_forward.3} parent=5 // pred_region
        %s300 = ssub.s32 %s23, 1
        %s301 = sand.u32 %s36, 1
        %s302 = scalar_lea.sflag [#allocation3], %s301
        %s303 = sand.u32 %s36, 1
        %s304 = smul.addr %s303, 52
        %s305 = scalar_lea.vmem [#allocation2], %s304
        // Predicated region
        $region45: #{residual_block_forward.3} parent=43 // pred_check
          %p306 = pneg %p49
        $region46: #{residual_block_forward.3} parent=43 // pred_check_branch
          %308 = sbr.rel (%p306) target = $region48
        $region47: #{residual_block_forward.3} parent=43 // pred_region
          %309 = dma.done %s302, 832
        $region48: #{residual_block_forward.3} parent=43 // pred_fallthru
          _
        // Predicated region
        $region49: #{residual_block_forward.3} parent=43 // pred_check
          %p310 = pneg %p70
        $region50: #{residual_block_forward.3} parent=43 // pred_check_branch
          %312 = sbr.rel (%p310) target = $region52
        $region51: #{residual_block_forward.3} parent=43 // pred_region
          %313 = dma.done [#allocation6], 9216
        $region52: #{residual_block_forward.3} parent=43 // pred_fallthru
          _
        // Predicated region
        $region53: #{residual_block_forward.3} parent=43 // pred_check
          %p314 = pneg %p91
        $region54: #{residual_block_forward.3} parent=43 // pred_check_branch
          %316 = sbr.rel (%p314) target = $region56
        $region55: #{residual_block_forward.3} parent=43 // pred_region
          %317 = dma.done [#allocation6], 16
        $region56: #{residual_block_forward.3} parent=43 // pred_fallthru
          _
        %s318 = sand.u32 %s28, 1
        %s319 = scalar_lea.sflag [#allocation9], %s318
        %s320 = sand.u32 %s104, 1
        %s321 = smul.addr %s320, 40
        %s322 = scalar_lea.vmem [#allocation8], %s321
        // Predicated region
        $region57: #{residual_block_forward.3} parent=43 // pred_check
          %p323 = pneg %p117
        $region58: #{residual_block_forward.3} parent=43 // pred_check_branch
          %325 = sbr.rel (%p323) target = $region60
        $region59: #{residual_block_forward.3} parent=43 // pred_region
          %326 = dma.done %s319, 640
        $region60: #{residual_block_forward.3} parent=43 // pred_fallthru
          _
        // Predicated region
        $region61: #{residual_block_forward.3} parent=43 // pred_check
          %p327 = pneg %p138
        $region62: #{residual_block_forward.3} parent=43 // pred_check_branch
          %329 = sbr.rel (%p327) target = $region64
        $region63: #{residual_block_forward.3} parent=43 // pred_region
          %330 = dma.done [#allocation9], 1024
        $region64: #{residual_block_forward.3} parent=43 // pred_fallthru
          _
        // Predicated region
        $region65: #{residual_block_forward.3} parent=43 // pred_check
          %p331 = pneg %p159
        $region66: #{residual_block_forward.3} parent=43 // pred_check_branch
          %333 = sbr.rel (%p331) target = $region68
        $region67: #{residual_block_forward.3} parent=43 // pred_region
          %334 = dma.done [#allocation12], 16
        $region68: #{residual_block_forward.3} parent=43 // pred_fallthru
          _
        %s335 = sand.u32 %s36, 1
        %s336 = scalar_lea.sflag [#allocation3], %s335
        %s337 = sand.u32 %s36, 1
        %s338 = smul.addr %s337, 52
        %s339 = scalar_lea.vmem [#allocation2], %s338
        %p340 = pneg %p49
        %p341 = pneg %p46
        %p342 = pneg %p70
        %p343 = pneg %p67
        %p344 = pneg %p91
        %p345 = pneg %p88
        %s346 = sand.u32 %s28, 1
        %s347 = scalar_lea.sflag [#allocation9], %s346
        %s348 = sand.u32 %s104, 1
        %s349 = smul.addr %s348, 40
        %s350 = scalar_lea.vmem [#allocation8], %s349
        %p351 = pneg %p117
        %p352 = pneg %p114
        %p353 = pneg %p138
        %p354 = pneg %p135
        %p355 = pneg %p159
        %p356 = pneg %p156
        %p357 = pneg %p185
        %p358 = pneg %p182
        %s359 = sand.u32 %s172, 1
        %s360 = scalar_lea.sflag [#allocation4], %s359
        %s361 = sand.u32 %s172, 1
        %s362 = smul.addr %s361, 80
        %s363 = scalar_lea.vmem [#allocation13], %s362
        %v365 = vld [vmem:[%s305] sm:$0xf]
        %v366 = vld [vmem:[%s305 + $0x4] sm:$0xf]
        %v367 = vld [vmem:[%s305 + $0x8] sm:$0xf]
        %v368 = vld [vmem:[%s305 + $0xc] sm:$0xf]
        %v369 = vld [vmem:[%s305 + $0x10] sm:$0xf]
        %v370 = vld [vmem:[%s305 + $0x14] sm:$0xf]
        %v371 = vld [vmem:[%s305 + $0x18] sm:$0xf]
        %v372 = vld [vmem:[%s305 + $0x1c] sm:$0xf]
        %v373 = vld [vmem:[%s305 + $0x20] sm:$0xf]
        %v374 = vld [vmem:[%s305 + $0x24] sm:$0xf]
        %v375 = vld [vmem:[#allocation5] sm:$0xf]
        %v376 = vld [vmem:[#allocation5 + $0x4] sm:$0xf]
        %v377 = vld [vmem:[#allocation5 + $0x8] sm:$0xf]
        %v378 = vld [vmem:[#allocation5 + $0xc] sm:$0xf]
        %v379 = vld [vmem:[#allocation5 + $0x10] sm:$0xf]
        %v380 = vld [vmem:[#allocation5 + $0x14] sm:$0xf]
        %v381 = vld [vmem:[#allocation5 + $0x18] sm:$0xf]
        %v382 = vld [vmem:[#allocation5 + $0x1c] sm:$0xf]
        %v383 = vld [vmem:[#allocation5 + $0x20] sm:$0xf]
        %v384 = vld [vmem:[#allocation5 + $0x24] sm:$0xf]
        %v385 = vld [vmem:[#allocation5 + $0x28] sm:$0xf]
        %v386 = vld [vmem:[#allocation5 + $0x2c] sm:$0xf]
        %v387 = vld [vmem:[#allocation5 + $0x30] sm:$0xf]
        %v388 = vld [vmem:[#allocation5 + $0x34] sm:$0xf]
        %v389 = vld [vmem:[#allocation5 + $0x38] sm:$0xf]
        %v390 = vld [vmem:[#allocation5 + $0x3c] sm:$0xf]
        %v391 = vld [vmem:[%s305 + $0x28] sm:$0x1]
        %s392 = scalar_lea.vmem [#allocation5], 64
        %v393 = vld [vmem:[%s392] sm:$0xf]
        %v394 = vld [vmem:[%s392 + $0x4] sm:$0xf]
        %v395 = vld [vmem:[%s392 + $0x8] sm:$0xf]
        %v396 = vld [vmem:[%s392 + $0xc] sm:$0xf]
        %v397 = vld [vmem:[%s392 + $0x10] sm:$0xf]
        %v398 = vld [vmem:[%s392 + $0x14] sm:$0xf]
        %v399 = vld [vmem:[%s392 + $0x18] sm:$0xf]
        %v400 = vld [vmem:[%s392 + $0x1c] sm:$0xf]
        %v401 = vld [vmem:[%s392 + $0x20] sm:$0xf]
        %v402 = vld [vmem:[%s392 + $0x24] sm:$0xf]
        %v403 = vld [vmem:[%s392 + $0x28] sm:$0xf]
        %v404 = vld [vmem:[%s392 + $0x2c] sm:$0xf]
        %v405 = vld [vmem:[%s392 + $0x30] sm:$0xf]
        %v406 = vld [vmem:[%s392 + $0x34] sm:$0xf]
        %v407 = vld [vmem:[%s392 + $0x38] sm:$0xf]
        %v408 = vld [vmem:[%s392 + $0x3c] sm:$0xf]
        %v420 = vunpack.c.l.b16 %v365
        %v421 = vunpack.c.l.b16 %v366
        %v422 = vunpack.c.l.b16 %v367
        %v423 = vunpack.c.l.b16 %v368
        %v424 = vunpack.c.l.b16 %v369
        %v425 = vunpack.c.l.b16 %v370
        %v426 = vunpack.c.l.b16 %v371
        %v427 = vunpack.c.l.b16 %v372
        %v428 = vunpack.c.l.b16 %v373
        %v429 = vunpack.c.l.b16 %v374
        %v430 = vunpack.c.l.b16 %v391
        %v431 = vpack.c.b16 %v421, %v420
        %v432 = vpack.c.b16 %v423, %v422
        %v433 = vpack.c.b16 %v425, %v424
        %v434 = vpack.c.b16 %v427, %v426
        %v435 = vpack.c.b16 %v429, %v428
        %v436 = vpack.c.b16 %v430, %v430
        %vm437 = vsmask.f32 7424
        %v439 = vshrl.u32 %v431, 16
        %v441 = vshll.u32 %v431, 16
        %v443 = vrot.slane %v441, 1
        %v444 = vor.u32 %v439, %v443
        %v446 = vshll.u32 %v432, 16
        %v448 = vrot.slane %v446, 1
        %v449 = vsel %vm437, %v444, %v448
        %v450 = vshrl.u32 %v432, 16
        %v452 = vor.u32 %v450, %v448
        %v454 = vshll.u32 %v433, 16
        %v456 = vrot.slane %v454, 1
        %v457 = vsel %vm437, %v452, %v456
        %v458 = vshrl.u32 %v433, 16
        %v460 = vor.u32 %v458, %v456
        %v462 = vshll.u32 %v434, 16
        %v464 = vrot.slane %v462, 1
        %v465 = vsel %vm437, %v460, %v464
        %v466 = vshrl.u32 %v434, 16
        %v468 = vor.u32 %v466, %v464
        %v470 = vshll.u32 %v435, 16
        %v472 = vrot.slane %v470, 1
        %v473 = vsel %vm437, %v468, %v472
        %v474 = vshrl.u32 %v435, 16
        %v476 = vor.u32 %v474, %v472
        %v478 = vshll.u32 %v436, 16
        %v480 = vrot.slane %v478, 1
        %v481 = vsel %vm437, %v476, %v480
        %v503 = vunpack.c.l.b16 %v393
        %v504 = vunpack.c.l.b16 %v394
        %v505 = vunpack.c.l.b16 %v395
        %v506 = vunpack.c.l.b16 %v396
        %v507 = vunpack.c.l.b16 %v397
        %v508 = vunpack.c.l.b16 %v398
        %v509 = vunpack.c.l.b16 %v399
        %v510 = vunpack.c.l.b16 %v400
        %v511 = vunpack.c.l.b16 %v401
        %v512 = vunpack.c.l.b16 %v402
        %v513 = vunpack.c.l.b16 %v403
        %v514 = vunpack.c.l.b16 %v404
        %v515 = vunpack.c.l.b16 %v405
        %v516 = vunpack.c.l.b16 %v406
        %v517 = vunpack.c.l.b16 %v407
        %v518 = vunpack.c.l.b16 %v408
        %v519 = vpack.c.b16 %v504, %v503
        %v520 = vpack.c.b16 %v506, %v505
        %v521 = vpack.c.b16 %v508, %v507
        %v522 = vpack.c.b16 %v510, %v509
        %v523 = vpack.c.b16 %v512, %v511
        %v524 = vpack.c.b16 %v514, %v513
        %v525 = vpack.c.b16 %v516, %v515
        %v526 = vpack.c.b16 %v518, %v517
        %535 = vmatprep.subr.bf16.mxu0 0
        %536 = vmatpush1.bf16.msra.mxu0 %v519
        %537 = vmatprep.subr.bf16.mxu0 0
        %538 = vmatpush1.bf16.msra.mxu0 %v520
        %539 = vmatprep.subr.bf16.mxu0 0
        %540 = vmatpush1.bf16.msra.mxu0 %v521
        %541 = vmatprep.subr.bf16.mxu0 0
        %542 = vmatpush1.bf16.msra.mxu0 %v522
        %543 = vmatprep.subr.bf16.mxu0 0
        %544 = vmatpush1.bf16.msra.mxu0 %v523
        %545 = vmatprep.subr.bf16.mxu0 0
        %546 = vmatpush1.bf16.msra.mxu0 %v524
        %547 = vmatprep.subr.bf16.mxu0 0
        %548 = vmatpush1.bf16.msra.mxu0 %v525
        %549 = vmatprep.subr.bf16.mxu0 0
        %550 = vmatpush1.bf16.msra.mxu0 %v526
        %551 = vmatprep.subr.bf16.mxu0 0
        %552 = vmatpush1.bf16.msra.mxu0 0
        %553 = vmatprep.subr.bf16.mxu0 0
        %554 = vmatpush1.bf16.msra.mxu0 0
        %555 = vmatprep.subr.bf16.mxu0 0
        %556 = vmatpush1.bf16.msra.mxu0 0
        %557 = vmatprep.subr.bf16.mxu0 0
        %558 = vmatpush1.bf16.msra.mxu0 0
        %559 = vmatprep.subr.bf16.mxu0 0
        %560 = vmatpush1.bf16.msra.mxu0 0
        %561 = vmatprep.subr.bf16.mxu0 0
        %562 = vmatpush1.bf16.msra.mxu0 0
        %563 = vmatprep.subr.bf16.mxu0 0
        %564 = vmatpush1.bf16.msra.mxu0 0
        %565 = vmatprep.subr.bf16.mxu0 0
        %566 = vmatpush1.bf16.msra.mxu0 0
        %567 = vmatprep.mubr.bf16.mxu0 0
        %568 = vmatmul.mubr.bf16.gmra.mrb[0].mxu0 %v449
        %v569 = vpop.f32.mrb[0].mxu0
        %v570 = vadd.f32 0.0, %v569
        %v571 = vpop.f32.mrb[0].mxu0
        %v572 = vpop.f32.mrb[0].mxu0
        %v573 = vadd.f32 0.0, %v572
        %v574 = vpop.f32.mrb[0].mxu0
        %575 = vmatprep.mubr.bf16.mxu0 0
        %576 = vmatmul.mubr.bf16.gmra.mrb[0].mxu0 %v457
        %v577 = vpop.f32.mrb[0].mxu0
        %v578 = vadd.f32 0.0, %v577
        %v579 = vpop.f32.mrb[0].mxu0
        %v580 = vpop.f32.mrb[0].mxu0
        %v581 = vadd.f32 0.0, %v580
        %v582 = vpop.f32.mrb[0].mxu0
        %583 = vmatprep.mubr.bf16.mxu0 0
        %584 = vmatmul.mubr.bf16.gmra.mrb[0].mxu0 %v465
        %v585 = vpop.f32.mrb[0].mxu0
        %v586 = vadd.f32 0.0, %v585
        %v587 = vpop.f32.mrb[0].mxu0
        %v588 = vpop.f32.mrb[0].mxu0
        %v589 = vadd.f32 0.0, %v588
        %v590 = vpop.f32.mrb[0].mxu0
        %591 = vmatprep.mubr.bf16.mxu0 0
        %592 = vmatmul.mubr.bf16.gmra.mrb[0].mxu0 %v473
        %v593 = vpop.f32.mrb[0].mxu0
        %v594 = vadd.f32 0.0, %v593
        %v595 = vpop.f32.mrb[0].mxu0
        %v596 = vpop.f32.mrb[0].mxu0
        %v597 = vadd.f32 0.0, %v596
        %v598 = vpop.f32.mrb[0].mxu0
        %599 = vmatprep.mubr.bf16.mxu0 0
        %600 = vmatmul.mubr.bf16.gmra.mrb[0].mxu0 %v481
        %v601 = vpop.f32.mrb[0].mxu0
        %v602 = vadd.f32 0.0, %v601
        %v603 = vpop.f32.mrb[0].mxu0
        %v604 = vpop.f32.mrb[0].mxu0
        %v605 = vadd.f32 0.0, %v604
        %v606 = vpop.f32.mrb[0].mxu0
        %607 = vdwg.mxu0
        %v608 = vld [vmem:[%s305] sm:$0xe]
        %s609 = scalar_lea.vmem [#allocation5], 128
        %v610 = vld [vmem:[%s609] sm:$0xf]
        %v611 = vld [vmem:[%s609 + $0x4] sm:$0xf]
        %v612 = vld [vmem:[%s609 + $0x8] sm:$0xf]
        %v613 = vld [vmem:[%s609 + $0xc] sm:$0xf]
        %v614 = vld [vmem:[%s609 + $0x10] sm:$0xf]
        %v615 = vld [vmem:[%s609 + $0x14] sm:$0xf]
        %v616 = vld [vmem:[%s609 + $0x18] sm:$0xf]
        %v617 = vld [vmem:[%s609 + $0x1c] sm:$0xf]
        %v618 = vld [vmem:[%s609 + $0x20] sm:$0xf]
        %v619 = vld [vmem:[%s609 + $0x24] sm:$0xf]
        %v620 = vld [vmem:[%s609 + $0x28] sm:$0xf]
        %v621 = vld [vmem:[%s609 + $0x2c] sm:$0xf]
        %v622 = vld [vmem:[%s609 + $0x30] sm:$0xf]
        %v623 = vld [vmem:[%s609 + $0x34] sm:$0xf]
        %v624 = vld [vmem:[%s609 + $0x38] sm:$0xf]
        %v625 = vld [vmem:[%s609 + $0x3c] sm:$0xf]
        %v626 = vld [vmem:[%s305 + $0x4] sm:$0xe]
        %v627 = vld [vmem:[%s305 + $0x8] sm:$0xf]
        %v628 = vld [vmem:[%s305 + $0xc] sm:$0xf]
        %v629 = vld [vmem:[%s305 + $0x10] sm:$0xf]
        %v630 = vld [vmem:[%s305 + $0x14] sm:$0xf]
        %v631 = vld [vmem:[%s305 + $0x18] sm:$0xf]
        %v632 = vld [vmem:[%s305 + $0x1c] sm:$0xf]
        %v633 = vld [vmem:[%s305 + $0x20] sm:$0xf]
        %v634 = vld [vmem:[%s305 + $0x24] sm:$0xf]
        %v635 = vld [vmem:[%s305 + $0x28] sm:$0xf]
        %v636 = vld [vmem:[%s305 + $0x2c] sm:$0x1]
        %s637 = scalar_lea.vmem [#allocation5], 192
        %v638 = vld [vmem:[%s637] sm:$0xf]
        %v639 = vld [vmem:[%s637 + $0x4] sm:$0xf]
        %v640 = vld [vmem:[%s637 + $0x8] sm:$0xf]
        %v641 = vld [vmem:[%s637 + $0xc] sm:$0xf]
        %v642 = vld [vmem:[%s637 + $0x10] sm:$0xf]
        %v643 = vld [vmem:[%s637 + $0x14] sm:$0xf]
        %v644 = vld [vmem:[%s637 + $0x18] sm:$0xf]
        %v645 = vld [vmem:[%s637 + $0x1c] sm:$0xf]
        %v646 = vld [vmem:[%s637 + $0x20] sm:$0xf]
        %v647 = vld [vmem:[%s637 + $0x24] sm:$0xf]
        %v648 = vld [vmem:[%s637 + $0x28] sm:$0xf]
        %v649 = vld [vmem:[%s637 + $0x2c] sm:$0xf]
        %v650 = vld [vmem:[%s637 + $0x30] sm:$0xf]
        %v651 = vld [vmem:[%s637 + $0x34] sm:$0xf]
        %v652 = vld [vmem:[%s637 + $0x38] sm:$0xf]
        %v653 = vld [vmem:[%s637 + $0x3c] sm:$0xf]
        %v665 = vunpack.c.l.b16 %v626
        %v666 = vunpack.c.l.b16 %v627
        %v667 = vunpack.c.l.b16 %v628
        %v668 = vunpack.c.l.b16 %v629
        %v669 = vunpack.c.l.b16 %v630
        %v670 = vunpack.c.l.b16 %v631
        %v671 = vunpack.c.l.b16 %v632
        %v672 = vunpack.c.l.b16 %v633
        %v673 = vunpack.c.l.b16 %v634
        %v674 = vunpack.c.l.b16 %v635
        %v675 = vunpack.c.l.b16 %v636
        %v676 = vpack.c.b16 %v666, %v665
        %v677 = vpack.c.b16 %v668, %v667
        %v678 = vpack.c.b16 %v670, %v669
        %v679 = vpack.c.b16 %v672, %v671
        %v680 = vpack.c.b16 %v674, %v673
        %v681 = vpack.c.b16 %v675, %v675
        %vm682 = vcmask 1046528
        %v683 = vrot.slane %v676, 1
        %v684 = vrot.slane %v677, 1
        %v685 = vsel %vm682, %v683, %v684
        %v686 = vrot.slane %v678, 1
        %v687 = vsel %vm682, %v684, %v686
        %v688 = vrot.slane %v679, 1
        %v689 = vsel %vm682, %v686, %v688
        %v690 = vrot.slane %v680, 1
        %v691 = vsel %vm682, %v688, %v690
        %v692 = vrot.slane %v681, 1
        %v693 = vsel %vm682, %v690, %v692
        %v715 = vunpack.c.l.b16 %v638
        %v716 = vunpack.c.l.b16 %v639
        %v717 = vunpack.c.l.b16 %v640
        %v718 = vunpack.c.l.b16 %v641
        %v719 = vunpack.c.l.b16 %v642
        %v720 = vunpack.c.l.b16 %v643
        %v721 = vunpack.c.l.b16 %v644
        %v722 = vunpack.c.l.b16 %v645
        %v723 = vunpack.c.l.b16 %v646
        %v724 = vunpack.c.l.b16 %v647
        %v725 = vunpack.c.l.b16 %v648
        %v726 = vunpack.c.l.b16 %v649
        %v727 = vunpack.c.l.b16 %v650
        %v728 = vunpack.c.l.b16 %v651
        %v729 = vunpack.c.l.b16 %v652
        %v730 = vunpack.c.l.b16 %v653
        %v731 = vpack.c.b16 %v716, %v715
        %v732 = vpack.c.b16 %v718, %v717
        %v733 = vpack.c.b16 %v720, %v719
        %v734 = vpack.c.b16 %v722, %v721
        %v735 = vpack.c.b16 %v724, %v723
        %v736 = vpack.c.b16 %v726, %v725
        %v737 = vpack.c.b16 %v728, %v727
        %v738 = vpack.c.b16 %v730, %v729
        %747 = vmatprep.subr.bf16.mxu0 0
        %748 = vmatpush1.bf16.msra.mxu0 %v731
        %749 = vmatprep.subr.bf16.mxu0 0
        %750 = vmatpush1.bf16.msra.mxu0 %v732
        %751 = vmatprep.subr.bf16.mxu0 0
        %752 = vmatpush1.bf16.msra.mxu0 %v733
        %753 = vmatprep.subr.bf16.mxu0 0
        %754 = vmatpush1.bf16.msra.mxu0 %v734
        %755 = vmatprep.subr.bf16.mxu0 0
        %756 = vmatpush1.bf16.msra.mxu0 %v735
        %757 = vmatprep.subr.bf16.mxu0 0
        %758 = vmatpush1.bf16.msra.mxu0 %v736
        %759 = vmatprep.subr.bf16.mxu0 0
        %760 = vmatpush1.bf16.msra.mxu0 %v737
        %761 = vmatprep.subr.bf16.mxu0 0
        %762 = vmatpush1.bf16.msra.mxu0 %v738
        %763 = vmatprep.subr.bf16.mxu0 0
        %764 = vmatpush1.bf16.msra.mxu0 0
        %765 = vmatprep.subr.bf16.mxu0 0
        %766 = vmatpush1.bf16.msra.mxu0 0
        %767 = vmatprep.subr.bf16.mxu0 0
        %768 = vmatpush1.bf16.msra.mxu0 0
        %769 = vmatprep.subr.bf16.mxu0 0
        %770 = vmatpush1.bf16.msra.mxu0 0
        %771 = vmatprep.subr.bf16.mxu0 0
        %772 = vmatpush1.bf16.msra.mxu0 0
        %773 = vmatprep.subr.bf16.mxu0 0
        %774 = vmatpush1.bf16.msra.mxu0 0
        %775 = vmatprep.subr.bf16.mxu0 0
        %776 = vmatpush1.bf16.msra.mxu0 0
        %777 = vmatprep.subr.bf16.mxu0 0
        %778 = vmatpush1.bf16.msra.mxu0 0
        %779 = vmatprep.mubr.bf16.mxu0 0
        %780 = vmatmul.mubr.bf16.gmra.mrb[0].mxu0 %v685
        %v781 = vpop.f32.mrb[0].mxu0
        %v782 = vadd.f32 0.0, %v781
        %v783 = vpop.f32.mrb[0].mxu0
        %v784 = vpop.f32.mrb[0].mxu0
        %v785 = vadd.f32 0.0, %v784
        %v786 = vpop.f32.mrb[0].mxu0
        %787 = vmatprep.mubr.bf16.mxu0 0
        %788 = vmatmul.mubr.bf16.gmra.mrb[0].mxu0 %v687
        %v789 = vpop.f32.mrb[0].mxu0
        %v790 = vadd.f32 0.0, %v789
        %v791 = vpop.f32.mrb[0].mxu0
        %v792 = vpop.f32.mrb[0].mxu0
        %v793 = vadd.f32 0.0, %v792
        %v794 = vpop.f32.mrb[0].mxu0
        %795 = vmatprep.mubr.bf16.mxu0 0
        %796 = vmatmul.mubr.bf16.gmra.mrb[0].mxu0 %v689
        %v797 = vpop.f32.mrb[0].mxu0
        %v798 = vadd.f32 0.0, %v797
        %v799 = vpop.f32.mrb[0].mxu0
        %v800 = vpop.f32.mrb[0].mxu0
        %v801 = vadd.f32 0.0, %v800
        %v802 = vpop.f32.mrb[0].mxu0
        %803 = vmatprep.mubr.bf16.mxu0 0
        %804 = vmatmul.mubr.bf16.gmra.mrb[0].mxu0 %v691
        %v805 = vpop.f32.mrb[0].mxu0
        %v806 = vadd.f32 0.0, %v805
        %v807 = vpop.f32.mrb[0].mxu0
        %v808 = vpop.f32.mrb[0].mxu0
        %v809 = vadd.f32 0.0, %v808
        %v810 = vpop.f32.mrb[0].mxu0
        %811 = vmatprep.mubr.bf16.mxu0 0
        %812 = vmatmul.mubr.bf16.gmra.mrb[0].mxu0 %v693
        %v813 = vpop.f32.mrb[0].mxu0
        %v814 = vadd.f32 0.0, %v813
        %v815 = vpop.f32.mrb[0].mxu0
        %v816 = vpop.f32.mrb[0].mxu0
        %v817 = vadd.f32 0.0, %v816
        %v818 = vpop.f32.mrb[0].mxu0
        %819 = vdwg.mxu0
        %v820 = vld [vmem:[%s305 + $0x2c] sm:$0x3]
        %s821 = scalar_lea.vmem [#allocation5], 256
        %v822 = vld [vmem:[%s821] sm:$0xf]
        %v823 = vld [vmem:[%s821 + $0x4] sm:$0xf]
        %v824 = vld [vmem:[%s821 + $0x8] sm:$0xf]
        %v825 = vld [vmem:[%s821 + $0xc] sm:$0xf]
        %v826 = vld [vmem:[%s821 + $0x10] sm:$0xf]
        %v827 = vld [vmem:[%s821 + $0x14] sm:$0xf]
        %v828 = vld [vmem:[%s821 + $0x18] sm:$0xf]
        %v829 = vld [vmem:[%s821 + $0x1c] sm:$0xf]
        %v830 = vld [vmem:[%s821 + $0x20] sm:$0xf]
        %v831 = vld [vmem:[%s821 + $0x24] sm:$0xf]
        %v832 = vld [vmem:[%s821 + $0x28] sm:$0xf]
        %v833 = vld [vmem:[%s821 + $0x2c] sm:$0xf]
        %v834 = vld [vmem:[%s821 + $0x30] sm:$0xf]
        %v835 = vld [vmem:[%s821 + $0x34] sm:$0xf]
        %v836 = vld [vmem:[%s821 + $0x38] sm:$0xf]
        %v837 = vld [vmem:[%s821 + $0x3c] sm:$0xf]
        %v838 = vld [vmem:[%s305 + $0x4] sm:$0xc]
        %s839 = scalar_lea.vmem [#allocation5], 320
        %v840 = vld [vmem:[%s839] sm:$0xf]
        %v841 = vld [vmem:[%s839 + $0x4] sm:$0xf]
        %v842 = vld [vmem:[%s839 + $0x8] sm:$0xf]
        %v843 = vld [vmem:[%s839 + $0xc] sm:$0xf]
        %v844 = vld [vmem:[%s839 + $0x10] sm:$0xf]
        %v845 = vld [vmem:[%s839 + $0x14] sm:$0xf]
        %v846 = vld [vmem:[%s839 + $0x18] sm:$0xf]
        %v847 = vld [vmem:[%s839 + $0x1c] sm:$0xf]
        %v848 = vld [vmem:[%s839 + $0x20] sm:$0xf]
        %v849 = vld [vmem:[%s839 + $0x24] sm:$0xf]
        %v850 = vld [vmem:[%s839 + $0x28] sm:$0xf]
        %v851 = vld [vmem:[%s839 + $0x2c] sm:$0xf]
        %v852 = vld [vmem:[%s839 + $0x30] sm:$0xf]
        %v853 = vld [vmem:[%s839 + $0x34] sm:$0xf]
        %v854 = vld [vmem:[%s839 + $0x38] sm:$0xf]
        %v855 = vld [vmem:[%s839 + $0x3c] sm:$0xf]
        %v858 = vunpack.c.l.b16 %v838
        %v859 = vunpack.c.l.b16 %v820
        %v860 = vpack.c.b16 %v666, %v858
        %v861 = vpack.c.b16 %v859, %v859
        %vm862 = vcmask 1045504
        %v863 = vrot.slane %v860, 2
        %v864 = vrot.slane %v677, 2
        %v865 = vsel %vm862, %v863, %v864
        %v866 = vrot.slane %v678, 2
        %v867 = vsel %vm862, %v864, %v866
        %v868 = vrot.slane %v679, 2
        %v869 = vsel %vm862, %v866, %v868
        %v870 = vrot.slane %v680, 2
        %v871 = vsel %vm862, %v868, %v870
        %v872 = vrot.slane %v861, 2
        %v873 = vsel %vm862, %v870, %v872
        %v895 = vunpack.c.l.b16 %v840
        %v896 = vunpack.c.l.b16 %v841
        %v897 = vunpack.c.l.b16 %v842
        %v898 = vunpack.c.l.b16 %v843
        %v899 = vunpack.c.l.b16 %v844
        %v900 = vunpack.c.l.b16 %v845
        %v901 = vunpack.c.l.b16 %v846
        %v902 = vunpack.c.l.b16 %v847
        %v903 = vunpack.c.l.b16 %v848
        %v904 = vunpack.c.l.b16 %v849
        %v905 = vunpack.c.l.b16 %v850
        %v906 = vunpack.c.l.b16 %v851
        %v907 = vunpack.c.l.b16 %v852
        %v908 = vunpack.c.l.b16 %v853
        %v909 = vunpack.c.l.b16 %v854
        %v910 = vunpack.c.l.b16 %v855
        %v911 = vpack.c.b16 %v896, %v895
        %v912 = vpack.c.b16 %v898, %v897
        %v913 = vpack.c.b16 %v900, %v899
        %v914 = vpack.c.b16 %v902, %v901
        %v915 = vpack.c.b16 %v904, %v903
        %v916 = vpack.c.b16 %v906, %v905
        %v917 = vpack.c.b16 %v908, %v907
        %v918 = vpack.c.b16 %v910, %v909
        %927 = vmatprep.subr.bf16.mxu0 0
        %928 = vmatpush1.bf16.msra.mxu0 %v911
        %929 = vmatprep.subr.bf16.mxu0 0
        %930 = vmatpush1.bf16.msra.mxu0 %v912
        %931 = vmatprep.subr.bf16.mxu0 0
        %932 = vmatpush1.bf16.msra.mxu0 %v913
        %933 = vmatprep.subr.bf16.mxu0 0
        %934 = vmatpush1.bf16.msra.mxu0 %v914
        %935 = vmatprep.subr.bf16.mxu0 0
        %936 = vmatpush1.bf16.msra.mxu0 %v915
        %937 = vmatprep.subr.bf16.mxu0 0
        %938 = vmatpush1.bf16.msra.mxu0 %v916
        %939 = vmatprep.subr.bf16.mxu0 0
        %940 = vmatpush1.bf16.msra.mxu0 %v917
        %941 = vmatprep.subr.bf16.mxu0 0
        %942 = vmatpush1.bf16.msra.mxu0 %v918
        %943 = vmatprep.subr.bf16.mxu0 0
        %944 = vmatpush1.bf16.msra.mxu0 0
        %945 = vmatprep.subr.bf16.mxu0 0
        %946 = vmatpush1.bf16.msra.mxu0 0
        %947 = vmatprep.subr.bf16.mxu0 0
        %948 = vmatpush1.bf16.msra.mxu0 0
        %949 = vmatprep.subr.bf16.mxu0 0
        %950 = vmatpush1.bf16.msra.mxu0 0
        %951 = vmatprep.subr.bf16.mxu0 0
        %952 = vmatpush1.bf16.msra.mxu0 0
        %953 = vmatprep.subr.bf16.mxu0 0
        %954 = vmatpush1.bf16.msra.mxu0 0
        %955 = vmatprep.subr.bf16.mxu0 0
        %956 = vmatpush1.bf16.msra.mxu0 0
        %957 = vmatprep.subr.bf16.mxu0 0
        %958 = vmatpush1.bf16.msra.mxu0 0
        %959 = vmatprep.mubr.bf16.mxu0 0
        %960 = vmatmul.mubr.bf16.gmra.mrb[0].mxu0 %v865
        %v961 = vpop.f32.mrb[0].mxu0
        %v962 = vadd.f32 0.0, %v961
        %v963 = vpop.f32.mrb[0].mxu0
        %v964 = vpop.f32.mrb[0].mxu0
        %v965 = vadd.f32 0.0, %v964
        %v966 = vpop.f32.mrb[0].mxu0
        %967 = vmatprep.mubr.bf16.mxu0 0
        %968 = vmatmul.mubr.bf16.gmra.mrb[0].mxu0 %v867
        %v969 = vpop.f32.mrb[0].mxu0
        %v970 = vadd.f32 0.0, %v969
        %v971 = vpop.f32.mrb[0].mxu0
        %v972 = vpop.f32.mrb[0].mxu0
        %v973 = vadd.f32 0.0, %v972
        %v974 = vpop.f32.mrb[0].mxu0
        %975 = vmatprep.mubr.bf16.mxu0 0
        %976 = vmatmul.mubr.bf16.gmra.mrb[0].mxu0 %v869
        %v977 = vpop.f32.mrb[0].mxu0
        %v978 = vadd.f32 0.0, %v977
        %v979 = vpop.f32.mrb[0].mxu0
        %v980 = vpop.f32.mrb[0].mxu0
        %v981 = vadd.f32 0.0, %v980
        %v982 = vpop.f32.mrb[0].mxu0
        %983 = vmatprep.mubr.bf16.mxu0 0
        %984 = vmatmul.mubr.bf16.gmra.mrb[0].mxu0 %v871
        %v985 = vpop.f32.mrb[0].mxu0
        %v986 = vadd.f32 0.0, %v985
        %v987 = vpop.f32.mrb[0].mxu0
        %v988 = vpop.f32.mrb[0].mxu0
        %v989 = vadd.f32 0.0, %v988
        %v990 = vpop.f32.mrb[0].mxu0
        %991 = vmatprep.mubr.bf16.mxu0 0
        %992 = vmatmul.mubr.bf16.gmra.mrb[0].mxu0 %v873
        %v993 = vpop.f32.mrb[0].mxu0
        %v994 = vadd.f32 0.0, %v993
        %v995 = vpop.f32.mrb[0].mxu0
        %v996 = vpop.f32.mrb[0].mxu0
        %v997 = vadd.f32 0.0, %v996
        %v998 = vpop.f32.mrb[0].mxu0
        %999 = vdwg.mxu0
        %v1000 = vld [vmem:[%s305 + $0x8] sm:$0xc]
        %v1001 = vld [vmem:[%s305 + $0xc] sm:$0xf]
        %v1002 = vld [vmem:[%s305 + $0x10] sm:$0xf]
        %v1003 = vld [vmem:[%s305 + $0x14] sm:$0xf]
        %v1004 = vld [vmem:[%s305 + $0x18] sm:$0xf]
        %v1005 = vld [vmem:[%s305 + $0x1c] sm:$0xf]
        %v1006 = vld [vmem:[%s305 + $0x20] sm:$0xf]
        %v1007 = vld [vmem:[%s305 + $0x24] sm:$0xf]
        %v1008 = vld [vmem:[%s305 + $0x28] sm:$0xf]
        %v1009 = vld [vmem:[%s305 + $0x2c] sm:$0xf]
        %v1010 = vld [vmem:[%s305 + $0x30] sm:$0x3]
        %s1011 = scalar_lea.vmem [#allocation5], 384
        %v1012 = vld [vmem:[%s1011] sm:$0xf]
        %v1013 = vld [vmem:[%s1011 + $0x4] sm:$0xf]
        %v1014 = vld [vmem:[%s1011 + $0x8] sm:$0xf]
        %v1015 = vld [vmem:[%s1011 + $0xc] sm:$0xf]
        %v1016 = vld [vmem:[%s1011 + $0x10] sm:$0xf]
        %v1017 = vld [vmem:[%s1011 + $0x14] sm:$0xf]
        %v1018 = vld [vmem:[%s1011 + $0x18] sm:$0xf]
        %v1019 = vld [vmem:[%s1011 + $0x1c] sm:$0xf]
        %v1020 = vld [vmem:[%s1011 + $0x20] sm:$0xf]
        %v1021 = vld [vmem:[%s1011 + $0x24] sm:$0xf]
        %v1022 = vld [vmem:[%s1011 + $0x28] sm:$0xf]
        %v1023 = vld [vmem:[%s1011 + $0x2c] sm:$0xf]
        %v1024 = vld [vmem:[%s1011 + $0x30] sm:$0xf]
        %v1025 = vld [vmem:[%s1011 + $0x34] sm:$0xf]
        %v1026 = vld [vmem:[%s1011 + $0x38] sm:$0xf]
        %v1027 = vld [vmem:[%s1011 + $0x3c] sm:$0xf]
        %v1028 = vld [vmem:[%s305 + $0x30] sm:$0x7]
        %s1029 = scalar_lea.vmem [#allocation5], 448
        %v1030 = vld [vmem:[%s1029] sm:$0xf]
        %v1031 = vld [vmem:[%s1029 + $0x4] sm:$0xf]
        %v1032 = vld [vmem:[%s1029 + $0x8] sm:$0xf]
        %v1033 = vld [vmem:[%s1029 + $0xc] sm:$0xf]
        %v1034 = vld [vmem:[%s1029 + $0x10] sm:$0xf]
        %v1035 = vld [vmem:[%s1029 + $0x14] sm:$0xf]
        %v1036 = vld [vmem:[%s1029 + $0x18] sm:$0xf]
        %v1037 = vld [vmem:[%s1029 + $0x1c] sm:$0xf]
        %v1038 = vld [vmem:[%s1029 + $0x20] sm:$0xf]
        %v1039 = vld [vmem:[%s1029 + $0x24] sm:$0xf]
        %v1040 = vld [vmem:[%s1029 + $0x28] sm:$0xf]
        %v1041 = vld [vmem:[%s1029 + $0x2c] sm:$0xf]
        %v1042 = vld [vmem:[%s1029 + $0x30] sm:$0xf]
        %v1043 = vld [vmem:[%s1029 + $0x34] sm:$0xf]
        %v1044 = vld [vmem:[%s1029 + $0x38] sm:$0xf]
        %v1045 = vld [vmem:[%s1029 + $0x3c] sm:$0xf]
        %v1057 = vunpack.c.l.b16 %v1000
        %v1058 = vunpack.c.l.b16 %v1001
        %v1059 = vunpack.c.l.b16 %v1002
        %v1060 = vunpack.c.l.b16 %v1003
        %v1061 = vunpack.c.l.b16 %v1004
        %v1062 = vunpack.c.l.b16 %v1005
        %v1063 = vunpack.c.l.b16 %v1006
        %v1064 = vunpack.c.l.b16 %v1007
        %v1065 = vunpack.c.l.b16 %v1008
        %v1066 = vunpack.c.l.b16 %v1009
        %v1067 = vunpack.c.l.b16 %v1028
        %v1068 = vpack.c.b16 %v1058, %v1057
        %v1069 = vpack.c.b16 %v1060, %v1059
        %v1070 = vpack.c.b16 %v1062, %v1061
        %v1071 = vpack.c.b16 %v1064, %v1063
        %v1072 = vpack.c.b16 %v1066, %v1065
        %v1073 = vpack.c.b16 %v1067, %v1067
        %vm1074 = vsmask.f32 5376
        %v1076 = vshrl.u32 %v1068, 16
        %v1078 = vrot.slane %v1076, 2
        %v1079 = vshll.u32 %v1068, 16
        %v1081 = vrot.slane %v1079, 3
        %v1082 = vor.u32 %v1078, %v1081
        %v1084 = vshrl.u32 %v1069, 16
        %v1086 = vrot.slane %v1084, 2
        %v1087 = vshll.u32 %v1069, 16
        %v1089 = vrot.slane %v1087, 3
        %v1090 = vor.u32 %v1086, %v1089
        %v1091 = vsel %vm1074, %v1082, %v1090
        %v1093 = vshrl.u32 %v1070, 16
        %v1095 = vrot.slane %v1093, 2
        %v1096 = vshll.u32 %v1070, 16
        %v1098 = vrot.slane %v1096, 3
        %v1099 = vor.u32 %v1095, %v1098
        %v1100 = vsel %vm1074, %v1090, %v1099
        %v1102 = vshrl.u32 %v1071, 16
        %v1104 = vrot.slane %v1102, 2
        %v1105 = vshll.u32 %v1071, 16
        %v1107 = vrot.slane %v1105, 3
        %v1108 = vor.u32 %v1104, %v1107
        %v1109 = vsel %vm1074, %v1099, %v1108
        %v1111 = vshrl.u32 %v1072, 16
        %v1113 = vrot.slane %v1111, 2
        %v1114 = vshll.u32 %v1072, 16
        %v1116 = vrot.slane %v1114, 3
        %v1117 = vor.u32 %v1113, %v1116
        %v1118 = vsel %vm1074, %v1108, %v1117
        %v1120 = vshrl.u32 %v1073, 16
        %v1122 = vrot.slane %v1120, 2
        %v1123 = vshll.u32 %v1073, 16
        %v1125 = vrot.slane %v1123, 3
        %v1126 = vor.u32 %v1122, %v1125
        %v1127 = vsel %vm1074, %v1117, %v1126
        %v1149 = vunpack.c.l.b16 %v1030
        %v1150 = vunpack.c.l.b16 %v1031
        %v1151 = vunpack.c.l.b16 %v1032
        %v1152 = vunpack.c.l.b16 %v1033
        %v1153 = vunpack.c.l.b16 %v1034
        %v1154 = vunpack.c.l.b16 %v1035
        %v1155 = vunpack.c.l.b16 %v1036
        %v1156 = vunpack.c.l.b16 %v1037
        %v1157 = vunpack.c.l.b16 %v1038
        %v1158 = vunpack.c.l.b16 %v1039
        %v1159 = vunpack.c.l.b16 %v1040
        %v1160 = vunpack.c.l.b16 %v1041
        %v1161 = vunpack.c.l.b16 %v1042
        %v1162 = vunpack.c.l.b16 %v1043
        %v1163 = vunpack.c.l.b16 %v1044
        %v1164 = vunpack.c.l.b16 %v1045
        %v1165 = vpack.c.b16 %v1150, %v1149
        %v1166 = vpack.c.b16 %v1152, %v1151
        %v1167 = vpack.c.b16 %v1154, %v1153
        %v1168 = vpack.c.b16 %v1156, %v1155
        %v1169 = vpack.c.b16 %v1158, %v1157
        %v1170 = vpack.c.b16 %v1160, %v1159
        %v1171 = vpack.c.b16 %v1162, %v1161
        %v1172 = vpack.c.b16 %v1164, %v1163
        %1181 = vmatprep.subr.bf16.mxu0 0
        %1182 = vmatpush1.bf16.msra.mxu0 %v1165
        %1183 = vmatprep.subr.bf16.mxu0 0
        %1184 = vmatpush1.bf16.msra.mxu0 %v1166
        %1185 = vmatprep.subr.bf16.mxu0 0
        %1186 = vmatpush1.bf16.msra.mxu0 %v1167
        %1187 = vmatprep.subr.bf16.mxu0 0
        %1188 = vmatpush1.bf16.msra.mxu0 %v1168
        %1189 = vmatprep.subr.bf16.mxu0 0
        %1190 = vmatpush1.bf16.msra.mxu0 %v1169
        %1191 = vmatprep.subr.bf16.mxu0 0
        %1192 = vmatpush1.bf16.msra.mxu0 %v1170
        %1193 = vmatprep.subr.bf16.mxu0 0
        %1194 = vmatpush1.bf16.msra.mxu0 %v1171
        %1195 = vmatprep.subr.bf16.mxu0 0
        %1196 = vmatpush1.bf16.msra.mxu0 %v1172
        %1197 = vmatprep.subr.bf16.mxu0 0
        %1198 = vmatpush1.bf16.msra.mxu0 0
        %1199 = vmatprep.subr.bf16.mxu0 0
        %1200 = vmatpush1.bf16.msra.mxu0 0
        %1201 = vmatprep.subr.bf16.mxu0 0
        %1202 = vmatpush1.bf16.msra.mxu0 0
        %1203 = vmatprep.subr.bf16.mxu0 0
        %1204 = vmatpush1.bf16.msra.mxu0 0
        %1205 = vmatprep.subr.bf16.mxu0 0
        %1206 = vmatpush1.bf16.msra.mxu0 0
        %1207 = vmatprep.subr.bf16.mxu0 0
        %1208 = vmatpush1.bf16.msra.mxu0 0
        %1209 = vmatprep.subr.bf16.mxu0 0
        %1210 = vmatpush1.bf16.msra.mxu0 0
        %1211 = vmatprep.subr.bf16.mxu0 0
        %1212 = vmatpush1.bf16.msra.mxu0 0
        %1213 = vmatprep.mubr.bf16.mxu0 0
        %1214 = vmatmul.mubr.bf16.gmra.mrb[0].mxu0 %v1091
        %v1215 = vpop.f32.mrb[0].mxu0
        %v1216 = vadd.f32 0.0, %v1215
        %v1217 = vpop.f32.mrb[0].mxu0
        %v1218 = vpop.f32.mrb[0].mxu0
        %v1219 = vadd.f32 0.0, %v1218
        %v1220 = vpop.f32.mrb[0].mxu0
        %1221 = vmatprep.mubr.bf16.mxu0 0
        %1222 = vmatmul.mubr.bf16.gmra.mrb[0].mxu0 %v1100
        %v1223 = vpop.f32.mrb[0].mxu0
        %v1224 = vadd.f32 0.0, %v1223
        %v1225 = vpop.f32.mrb[0].mxu0
        %v1226 = vpop.f32.mrb[0].mxu0
        %v1227 = vadd.f32 0.0, %v1226
        %v1228 = vpop.f32.mrb[0].mxu0
        %1229 = vmatprep.mubr.bf16.mxu0 0
        %1230 = vmatmul.mubr.bf16.gmra.mrb[0].mxu0 %v1109
        %v1231 = vpop.f32.mrb[0].mxu0
        %v1232 = vadd.f32 0.0, %v1231
        %v1233 = vpop.f32.mrb[0].mxu0
        %v1234 = vpop.f32.mrb[0].mxu0
        %v1235 = vadd.f32 0.0, %v1234
        %v1236 = vpop.f32.mrb[0].mxu0
        %1237 = vmatprep.mubr.bf16.mxu0 0
        %1238 = vmatmul.mubr.bf16.gmra.mrb[0].mxu0 %v1118
        %v1239 = vpop.f32.mrb[0].mxu0
        %v1240 = vadd.f32 0.0, %v1239
        %v1241 = vpop.f32.mrb[0].mxu0
        %v1242 = vpop.f32.mrb[0].mxu0
        %v1243 = vadd.f32 0.0, %v1242
        %v1244 = vpop.f32.mrb[0].mxu0
        %1245 = vmatprep.mubr.bf16.mxu0 0
        %1246 = vmatmul.mubr.bf16.gmra.mrb[0].mxu0 %v1127
        %v1247 = vpop.f32.mrb[0].mxu0
        %v1248 = vadd.f32 0.0, %v1247
        %v1249 = vpop.f32.mrb[0].mxu0
        %v1250 = vpop.f32.mrb[0].mxu0
        %v1251 = vadd.f32 0.0, %v1250
        %v1252 = vpop.f32.mrb[0].mxu0
        %1253 = vdwg.mxu0
        %v1254 = vld [vmem:[%s305 + $0x8] sm:$0x8]
        %s1255 = scalar_lea.vmem [#allocation5], 512
        %v1256 = vld [vmem:[%s1255] sm:$0xf]
        %v1257 = vld [vmem:[%s1255 + $0x4] sm:$0xf]
        %v1258 = vld [vmem:[%s1255 + $0x8] sm:$0xf]
        %v1259 = vld [vmem:[%s1255 + $0xc] sm:$0xf]
        %v1260 = vld [vmem:[%s1255 + $0x10] sm:$0xf]
        %v1261 = vld [vmem:[%s1255 + $0x14] sm:$0xf]
        %v1262 = vld [vmem:[%s1255 + $0x18] sm:$0xf]
        %v1263 = vld [vmem:[%s1255 + $0x1c] sm:$0xf]
        %v1264 = vld [vmem:[%s1255 + $0x20] sm:$0xf]
        %v1265 = vld [vmem:[%s1255 + $0x24] sm:$0xf]
        %v1266 = vld [vmem:[%s1255 + $0x28] sm:$0xf]
        %v1267 = vld [vmem:[%s1255 + $0x2c] sm:$0xf]
        %v1268 = vld [vmem:[%s1255 + $0x30] sm:$0xf]
        %v1269 = vld [vmem:[%s1255 + $0x34] sm:$0xf]
        %v1270 = vld [vmem:[%s1255 + $0x38] sm:$0xf]
        %v1271 = vld [vmem:[%s1255 + $0x3c] sm:$0xf]
        %v1272 = vld [vmem:[%s322] sm:$0xf]
        %v1273 = vld [vmem:[%s322 + $0x4] sm:$0xf]
        %v1274 = vld [vmem:[%s322 + $0x8] sm:$0xf]
        %v1275 = vld [vmem:[%s322 + $0xc] sm:$0xf]
        %v1276 = vld [vmem:[%s322 + $0x10] sm:$0xf]
        %v1277 = vld [vmem:[%s322 + $0x14] sm:$0xf]
        %v1278 = vld [vmem:[%s322 + $0x18] sm:$0xf]
        %v1279 = vld [vmem:[%s322 + $0x1c] sm:$0xf]
        %v1280 = vld [vmem:[%s322 + $0x20] sm:$0xf]
        %v1281 = vld [vmem:[%s322 + $0x24] sm:$0xf]
        %v1282 = vld [vmem:[#allocation10] sm:$0xf]
        %v1283 = vld [vmem:[#allocation10 + $0x4] sm:$0xf]
        %v1284 = vld [vmem:[#allocation10 + $0x8] sm:$0xf]
        %v1285 = vld [vmem:[#allocation10 + $0xc] sm:$0xf]
        %v1286 = vld [vmem:[#allocation10 + $0x10] sm:$0xf]
        %v1287 = vld [vmem:[#allocation10 + $0x14] sm:$0xf]
        %v1288 = vld [vmem:[#allocation10 + $0x18] sm:$0xf]
        %v1289 = vld [vmem:[#allocation10 + $0x1c] sm:$0xf]
        %v1290 = vld [vmem:[#allocation10 + $0x20] sm:$0xf]
        %v1291 = vld [vmem:[#allocation10 + $0x24] sm:$0xf]
        %v1292 = vld [vmem:[#allocation10 + $0x28] sm:$0xf]
        %v1293 = vld [vmem:[#allocation10 + $0x2c] sm:$0xf]
        %v1294 = vld [vmem:[#allocation10 + $0x30] sm:$0xf]
        %v1295 = vld [vmem:[#allocation10 + $0x34] sm:$0xf]
        %v1296 = vld [vmem:[#allocation10 + $0x38] sm:$0xf]
        %v1297 = vld [vmem:[#allocation10 + $0x3c] sm:$0xf]
        %v1308 = vunpack.c.l.b16 %v1272
        %v1309 = vunpack.c.l.b16 %v1273
        %v1310 = vunpack.c.l.b16 %v1274
        %v1311 = vunpack.c.l.b16 %v1275
        %v1312 = vunpack.c.l.b16 %v1276
        %v1313 = vunpack.c.l.b16 %v1277
        %v1314 = vunpack.c.l.b16 %v1278
        %v1315 = vunpack.c.l.b16 %v1279
        %v1316 = vunpack.c.l.b16 %v1280
        %v1317 = vunpack.c.l.b16 %v1281
        %v1318 = vpack.c.b16 %v1309, %v1308
        %v1319 = vpack.c.b16 %v1311, %v1310
        %v1320 = vpack.c.b16 %v1313, %v1312
        %v1321 = vpack.c.b16 %v1315, %v1314
        %v1322 = vpack.c.b16 %v1317, %v1316
        %v1344 = vunpack.c.l.b16 %v1282
        %v1345 = vunpack.c.l.b16 %v1283
        %v1346 = vunpack.c.l.b16 %v1284
        %v1347 = vunpack.c.l.b16 %v1285
        %v1348 = vunpack.c.l.b16 %v1286
        %v1349 = vunpack.c.l.b16 %v1287
        %v1350 = vunpack.c.l.b16 %v1288
        %v1351 = vunpack.c.l.b16 %v1289
        %v1352 = vunpack.c.l.b16 %v1290
        %v1353 = vunpack.c.l.b16 %v1291
        %v1354 = vunpack.c.l.b16 %v1292
        %v1355 = vunpack.c.l.b16 %v1293
        %v1356 = vunpack.c.l.b16 %v1294
        %v1357 = vunpack.c.l.b16 %v1295
        %v1358 = vunpack.c.l.b16 %v1296
        %v1359 = vunpack.c.l.b16 %v1297
        %v1360 = vpack.c.b16 %v1345, %v1344
        %v1361 = vpack.c.b16 %v1347, %v1346
        %v1362 = vpack.c.b16 %v1349, %v1348
        %v1363 = vpack.c.b16 %v1351, %v1350
        %v1364 = vpack.c.b16 %v1353, %v1352
        %v1365 = vpack.c.b16 %v1355, %v1354
        %v1366 = vpack.c.b16 %v1357, %v1356
        %v1367 = vpack.c.b16 %v1359, %v1358
        %1376 = vmatprep.subr.bf16.mxu0 0
        %1377 = vmatpush1.bf16.msra.mxu0 %v1360
        %1378 = vmatprep.subr.bf16.mxu0 0
        %1379 = vmatpush1.bf16.msra.mxu0 %v1361
        %1380 = vmatprep.subr.bf16.mxu0 0
        %1381 = vmatpush1.bf16.msra.mxu0 %v1362
        %1382 = vmatprep.subr.bf16.mxu0 0
        %1383 = vmatpush1.bf16.msra.mxu0 %v1363
        %1384 = vmatprep.subr.bf16.mxu0 0
        %1385 = vmatpush1.bf16.msra.mxu0 %v1364
        %1386 = vmatprep.subr.bf16.mxu0 0
        %1387 = vmatpush1.bf16.msra.mxu0 %v1365
        %1388 = vmatprep.subr.bf16.mxu0 0
        %1389 = vmatpush1.bf16.msra.mxu0 %v1366
        %1390 = vmatprep.subr.bf16.mxu0 0
        %1391 = vmatpush1.bf16.msra.mxu0 %v1367
        %1392 = vmatprep.subr.bf16.mxu0 0
        %1393 = vmatpush1.bf16.msra.mxu0 0
        %1394 = vmatprep.subr.bf16.mxu0 0
        %1395 = vmatpush1.bf16.msra.mxu0 0
        %1396 = vmatprep.subr.bf16.mxu0 0
        %1397 = vmatpush1.bf16.msra.mxu0 0
        %1398 = vmatprep.subr.bf16.mxu0 0
        %1399 = vmatpush1.bf16.msra.mxu0 0
        %1400 = vmatprep.subr.bf16.mxu0 0
        %1401 = vmatpush1.bf16.msra.mxu0 0
        %1402 = vmatprep.subr.bf16.mxu0 0
        %1403 = vmatpush1.bf16.msra.mxu0 0
        %1404 = vmatprep.subr.bf16.mxu0 0
        %1405 = vmatpush1.bf16.msra.mxu0 0
        %1406 = vmatprep.subr.bf16.mxu0 0
        %1407 = vmatpush1.bf16.msra.mxu0 0
        %1408 = vmatprep.mubr.bf16.mxu0 0
        %1409 = vmatmul.mubr.bf16.gmra.mrb[0].mxu0 %v1318
        %v1410 = vpop.f32.mrb[0].mxu0
        %v1411 = vadd.f32 0.0, %v1410
        %v1412 = vpop.f32.mrb[0].mxu0
        %v1413 = vpop.f32.mrb[0].mxu0
        %v1414 = vadd.f32 0.0, %v1413
        %v1415 = vpop.f32.mrb[0].mxu0
        %1416 = vmatprep.mubr.bf16.mxu0 0
        %1417 = vmatmul.mubr.bf16.gmra.mrb[0].mxu0 %v1319
        %v1418 = vpop.f32.mrb[0].mxu0
        %v1419 = vadd.f32 0.0, %v1418
        %v1420 = vpop.f32.mrb[0].mxu0
        %v1421 = vpop.f32.mrb[0].mxu0
        %v1422 = vadd.f32 0.0, %v1421
        %v1423 = vpop.f32.mrb[0].mxu0
        %1424 = vmatprep.mubr.bf16.mxu0 0
        %1425 = vmatmul.mubr.bf16.gmra.mrb[0].mxu0 %v1320
        %v1426 = vpop.f32.mrb[0].mxu0
        %v1427 = vadd.f32 0.0, %v1426
        %v1428 = vpop.f32.mrb[0].mxu0
        %v1429 = vpop.f32.mrb[0].mxu0
        %v1430 = vadd.f32 0.0, %v1429
        %v1431 = vpop.f32.mrb[0].mxu0
        %1432 = vmatprep.mubr.bf16.mxu0 0
        %1433 = vmatmul.mubr.bf16.gmra.mrb[0].mxu0 %v1321
        %v1434 = vpop.f32.mrb[0].mxu0
        %v1435 = vadd.f32 0.0, %v1434
        %v1436 = vpop.f32.mrb[0].mxu0
        %v1437 = vpop.f32.mrb[0].mxu0
        %v1438 = vadd.f32 0.0, %v1437
        %v1439 = vpop.f32.mrb[0].mxu0
        %1440 = vmatprep.mubr.bf16.mxu0 0
        %1441 = vmatmul.mubr.bf16.gmra.mrb[0].mxu0 %v1322
        %v1442 = vpop.f32.mrb[0].mxu0
        %v1443 = vadd.f32 0.0, %v1442
        %v1444 = vpop.f32.mrb[0].mxu0
        %v1445 = vpop.f32.mrb[0].mxu0
        %v1446 = vadd.f32 0.0, %v1445
        %v1447 = vpop.f32.mrb[0].mxu0
        %1448 = vdwg.mxu0
        %v1449 = vld [vmem:[#allocation11] sm:$0x1]
        %v1451 = vlaneseq
        %v1452 = vshrl.u32 %v1451, 7
        %v1453 = vsub.s32 0, %v1452
        %v1454 = vrot.slane %v1449, %v1453
        %v1456 = vld [vmem:[#allocation7] sm:$0x1]
        %v1458 = vlaneseq
        %v1459 = vshrl.u32 %v1458, 7
        %v1460 = vsub.s32 0, %v1459
        %v1461 = vrot.slane %v1456, %v1460
        %v1484 = vunpack.c.l.b16 %v375
        %v1485 = vunpack.c.l.b16 %v376
        %v1486 = vunpack.c.l.b16 %v377
        %v1487 = vunpack.c.l.b16 %v378
        %v1488 = vunpack.c.l.b16 %v379
        %v1489 = vunpack.c.l.b16 %v380
        %v1490 = vunpack.c.l.b16 %v381
        %v1491 = vunpack.c.l.b16 %v382
        %v1492 = vunpack.c.l.b16 %v383
        %v1493 = vunpack.c.l.b16 %v384
        %v1494 = vunpack.c.l.b16 %v385
        %v1495 = vunpack.c.l.b16 %v386
        %v1496 = vunpack.c.l.b16 %v387
        %v1497 = vunpack.c.l.b16 %v388
        %v1498 = vunpack.c.l.b16 %v389
        %v1499 = vunpack.c.l.b16 %v390
        %v1500 = vpack.c.b16 %v1485, %v1484
        %v1501 = vpack.c.b16 %v1487, %v1486
        %v1502 = vpack.c.b16 %v1489, %v1488
        %v1503 = vpack.c.b16 %v1491, %v1490
        %v1504 = vpack.c.b16 %v1493, %v1492
        %v1505 = vpack.c.b16 %v1495, %v1494
        %v1506 = vpack.c.b16 %v1497, %v1496
        %v1507 = vpack.c.b16 %v1499, %v1498
        %1516 = vmatprep.subr.bf16.mxu0 0
        %1517 = vmatpush1.bf16.msra.mxu0 %v1500
        %1518 = vmatprep.subr.bf16.mxu0 0
        %1519 = vmatpush1.bf16.msra.mxu0 %v1501
        %1520 = vmatprep.subr.bf16.mxu0 0
        %1521 = vmatpush1.bf16.msra.mxu0 %v1502
        %1522 = vmatprep.subr.bf16.mxu0 0
        %1523 = vmatpush1.bf16.msra.mxu0 %v1503
        %1524 = vmatprep.subr.bf16.mxu0 0
        %1525 = vmatpush1.bf16.msra.mxu0 %v1504
        %1526 = vmatprep.subr.bf16.mxu0 0
        %1527 = vmatpush1.bf16.msra.mxu0 %v1505
        %1528 = vmatprep.subr.bf16.mxu0 0
        %1529 = vmatpush1.bf16.msra.mxu0 %v1506
        %1530 = vmatprep.subr.bf16.mxu0 0
        %1531 = vmatpush1.bf16.msra.mxu0 %v1507
        %1532 = vmatprep.subr.bf16.mxu0 0
        %1533 = vmatpush1.bf16.msra.mxu0 0
        %1534 = vmatprep.subr.bf16.mxu0 0
        %1535 = vmatpush1.bf16.msra.mxu0 0
        %1536 = vmatprep.subr.bf16.mxu0 0
        %1537 = vmatpush1.bf16.msra.mxu0 0
        %1538 = vmatprep.subr.bf16.mxu0 0
        %1539 = vmatpush1.bf16.msra.mxu0 0
        %1540 = vmatprep.subr.bf16.mxu0 0
        %1541 = vmatpush1.bf16.msra.mxu0 0
        %1542 = vmatprep.subr.bf16.mxu0 0
        %1543 = vmatpush1.bf16.msra.mxu0 0
        %1544 = vmatprep.subr.bf16.mxu0 0
        %1545 = vmatpush1.bf16.msra.mxu0 0
        %1546 = vmatprep.subr.bf16.mxu0 0
        %1547 = vmatpush1.bf16.msra.mxu0 0
        %1548 = vmatprep.mubr.bf16.mxu0 0
        %1549 = vmatmul.mubr.bf16.gmra.mrb[0].mxu0 %v431
        %v1550 = vpop.f32.mrb[0].mxu0
        %v1551 = vadd.f32 %v570, %v1550
        %v1552 = vpop.f32.mrb[0].mxu0
        %v1553 = vpop.f32.mrb[0].mxu0
        %v1554 = vadd.f32 %v573, %v1553
        %v1555 = vpop.f32.mrb[0].mxu0
        %1556 = vmatprep.mubr.bf16.mxu0 0
        %1557 = vmatmul.mubr.bf16.gmra.mrb[0].mxu0 %v432
        %v1558 = vpop.f32.mrb[0].mxu0
        %v1559 = vadd.f32 %v578, %v1558
        %v1560 = vpop.f32.mrb[0].mxu0
        %v1561 = vpop.f32.mrb[0].mxu0
        %v1562 = vadd.f32 %v581, %v1561
        %v1563 = vpop.f32.mrb[0].mxu0
        %1564 = vmatprep.mubr.bf16.mxu0 0
        %1565 = vmatmul.mubr.bf16.gmra.mrb[0].mxu0 %v433
        %v1566 = vpop.f32.mrb[0].mxu0
        %v1567 = vadd.f32 %v586, %v1566
        %v1568 = vpop.f32.mrb[0].mxu0
        %v1569 = vpop.f32.mrb[0].mxu0
        %v1570 = vadd.f32 %v589, %v1569
        %v1571 = vpop.f32.mrb[0].mxu0
        %1572 = vmatprep.mubr.bf16.mxu0 0
        %1573 = vmatmul.mubr.bf16.gmra.mrb[0].mxu0 %v434
        %v1574 = vpop.f32.mrb[0].mxu0
        %v1575 = vadd.f32 %v594, %v1574
        %v1576 = vpop.f32.mrb[0].mxu0
        %v1577 = vpop.f32.mrb[0].mxu0
        %v1578 = vadd.f32 %v597, %v1577
        %v1579 = vpop.f32.mrb[0].mxu0
        %1580 = vmatprep.mubr.bf16.mxu0 0
        %1581 = vmatmul.mubr.bf16.gmra.mrb[0].mxu0 %v435
        %v1582 = vpop.f32.mrb[0].mxu0
        %v1583 = vadd.f32 %v602, %v1582
        %v1584 = vpop.f32.mrb[0].mxu0
        %v1585 = vpop.f32.mrb[0].mxu0
        %v1586 = vadd.f32 %v605, %v1585
        %v1587 = vpop.f32.mrb[0].mxu0
        %1588 = vdwg.mxu0
        %v1590 = vunpack.c.l.b16 %v608
        %v1591 = vpack.c.b16 %v421, %v1590
        %v1592 = vrot.slane %v1591, 1
        %v1593 = vrot.slane %v432, 1
        %v1594 = vsel %vm682, %v1592, %v1593
        %v1595 = vrot.slane %v433, 1
        %v1596 = vsel %vm682, %v1593, %v1595
        %v1597 = vrot.slane %v434, 1
        %v1598 = vsel %vm682, %v1595, %v1597
        %v1599 = vrot.slane %v435, 1
        %v1600 = vsel %vm682, %v1597, %v1599
        %v1601 = vrot.slane %v436, 1
        %v1602 = vsel %vm682, %v1599, %v1601
        %v1624 = vunpack.c.l.b16 %v610
        %v1625 = vunpack.c.l.b16 %v611
        %v1626 = vunpack.c.l.b16 %v612
        %v1627 = vunpack.c.l.b16 %v613
        %v1628 = vunpack.c.l.b16 %v614
        %v1629 = vunpack.c.l.b16 %v615
        %v1630 = vunpack.c.l.b16 %v616
        %v1631 = vunpack.c.l.b16 %v617
        %v1632 = vunpack.c.l.b16 %v618
        %v1633 = vunpack.c.l.b16 %v619
        %v1634 = vunpack.c.l.b16 %v620
        %v1635 = vunpack.c.l.b16 %v621
        %v1636 = vunpack.c.l.b16 %v622
        %v1637 = vunpack.c.l.b16 %v623
        %v1638 = vunpack.c.l.b16 %v624
        %v1639 = vunpack.c.l.b16 %v625
        %v1640 = vpack.c.b16 %v1625, %v1624
        %v1641 = vpack.c.b16 %v1627, %v1626
        %v1642 = vpack.c.b16 %v1629, %v1628
        %v1643 = vpack.c.b16 %v1631, %v1630
        %v1644 = vpack.c.b16 %v1633, %v1632
        %v1645 = vpack.c.b16 %v1635, %v1634
        %v1646 = vpack.c.b16 %v1637, %v1636
        %v1647 = vpack.c.b16 %v1639, %v1638
        %1656 = vmatprep.subr.bf16.mxu0 0
        %1657 = vmatpush1.bf16.msra.mxu0 %v1640
        %1658 = vmatprep.subr.bf16.mxu0 0
        %1659 = vmatpush1.bf16.msra.mxu0 %v1641
        %1660 = vmatprep.subr.bf16.mxu0 0
        %1661 = vmatpush1.bf16.msra.mxu0 %v1642
        %1662 = vmatprep.subr.bf16.mxu0 0
        %1663 = vmatpush1.bf16.msra.mxu0 %v1643
        %1664 = vmatprep.subr.bf16.mxu0 0
        %1665 = vmatpush1.bf16.msra.mxu0 %v1644
        %1666 = vmatprep.subr.bf16.mxu0 0
        %1667 = vmatpush1.bf16.msra.mxu0 %v1645
        %1668 = vmatprep.subr.bf16.mxu0 0
        %1669 = vmatpush1.bf16.msra.mxu0 %v1646
        %1670 = vmatprep.subr.bf16.mxu0 0
        %1671 = vmatpush1.bf16.msra.mxu0 %v1647
        %1672 = vmatprep.subr.bf16.mxu0 0
        %1673 = vmatpush1.bf16.msra.mxu0 0
        %1674 = vmatprep.subr.bf16.mxu0 0
        %1675 = vmatpush1.bf16.msra.mxu0 0
        %1676 = vmatprep.subr.bf16.mxu0 0
        %1677 = vmatpush1.bf16.msra.mxu0 0
        %1678 = vmatprep.subr.bf16.mxu0 0
        %1679 = vmatpush1.bf16.msra.mxu0 0
        %1680 = vmatprep.subr.bf16.mxu0 0
        %1681 = vmatpush1.bf16.msra.mxu0 0
        %1682 = vmatprep.subr.bf16.mxu0 0
        %1683 = vmatpush1.bf16.msra.mxu0 0
        %1684 = vmatprep.subr.bf16.mxu0 0
        %1685 = vmatpush1.bf16.msra.mxu0 0
        %1686 = vmatprep.subr.bf16.mxu0 0
        %1687 = vmatpush1.bf16.msra.mxu0 0
        %1688 = vmatprep.mubr.bf16.mxu0 0
        %1689 = vmatmul.mubr.bf16.gmra.mrb[0].mxu0 %v1594
        %v1690 = vpop.f32.mrb[0].mxu0
        %v1691 = vadd.f32 %v782, %v1690
        %v1692 = vpop.f32.mrb[0].mxu0
        %v1693 = vpop.f32.mrb[0].mxu0
        %v1694 = vadd.f32 %v785, %v1693
        %v1695 = vpop.f32.mrb[0].mxu0
        %1696 = vmatprep.mubr.bf16.mxu0 0
        %1697 = vmatmul.mubr.bf16.gmra.mrb[0].mxu0 %v1596
        %v1698 = vpop.f32.mrb[0].mxu0
        %v1699 = vadd.f32 %v790, %v1698
        %v1700 = vpop.f32.mrb[0].mxu0
        %v1701 = vpop.f32.mrb[0].mxu0
        %v1702 = vadd.f32 %v793, %v1701
        %v1703 = vpop.f32.mrb[0].mxu0
        %1704 = vmatprep.mubr.bf16.mxu0 0
        %1705 = vmatmul.mubr.bf16.gmra.mrb[0].mxu0 %v1598
        %v1706 = vpop.f32.mrb[0].mxu0
        %v1707 = vadd.f32 %v798, %v1706
        %v1708 = vpop.f32.mrb[0].mxu0
        %v1709 = vpop.f32.mrb[0].mxu0
        %v1710 = vadd.f32 %v801, %v1709
        %v1711 = vpop.f32.mrb[0].mxu0
        %1712 = vmatprep.mubr.bf16.mxu0 0
        %1713 = vmatmul.mubr.bf16.gmra.mrb[0].mxu0 %v1600
        %v1714 = vpop.f32.mrb[0].mxu0
        %v1715 = vadd.f32 %v806, %v1714
        %v1716 = vpop.f32.mrb[0].mxu0
        %v1717 = vpop.f32.mrb[0].mxu0
        %v1718 = vadd.f32 %v809, %v1717
        %v1719 = vpop.f32.mrb[0].mxu0
        %1720 = vmatprep.mubr.bf16.mxu0 0
        %1721 = vmatmul.mubr.bf16.gmra.mrb[0].mxu0 %v1602
        %v1722 = vpop.f32.mrb[0].mxu0
        %v1723 = vadd.f32 %v814, %v1722
        %v1724 = vpop.f32.mrb[0].mxu0
        %v1725 = vpop.f32.mrb[0].mxu0
        %v1726 = vadd.f32 %v817, %v1725
        %v1727 = vpop.f32.mrb[0].mxu0
        %1728 = vdwg.mxu0
        %vm1729 = vsmask.f32 6400
        %v1731 = vshrl.u32 %v676, 16
        %v1733 = vrot.slane %v1731, 1
        %v1734 = vshll.u32 %v676, 16
        %v1736 = vrot.slane %v1734, 2
        %v1737 = vor.u32 %v1733, %v1736
        %v1739 = vshrl.u32 %v677, 16
        %v1741 = vrot.slane %v1739, 1
        %v1742 = vshll.u32 %v677, 16
        %v1744 = vrot.slane %v1742, 2
        %v1745 = vor.u32 %v1741, %v1744
        %v1746 = vsel %vm1729, %v1737, %v1745
        %v1748 = vshrl.u32 %v678, 16
        %v1750 = vrot.slane %v1748, 1
        %v1751 = vshll.u32 %v678, 16
        %v1753 = vrot.slane %v1751, 2
        %v1754 = vor.u32 %v1750, %v1753
        %v1755 = vsel %vm1729, %v1745, %v1754
        %v1757 = vshrl.u32 %v679, 16
        %v1759 = vrot.slane %v1757, 1
        %v1760 = vshll.u32 %v679, 16
        %v1762 = vrot.slane %v1760, 2
        %v1763 = vor.u32 %v1759, %v1762
        %v1764 = vsel %vm1729, %v1754, %v1763
        %v1766 = vshrl.u32 %v680, 16
        %v1768 = vrot.slane %v1766, 1
        %v1769 = vshll.u32 %v680, 16
        %v1771 = vrot.slane %v1769, 2
        %v1772 = vor.u32 %v1768, %v1771
        %v1773 = vsel %vm1729, %v1763, %v1772
        %v1775 = vshrl.u32 %v861, 16
        %v1777 = vrot.slane %v1775, 1
        %v1778 = vshll.u32 %v861, 16
        %v1780 = vrot.slane %v1778, 2
        %v1781 = vor.u32 %v1777, %v1780
        %v1782 = vsel %vm1729, %v1772, %v1781
        %v1804 = vunpack.c.l.b16 %v822
        %v1805 = vunpack.c.l.b16 %v823
        %v1806 = vunpack.c.l.b16 %v824
        %v1807 = vunpack.c.l.b16 %v825
        %v1808 = vunpack.c.l.b16 %v826
        %v1809 = vunpack.c.l.b16 %v827
        %v1810 = vunpack.c.l.b16 %v828
        %v1811 = vunpack.c.l.b16 %v829
        %v1812 = vunpack.c.l.b16 %v830
        %v1813 = vunpack.c.l.b16 %v831
        %v1814 = vunpack.c.l.b16 %v832
        %v1815 = vunpack.c.l.b16 %v833
        %v1816 = vunpack.c.l.b16 %v834
        %v1817 = vunpack.c.l.b16 %v835
        %v1818 = vunpack.c.l.b16 %v836
        %v1819 = vunpack.c.l.b16 %v837
        %v1820 = vpack.c.b16 %v1805, %v1804
        %v1821 = vpack.c.b16 %v1807, %v1806
        %v1822 = vpack.c.b16 %v1809, %v1808
        %v1823 = vpack.c.b16 %v1811, %v1810
        %v1824 = vpack.c.b16 %v1813, %v1812
        %v1825 = vpack.c.b16 %v1815, %v1814
        %v1826 = vpack.c.b16 %v1817, %v1816
        %v1827 = vpack.c.b16 %v1819, %v1818
        %1836 = vmatprep.subr.bf16.mxu0 0
        %1837 = vmatpush1.bf16.msra.mxu0 %v1820
        %1838 = vmatprep.subr.bf16.mxu0 0
        %1839 = vmatpush1.bf16.msra.mxu0 %v1821
        %1840 = vmatprep.subr.bf16.mxu0 0
        %1841 = vmatpush1.bf16.msra.mxu0 %v1822
        %1842 = vmatprep.subr.bf16.mxu0 0
        %1843 = vmatpush1.bf16.msra.mxu0 %v1823
        %1844 = vmatprep.subr.bf16.mxu0 0
        %1845 = vmatpush1.bf16.msra.mxu0 %v1824
        %1846 = vmatprep.subr.bf16.mxu0 0
        %1847 = vmatpush1.bf16.msra.mxu0 %v1825
        %1848 = vmatprep.subr.bf16.mxu0 0
        %1849 = vmatpush1.bf16.msra.mxu0 %v1826
        %1850 = vmatprep.subr.bf16.mxu0 0
        %1851 = vmatpush1.bf16.msra.mxu0 %v1827
        %1852 = vmatprep.subr.bf16.mxu0 0
        %1853 = vmatpush1.bf16.msra.mxu0 0
        %1854 = vmatprep.subr.bf16.mxu0 0
        %1855 = vmatpush1.bf16.msra.mxu0 0
        %1856 = vmatprep.subr.bf16.mxu0 0
        %1857 = vmatpush1.bf16.msra.mxu0 0
        %1858 = vmatprep.subr.bf16.mxu0 0
        %1859 = vmatpush1.bf16.msra.mxu0 0
        %1860 = vmatprep.subr.bf16.mxu0 0
        %1861 = vmatpush1.bf16.msra.mxu0 0
        %1862 = vmatprep.subr.bf16.mxu0 0
        %1863 = vmatpush1.bf16.msra.mxu0 0
        %1864 = vmatprep.subr.bf16.mxu0 0
        %1865 = vmatpush1.bf16.msra.mxu0 0
        %1866 = vmatprep.subr.bf16.mxu0 0
        %1867 = vmatpush1.bf16.msra.mxu0 0
        %1868 = vmatprep.mubr.bf16.mxu0 0
        %1869 = vmatmul.mubr.bf16.gmra.mrb[0].mxu0 %v1746
        %v1870 = vpop.f32.mrb[0].mxu0
        %v1871 = vadd.f32 %v962, %v1870
        %v1872 = vpop.f32.mrb[0].mxu0
        %v1873 = vpop.f32.mrb[0].mxu0
        %v1874 = vadd.f32 %v965, %v1873
        %v1875 = vpop.f32.mrb[0].mxu0
        %1876 = vmatprep.mubr.bf16.mxu0 0
        %1877 = vmatmul.mubr.bf16.gmra.mrb[0].mxu0 %v1755
        %v1878 = vpop.f32.mrb[0].mxu0
        %v1879 = vadd.f32 %v970, %v1878
        %v1880 = vpop.f32.mrb[0].mxu0
        %v1881 = vpop.f32.mrb[0].mxu0
        %v1882 = vadd.f32 %v973, %v1881
        %v1883 = vpop.f32.mrb[0].mxu0
        %1884 = vmatprep.mubr.bf16.mxu0 0
        %1885 = vmatmul.mubr.bf16.gmra.mrb[0].mxu0 %v1764
        %v1886 = vpop.f32.mrb[0].mxu0
        %v1887 = vadd.f32 %v978, %v1886
        %v1888 = vpop.f32.mrb[0].mxu0
        %v1889 = vpop.f32.mrb[0].mxu0
        %v1890 = vadd.f32 %v981, %v1889
        %v1891 = vpop.f32.mrb[0].mxu0
        %1892 = vmatprep.mubr.bf16.mxu0 0
        %1893 = vmatmul.mubr.bf16.gmra.mrb[0].mxu0 %v1773
        %v1894 = vpop.f32.mrb[0].mxu0
        %v1895 = vadd.f32 %v986, %v1894
        %v1896 = vpop.f32.mrb[0].mxu0
        %v1897 = vpop.f32.mrb[0].mxu0
        %v1898 = vadd.f32 %v989, %v1897
        %v1899 = vpop.f32.mrb[0].mxu0
        %1900 = vmatprep.mubr.bf16.mxu0 0
        %1901 = vmatmul.mubr.bf16.gmra.mrb[0].mxu0 %v1782
        %v1902 = vpop.f32.mrb[0].mxu0
        %v1903 = vadd.f32 %v994, %v1902
        %v1904 = vpop.f32.mrb[0].mxu0
        %v1905 = vpop.f32.mrb[0].mxu0
        %v1906 = vadd.f32 %v997, %v1905
        %v1907 = vpop.f32.mrb[0].mxu0
        %1908 = vdwg.mxu0
        %v1910 = vunpack.c.l.b16 %v1010
        %v1911 = vpack.c.b16 %v1910, %v1910
        %v1912 = vrot.slane %v1068, 2
        %v1913 = vrot.slane %v1069, 2
        %v1914 = vsel %vm862, %v1912, %v1913
        %v1915 = vrot.slane %v1070, 2
        %v1916 = vsel %vm862, %v1913, %v1915
        %v1917 = vrot.slane %v1071, 2
        %v1918 = vsel %vm862, %v1915, %v1917
        %v1919 = vrot.slane %v1072, 2
        %v1920 = vsel %vm862, %v1917, %v1919
        %v1921 = vrot.slane %v1911, 2
        %v1922 = vsel %vm862, %v1919, %v1921
        %v1944 = vunpack.c.l.b16 %v1012
        %v1945 = vunpack.c.l.b16 %v1013
        %v1946 = vunpack.c.l.b16 %v1014
        %v1947 = vunpack.c.l.b16 %v1015
        %v1948 = vunpack.c.l.b16 %v1016
        %v1949 = vunpack.c.l.b16 %v1017
        %v1950 = vunpack.c.l.b16 %v1018
        %v1951 = vunpack.c.l.b16 %v1019
        %v1952 = vunpack.c.l.b16 %v1020
        %v1953 = vunpack.c.l.b16 %v1021
        %v1954 = vunpack.c.l.b16 %v1022
        %v1955 = vunpack.c.l.b16 %v1023
        %v1956 = vunpack.c.l.b16 %v1024
        %v1957 = vunpack.c.l.b16 %v1025
        %v1958 = vunpack.c.l.b16 %v1026
        %v1959 = vunpack.c.l.b16 %v1027
        %v1960 = vpack.c.b16 %v1945, %v1944
        %v1961 = vpack.c.b16 %v1947, %v1946
        %v1962 = vpack.c.b16 %v1949, %v1948
        %v1963 = vpack.c.b16 %v1951, %v1950
        %v1964 = vpack.c.b16 %v1953, %v1952
        %v1965 = vpack.c.b16 %v1955, %v1954
        %v1966 = vpack.c.b16 %v1957, %v1956
        %v1967 = vpack.c.b16 %v1959, %v1958
        %1976 = vmatprep.subr.bf16.mxu0 0
        %1977 = vmatpush1.bf16.msra.mxu0 %v1960
        %1978 = vmatprep.subr.bf16.mxu0 0
        %1979 = vmatpush1.bf16.msra.mxu0 %v1961
        %1980 = vmatprep.subr.bf16.mxu0 0
        %1981 = vmatpush1.bf16.msra.mxu0 %v1962
        %1982 = vmatprep.subr.bf16.mxu0 0
        %1983 = vmatpush1.bf16.msra.mxu0 %v1963
        %1984 = vmatprep.subr.bf16.mxu0 0
        %1985 = vmatpush1.bf16.msra.mxu0 %v1964
        %1986 = vmatprep.subr.bf16.mxu0 0
        %1987 = vmatpush1.bf16.msra.mxu0 %v1965
        %1988 = vmatprep.subr.bf16.mxu0 0
        %1989 = vmatpush1.bf16.msra.mxu0 %v1966
        %1990 = vmatprep.subr.bf16.mxu0 0
        %1991 = vmatpush1.bf16.msra.mxu0 %v1967
        %1992 = vmatprep.subr.bf16.mxu0 0
        %1993 = vmatpush1.bf16.msra.mxu0 0
        %1994 = vmatprep.subr.bf16.mxu0 0
        %1995 = vmatpush1.bf16.msra.mxu0 0
        %1996 = vmatprep.subr.bf16.mxu0 0
        %1997 = vmatpush1.bf16.msra.mxu0 0
        %1998 = vmatprep.subr.bf16.mxu0 0
        %1999 = vmatpush1.bf16.msra.mxu0 0
        %2000 = vmatprep.subr.bf16.mxu0 0
        %2001 = vmatpush1.bf16.msra.mxu0 0
        %2002 = vmatprep.subr.bf16.mxu0 0
        %2003 = vmatpush1.bf16.msra.mxu0 0
        %2004 = vmatprep.subr.bf16.mxu0 0
        %2005 = vmatpush1.bf16.msra.mxu0 0
        %2006 = vmatprep.subr.bf16.mxu0 0
        %2007 = vmatpush1.bf16.msra.mxu0 0
        %2008 = vmatprep.mubr.bf16.mxu0 0
        %2009 = vmatmul.mubr.bf16.gmra.mrb[0].mxu0 %v1914
        %v2010 = vpop.f32.mrb[0].mxu0
        %v2011 = vadd.f32 %v1216, %v2010
        %v2012 = vpop.f32.mrb[0].mxu0
        %v2013 = vpop.f32.mrb[0].mxu0
        %v2014 = vadd.f32 %v1219, %v2013
        %v2015 = vpop.f32.mrb[0].mxu0
        %2016 = vmatprep.mubr.bf16.mxu0 0
        %2017 = vmatmul.mubr.bf16.gmra.mrb[0].mxu0 %v1916
        %v2018 = vpop.f32.mrb[0].mxu0
        %v2019 = vadd.f32 %v1224, %v2018
        %v2020 = vpop.f32.mrb[0].mxu0
        %v2021 = vpop.f32.mrb[0].mxu0
        %v2022 = vadd.f32 %v1227, %v2021
        %v2023 = vpop.f32.mrb[0].mxu0
        %2024 = vmatprep.mubr.bf16.mxu0 0
        %2025 = vmatmul.mubr.bf16.gmra.mrb[0].mxu0 %v1918
        %v2026 = vpop.f32.mrb[0].mxu0
        %v2027 = vadd.f32 %v1232, %v2026
        %v2028 = vpop.f32.mrb[0].mxu0
        %v2029 = vpop.f32.mrb[0].mxu0
        %v2030 = vadd.f32 %v1235, %v2029
        %v2031 = vpop.f32.mrb[0].mxu0
        %2032 = vmatprep.mubr.bf16.mxu0 0
        %2033 = vmatmul.mubr.bf16.gmra.mrb[0].mxu0 %v1920
        %v2034 = vpop.f32.mrb[0].mxu0
        %v2035 = vadd.f32 %v1240, %v2034
        %v2036 = vpop.f32.mrb[0].mxu0
        %v2037 = vpop.f32.mrb[0].mxu0
        %v2038 = vadd.f32 %v1243, %v2037
        %v2039 = vpop.f32.mrb[0].mxu0
        %2040 = vmatprep.mubr.bf16.mxu0 0
        %2041 = vmatmul.mubr.bf16.gmra.mrb[0].mxu0 %v1922
        %v2042 = vpop.f32.mrb[0].mxu0
        %v2043 = vadd.f32 %v1248, %v2042
        %v2044 = vpop.f32.mrb[0].mxu0
        %v2045 = vpop.f32.mrb[0].mxu0
        %v2046 = vadd.f32 %v1251, %v2045
        %v2047 = vpop.f32.mrb[0].mxu0
        %2048 = vdwg.mxu0
        %v2050 = vunpack.c.l.b16 %v1254
        %v2051 = vpack.c.b16 %v1058, %v2050
        %vm2052 = vcmask 1044480
        %v2053 = vrot.slane %v2051, 3
        %v2054 = vrot.slane %v1069, 3
        %v2055 = vsel %vm2052, %v2053, %v2054
        %v2056 = vrot.slane %v1070, 3
        %v2057 = vsel %vm2052, %v2054, %v2056
        %v2058 = vrot.slane %v1071, 3
        %v2059 = vsel %vm2052, %v2056, %v2058
        %v2060 = vrot.slane %v1072, 3
        %v2061 = vsel %vm2052, %v2058, %v2060
        %v2062 = vrot.slane %v1073, 3
        %v2063 = vsel %vm2052, %v2060, %v2062
        %v2085 = vunpack.c.l.b16 %v1256
        %v2086 = vunpack.c.l.b16 %v1257
        %v2087 = vunpack.c.l.b16 %v1258
        %v2088 = vunpack.c.l.b16 %v1259
        %v2089 = vunpack.c.l.b16 %v1260
        %v2090 = vunpack.c.l.b16 %v1261
        %v2091 = vunpack.c.l.b16 %v1262
        %v2092 = vunpack.c.l.b16 %v1263
        %v2093 = vunpack.c.l.b16 %v1264
        %v2094 = vunpack.c.l.b16 %v1265
        %v2095 = vunpack.c.l.b16 %v1266
        %v2096 = vunpack.c.l.b16 %v1267
        %v2097 = vunpack.c.l.b16 %v1268
        %v2098 = vunpack.c.l.b16 %v1269
        %v2099 = vunpack.c.l.b16 %v1270
        %v2100 = vunpack.c.l.b16 %v1271
        %v2101 = vpack.c.b16 %v2086, %v2085
        %v2102 = vpack.c.b16 %v2088, %v2087
        %v2103 = vpack.c.b16 %v2090, %v2089
        %v2104 = vpack.c.b16 %v2092, %v2091
        %v2105 = vpack.c.b16 %v2094, %v2093
        %v2106 = vpack.c.b16 %v2096, %v2095
        %v2107 = vpack.c.b16 %v2098, %v2097
        %v2108 = vpack.c.b16 %v2100, %v2099
        %2117 = vmatprep.subr.bf16.mxu0 0
        %2118 = vmatpush1.bf16.msra.mxu0 %v2101
        %2119 = vmatprep.subr.bf16.mxu0 0
        %2120 = vmatpush1.bf16.msra.mxu0 %v2102
        %2121 = vmatprep.subr.bf16.mxu0 0
        %2122 = vmatpush1.bf16.msra.mxu0 %v2103
        %2123 = vmatprep.subr.bf16.mxu0 0
        %2124 = vmatpush1.bf16.msra.mxu0 %v2104
        %2125 = vmatprep.subr.bf16.mxu0 0
        %2126 = vmatpush1.bf16.msra.mxu0 %v2105
        %2127 = vmatprep.subr.bf16.mxu0 0
        %2128 = vmatpush1.bf16.msra.mxu0 %v2106
        %2129 = vmatprep.subr.bf16.mxu0 0
        %2130 = vmatpush1.bf16.msra.mxu0 %v2107
        %2131 = vmatprep.subr.bf16.mxu0 0
        %2132 = vmatpush1.bf16.msra.mxu0 %v2108
        %2133 = vmatprep.subr.bf16.mxu0 0
        %2134 = vmatpush1.bf16.msra.mxu0 0
        %2135 = vmatprep.subr.bf16.mxu0 0
        %2136 = vmatpush1.bf16.msra.mxu0 0
        %2137 = vmatprep.subr.bf16.mxu0 0
        %2138 = vmatpush1.bf16.msra.mxu0 0
        %2139 = vmatprep.subr.bf16.mxu0 0
        %2140 = vmatpush1.bf16.msra.mxu0 0
        %2141 = vmatprep.subr.bf16.mxu0 0
        %2142 = vmatpush1.bf16.msra.mxu0 0
        %2143 = vmatprep.subr.bf16.mxu0 0
        %2144 = vmatpush1.bf16.msra.mxu0 0
        %2145 = vmatprep.subr.bf16.mxu0 0
        %2146 = vmatpush1.bf16.msra.mxu0 0
        %2147 = vmatprep.subr.bf16.mxu0 0
        %2148 = vmatpush1.bf16.msra.mxu0 0
        %2149 = vmatprep.mubr.bf16.mxu0 0
        %2150 = vmatmul.mubr.bf16.gmra.mrb[0].mxu0 %v2055
        %v2151 = vpop.f32.mrb[0].mxu0
        %v2152 = vadd.f32 %v1411, %v2151
        %v2153 = vpop.f32.mrb[0].mxu0
        %v2154 = vpop.f32.mrb[0].mxu0
        %v2155 = vadd.f32 %v1414, %v2154
        %v2156 = vpop.f32.mrb[0].mxu0
        %2157 = vmatprep.mubr.bf16.mxu0 0
        %2158 = vmatmul.mubr.bf16.gmra.mrb[0].mxu0 %v2057
        %v2159 = vpop.f32.mrb[0].mxu0
        %v2160 = vadd.f32 %v1419, %v2159
        %v2161 = vpop.f32.mrb[0].mxu0
        %v2162 = vpop.f32.mrb[0].mxu0
        %v2163 = vadd.f32 %v1422, %v2162
        %v2164 = vpop.f32.mrb[0].mxu0
        %2165 = vmatprep.mubr.bf16.mxu0 0
        %2166 = vmatmul.mubr.bf16.gmra.mrb[0].mxu0 %v2059
        %v2167 = vpop.f32.mrb[0].mxu0
        %v2168 = vadd.f32 %v1427, %v2167
        %v2169 = vpop.f32.mrb[0].mxu0
        %v2170 = vpop.f32.mrb[0].mxu0
        %v2171 = vadd.f32 %v1430, %v2170
        %v2172 = vpop.f32.mrb[0].mxu0
        %2173 = vmatprep.mubr.bf16.mxu0 0
        %2174 = vmatmul.mubr.bf16.gmra.mrb[0].mxu0 %v2061
        %v2175 = vpop.f32.mrb[0].mxu0
        %v2176 = vadd.f32 %v1435, %v2175
        %v2177 = vpop.f32.mrb[0].mxu0
        %v2178 = vpop.f32.mrb[0].mxu0
        %v2179 = vadd.f32 %v1438, %v2178
        %v2180 = vpop.f32.mrb[0].mxu0
        %2181 = vmatprep.mubr.bf16.mxu0 0
        %2182 = vmatmul.mubr.bf16.gmra.mrb[0].mxu0 %v2063
        %v2183 = vpop.f32.mrb[0].mxu0
        %v2184 = vadd.f32 %v1443, %v2183
        %v2185 = vpop.f32.mrb[0].mxu0
        %v2186 = vpop.f32.mrb[0].mxu0
        %v2187 = vadd.f32 %v1446, %v2186
        %v2188 = vpop.f32.mrb[0].mxu0
        %2189 = vdwg.mxu0
        %v2190 = vadd.f32 %v1454, %v1461
        %v2191 = vadd.f32 %v1551, %v1691
        %v2192 = vadd.f32 %v1554, %v1694
        %v2193 = vadd.f32 %v1559, %v1699
        %v2194 = vadd.f32 %v1562, %v1702
        %v2195 = vadd.f32 %v1567, %v1707
        %v2196 = vadd.f32 %v1570, %v1710
        %v2197 = vadd.f32 %v1575, %v1715
        %v2198 = vadd.f32 %v1578, %v1718
        %v2199 = vadd.f32 %v1583, %v1723
        %v2200 = vadd.f32 %v1586, %v1726
        %v2201 = vadd.f32 %v1871, %v2011
        %v2202 = vadd.f32 %v1874, %v2014
        %v2203 = vadd.f32 %v1879, %v2019
        %v2204 = vadd.f32 %v1882, %v2022
        %v2205 = vadd.f32 %v1887, %v2027
        %v2206 = vadd.f32 %v1890, %v2030
        %v2207 = vadd.f32 %v1895, %v2035
        %v2208 = vadd.f32 %v1898, %v2038
        %v2209 = vadd.f32 %v1903, %v2043
        %v2210 = vadd.f32 %v1906, %v2046
        %v2211 = vadd.f32 %v2152, %v2190
        %v2212 = vadd.f32 %v2155, %v2190
        %v2213 = vadd.f32 %v2160, %v2190
        %v2214 = vadd.f32 %v2163, %v2190
        %v2215 = vadd.f32 %v2168, %v2190
        %v2216 = vadd.f32 %v2171, %v2190
        %v2217 = vadd.f32 %v2176, %v2190
        %v2218 = vadd.f32 %v2179, %v2190
        %v2219 = vadd.f32 %v2184, %v2190
        %v2220 = vadd.f32 %v2187, %v2190
        %v2221 = vadd.f32 %v2191, %v2201
        %v2222 = vadd.f32 %v2192, %v2202
        %v2223 = vadd.f32 %v2193, %v2203
        %v2224 = vadd.f32 %v2194, %v2204
        %v2225 = vadd.f32 %v2195, %v2205
        %v2226 = vadd.f32 %v2196, %v2206
        %v2227 = vadd.f32 %v2197, %v2207
        %v2228 = vadd.f32 %v2198, %v2208
        %v2229 = vadd.f32 %v2199, %v2209
        %v2230 = vadd.f32 %v2200, %v2210
        %v2231 = vadd.f32 %v2221, %v2211
        %v2232 = vadd.f32 %v2222, %v2212
        %v2233 = vadd.f32 %v2223, %v2213
        %v2234 = vadd.f32 %v2224, %v2214
        %v2235 = vadd.f32 %v2225, %v2215
        %v2236 = vadd.f32 %v2226, %v2216
        %v2237 = vadd.f32 %v2227, %v2217
        %v2238 = vadd.f32 %v2228, %v2218
        %v2239 = vadd.f32 %v2229, %v2219
        %v2240 = vadd.f32 %v2230, %v2220
        %v2241 = vmax.f32 %v2231, 0.0
        %v2242 = vmax.f32 %v2232, 0.0
        %v2243 = vmax.f32 %v2233, 0.0
        %v2244 = vmax.f32 %v2234, 0.0
        %v2245 = vmax.f32 %v2235, 0.0
        %v2246 = vmax.f32 %v2236, 0.0
        %v2247 = vmax.f32 %v2237, 0.0
        %v2248 = vmax.f32 %v2238, 0.0
        %v2249 = vmax.f32 %v2239, 0.0
        %v2250 = vmax.f32 %v2240, 0.0
        %2251 = vst [vmem:[%s363] sm:$0xff] %v2241
        %2252 = vst [vmem:[%s363 + $0x8] sm:$0xff] %v2242
        %2253 = vst [vmem:[%s363 + $0x10] sm:$0xff] %v2243
        %2254 = vst [vmem:[%s363 + $0x18] sm:$0xff] %v2244
        %2255 = vst [vmem:[%s363 + $0x20] sm:$0xff] %v2245
        %2256 = vst [vmem:[%s363 + $0x28] sm:$0xff] %v2246
        %2257 = vst [vmem:[%s363 + $0x30] sm:$0xff] %v2247
        %2258 = vst [vmem:[%s363 + $0x38] sm:$0xff] %v2248
        %2259 = vst [vmem:[%s363 + $0x40] sm:$0xff] %v2249
        %2260 = vst [vmem:[%s363 + $0x48] sm:$0xff] %v2250
        %s2261 = sand.u32 %s172, 1
        %s2262 = scalar_lea.sflag [#allocation4], %s2261
        %s2263 = sand.u32 %s172, 1
        %s2264 = smul.addr %s2263, 80
        %s2265 = scalar_lea.vmem [#allocation13], %s2264
        // Predicated region
        $region69: #{residual_block_forward.3} parent=43 // pred_check
          %p2266 = pneg %p182
        $region70: #{residual_block_forward.3} parent=43 // pred_check_branch
          %2268 = sbr.rel (%p2266) target = $region72
        $region71: #{residual_block_forward.3} parent=43 // pred_region
          %s2270 = ssub.s32 1280, 1280
          %2271 = vsyncadd %s2262, %s2270
          %s2272 = smul.addr %s28, 10
          %s2273 = smul.addr %s2272, 128
          %s2274 = scalar_lea.hbm %s6, %s2273
          %s2275 = sshll.u32 %s2265, 4
          %s2276 = int_to_ptr.vmem [resolvable:$true] %s2275
          %2281 = dma.vmem_to_hbm [thread:$0]  %s2276, 1280, %s2274, %s2262, 128, 128, 8
        $region72: #{residual_block_forward.3} parent=43 // pred_fallthru
          _
      $region44: #{residual_block_forward.3} parent=5 // pred_fallthru
        _
      %p2282 = scmp.le.s32.totalorder 2, %s23
      // Predicated region
      $region73: #{residual_block_forward.3} parent=5 // pred_check
        %p2283 = pneg %p2282
      $region74: #{residual_block_forward.3} parent=5 // pred_check_branch
        %2285 = sbr.rel (%p2283) target = $region76
      $region75: #{residual_block_forward.3} parent=5 // pred_region
        %s2286 = ssub.s32 %s23, 2
        // Predicated region
        $region77: #{residual_block_forward.3} parent=75 // pred_check
          %p2287 = pneg %p188
        $region78: #{residual_block_forward.3} parent=75 // pred_check_branch
          %2289 = sbr.rel (%p2287) target = $region80
        $region79: #{residual_block_forward.3} parent=75 // pred_region
          %s2290 = sand.u32 %s173, 1
          %s2291 = scalar_lea.sflag [#allocation4], %s2290
          %s2292 = sand.u32 %s173, 1
          %s2293 = smul.addr %s2292, 80
          %s2294 = scalar_lea.vmem [#allocation13], %s2293
          %2295 = dma.done %s2291, 1280
        $region80: #{residual_block_forward.3} parent=75 // pred_fallthru
          _
      $region76: #{residual_block_forward.3} parent=5 // pred_fallthru
        _
    $region6: #{residual_block_forward.3} parent=1 // loop_footer
      %s27 = sadd.s32 1, %s23
    $region7: #{residual_block_forward.3} parent=1 // loop_footer_branch
      %22 = sbr.rel target = $region3
    $region8: #{residual_block_forward.3} parent=1 // loop_exit
      _
    %2296 = vsyncpa [#allocation3], 1
    %s2297 = scalar_lea.sflag [#allocation3], 1
    %2298 = vsyncpa %s2297, 1
    %2299 = vsyncpa [#allocation6], 1
    %2300 = vsyncpa [#allocation9], 1
    %s2301 = scalar_lea.sflag [#allocation9], 1
    %2302 = vsyncpa %s2301, 1
    %2303 = vsyncpa [#allocation12], 1
    %2304 = vsyncpa [#allocation4], 1
    %s2305 = scalar_lea.sflag [#allocation4], 1
    %2306 = vsyncpa %s2305, 1

</llo_original>
